<compile_context>
chip_gen: v6e
topology: v6e:2x2x1
jax: 0.10.0
libtpu: 0.0.40
codegen_flags: <defaults>
</compile_context>

<pallas_src>
import functools
import math

import jax
import jax.numpy as jnp
from jax.experimental import pallas as pl
from jax.experimental.pallas import tpu as pltpu


_VMEM_LIMIT = 32 * 1024 * 1024      # safe scoped-VMEM budget on v5e/v6e/v7x
_VMEM_SPEC = pl.BlockSpec(memory_space=pltpu.MemorySpace.VMEM)
_KT_THRESHOLD = 2048                # single full-K block below this


def _round_up(x, m):
    return (x + m - 1) // m * m


# --------------------- conv matmul (bf16 MXU, lane-dense) ------------------- #

def _conv_mm_kernel(w_ref, p_ref, b_ref, o_ref):
    # single-K-block path: no accumulator, no predication
    o_ref[0] = (jnp.dot(w_ref[0], p_ref[0], preferred_element_type=jnp.float32)
                + b_ref[...]).astype(o_ref.dtype)


def _conv_mm_kernel_ktiled(w_ref, p_ref, b_ref, o_ref, acc_ref):
    k = pl.program_id(2)

    @pl.when(k == 0)
    def _():
        acc_ref[...] = jnp.zeros_like(acc_ref)

    acc_ref[...] += jnp.dot(w_ref[0], p_ref[0],
                            preferred_element_type=jnp.float32)

    @pl.when(k == pl.num_programs(2) - 1)
    def _():
        o_ref[0] = (acc_ref[...] + b_ref[...]).astype(o_ref.dtype)


def conv_matmul(w_mats, patches, bias, out_dtype):
    """w_mats: (P, Cout, K), patches: (P, K, L=N*S), bias: (Cout,) -> (P, Cout, L)."""
    P, Cout, K = w_mats.shape
    L = patches.shape[-1]

    L_pad = _round_up(L, 128)                 # lane-dense stores
    ts = math.gcd(L_pad, 512)                 # 128 / 256 / 512 lane tile
    K_pad = _round_up(K, 16)                  # bf16 sublane pack only

    if K_pad != K:
        w_mats = jnp.pad(w_mats, ((0, 0), (0, 0), (0, K_pad - K)))
        patches = jnp.pad(patches, ((0, 0), (0, K_pad - K), (0, 0)))
    if L_pad != L:
        patches = jnp.pad(patches, ((0, 0), (0, 0), (0, L_pad - L)))

    w_bf = w_mats.astype(jnp.bfloat16)
    p_bf = patches.astype(jnp.bfloat16)
    b_col = bias.reshape(Cout, 1).astype(jnp.float32)

    if K_pad <= _KT_THRESHOLD:
        out = pl.pallas_call(
            _conv_mm_kernel,
            out_shape=jax.ShapeDtypeStruct((P, Cout, L_pad), out_dtype),
            grid=(P, L_pad // ts),
            in_specs=[
                pl.BlockSpec((1, Cout, K_pad), lambda p, s: (p, 0, 0)),
                pl.BlockSpec((1, K_pad, ts), lambda p, s: (p, 0, s)),
                pl.BlockSpec((Cout, 1), lambda p, s: (0, 0)),
            ],
            out_specs=pl.BlockSpec((1, Cout, ts), lambda p, s: (p, 0, s)),
            compiler_params=pltpu.CompilerParams(
                dimension_semantics=("parallel", "parallel"),
                vmem_limit_bytes=_VMEM_LIMIT),
        )(w_bf, p_bf, b_col)
    else:
        tk = 512
        K_pad2 = _round_up(K_pad, tk)
        if K_pad2 != K_pad:
            w_bf = jnp.pad(w_bf, ((0, 0), (0, 0), (0, K_pad2 - K_pad)))
            p_bf = jnp.pad(p_bf, ((0, 0), (0, K_pad2 - K_pad), (0, 0)))
        out = pl.pallas_call(
            _conv_mm_kernel_ktiled,
            out_shape=jax.ShapeDtypeStruct((P, Cout, L_pad), out_dtype),
            grid=(P, L_pad // ts, K_pad2 // tk),
            in_specs=[
                pl.BlockSpec((1, Cout, tk), lambda p, s, k: (p, 0, k)),
                pl.BlockSpec((1, tk, ts), lambda p, s, k: (p, k, s)),
                pl.BlockSpec((Cout, 1), lambda p, s, k: (0, 0)),
            ],
            out_specs=pl.BlockSpec((1, Cout, ts), lambda p, s, k: (p, 0, s)),
            scratch_shapes=[pltpu.VMEM((Cout, ts), jnp.float32)],
            compiler_params=pltpu.CompilerParams(
                dimension_semantics=("parallel", "parallel", "arbitrary"),
                vmem_limit_bytes=_VMEM_LIMIT),
        )(w_bf, p_bf, b_col)

    if L_pad != L:
        out = out[:, :, :L]
    return out


# --------------------- fused GroupNorm + LeakyReLU ------------------------- #

def _gn_lrelu_kernel(x_ref, g_ref, b_ref, o_ref, *, cnt):
    x = x_ref[...].astype(jnp.float32)                       # (BR, Lpad)
    mean = jnp.sum(x, axis=-1, keepdims=True) / cnt          # zero pads add nothing
    var = jnp.sum(x * x, axis=-1, keepdims=True) / cnt - mean * mean
    var = jnp.maximum(var, 0.0)
    y = (x - mean) * jax.lax.rsqrt(var + 1e-5)
    y = y * g_ref[...] + b_ref[...]
    o_ref[...] = jnp.where(y >= 0, y, 0.01 * y).astype(o_ref.dtype)


def group_norm_lrelu(x, gamma, beta, num_groups, out_dtype=jnp.bfloat16):
    """GroupNorm(eps=1e-5, affine) + LeakyReLU(0.01).  x: (N, C, D, H, W)."""
    N, C, D, H, W = x.shape
    G = num_groups
    Cg = C // G
    S = D * H * W
    Lrow = Cg * S
    Lpad = _round_up(Lrow, 128)
    rows = N * G
    cnt = float(Lrow)

    xr = x.reshape(rows, Lrow)                 # free row-major reshape (n, g) rows
    if Lpad != Lrow:
        xr = jnp.pad(xr, ((0, 0), (0, Lpad - Lrow)))

    g_row = jnp.broadcast_to(gamma.astype(jnp.float32).reshape(G, Cg, 1),
                             (G, Cg, S)).reshape(G, Lrow)
    b_row = jnp.broadcast_to(beta.astype(jnp.float32).reshape(G, Cg, 1),
                             (G, Cg, S)).reshape(G, Lrow)
    if Lpad != Lrow:
        g_row = jnp.pad(g_row, ((0, 0), (0, Lpad - Lrow)))
        b_row = jnp.pad(b_row, ((0, 0), (0, Lpad - Lrow)))

    BR = 16 if rows % 16 == 0 else rows        # bf16-packed sublane tile or full-dim
    if BR % G == 0:                            # tables tiled up to BR rows, constant index
        g_tab = jnp.tile(g_row, (BR // G, 1))
        b_tab = jnp.tile(b_row, (BR // G, 1))
        gb_idx = lambda i: (0, 0)
    else:
        # TODO(synk): general G (not a multiple / divisor of the row block) unsupported
        assert G % BR == 0
        g_tab, b_tab = g_row, b_row
        gb_idx = lambda i: (i % (G // BR), 0)

    out = pl.pallas_call(
        functools.partial(_gn_lrelu_kernel, cnt=cnt),
        out_shape=jax.ShapeDtypeStruct((rows, Lpad), out_dtype),
        grid=(rows // BR,),
        in_specs=[
            pl.BlockSpec((BR, Lpad), lambda i: (i, 0)),
            pl.BlockSpec((BR, Lpad), gb_idx),
            pl.BlockSpec((BR, Lpad), gb_idx),
        ],
        out_specs=pl.BlockSpec((BR, Lpad), lambda i: (i, 0)),
        compiler_params=pltpu.CompilerParams(
            dimension_semantics=("parallel",),
            vmem_limit_bytes=_VMEM_LIMIT),
    )(xr, g_tab, b_tab)
    return out[:, :Lrow].reshape(N, C, D, H, W)


# ---------------- fused tail: projector + predictor + decoder-in ------------ #

def _tail_kernel(flat_ref, pw_ref, pb_ref, w1_ref, b1_ref, bg_ref, bb_ref,
                 w2_ref, b2_ref, dw_ref, db_ref, z_ref, p_ref, h_ref, *, half):
    f = flat_ref[...].astype(jnp.float32)
    z = jnp.dot(f, pw_ref[...], preferred_element_type=jnp.float32) + pb_ref[...]
    inv = jax.lax.rsqrt(jnp.maximum(jnp.sum(z * z, axis=-1, keepdims=True), 1e-24))
    z = z * inv                                      # F.normalize(p=2, dim=1)
    z_ref[...] = z

    # predictor on the z1/z2 rows; BatchNorm1d training stats kept per ORIGINAL call
    h = jnp.dot(z[0:2 * half], w1_ref[...],
                preferred_element_type=jnp.float32) + b1_ref[...]
    h1 = h[0:half]
    h2 = h[half:2 * half]
    m1 = jnp.mean(h1, axis=0, keepdims=True)
    v1 = jnp.mean(jnp.square(h1 - m1), axis=0, keepdims=True)
    m2 = jnp.mean(h2, axis=0, keepdims=True)
    v2 = jnp.mean(jnp.square(h2 - m2), axis=0, keepdims=True)
    first = jax.lax.broadcasted_iota(jnp.int32, h.shape, 0) < half
    mean = jnp.where(first, m1, m2)
    var = jnp.where(first, v1, v2)
    hn = (h - mean) * jax.lax.rsqrt(var + 1e-5)
    hn = hn * bg_ref[...] + bb_ref[...]
    hn = jnp.where(hn >= 0, hn, 0.01 * hn)
    p_ref[...] = jnp.dot(hn, w2_ref[...],
                         preferred_element_type=jnp.float32) + b2_ref[...]

    # decoder-input Linear on z1 rows
    h_ref[...] = jnp.dot(z[0:half], dw_ref[...],
                         preferred_element_type=jnp.float32) + db_ref[...]


def fused_tail(flat, params, batch):
    M, Fd = flat.shape
    L = params['proj_w'].shape[1]
    f32 = jnp.float32
    r1 = lambda a: a.reshape(1, -1).astype(f32)
    return pl.pallas_call(
        functools.partial(_tail_kernel, half=batch),
        out_shape=(jax.ShapeDtypeStruct((M, L), f32),
                   jax.ShapeDtypeStruct((2 * batch, L), f32),
                   jax.ShapeDtypeStruct((batch, Fd), f32)),
        in_specs=[_VMEM_SPEC] * 11,
        out_specs=(_VMEM_SPEC, _VMEM_SPEC, _VMEM_SPEC),
        compiler_params=pltpu.CompilerParams(vmem_limit_bytes=_VMEM_LIMIT),
    )(flat, params['proj_w'].astype(f32), r1(params['proj_b']),
      params['pred_w1'].astype(f32), r1(params['pred_b1']),
      r1(params['pred_bn_g']), r1(params['pred_bn_b']),
      params['pred_w2'].astype(f32), r1(params['pred_b2']),
      params['dec_in_w'].astype(f32), r1(params['dec_in_b']))


# ------------------------ conv glue (patch extraction) ---------------------- #

def _extract_patches(xp, offs_d, offs_h, offs_w, stride, Do, Ho, Wo):
    """xp: padded (N, C, Dp, Hp, Wp) -> (C*T, N*Do*Ho*Wo); rows ordered (c, td, th, tw)."""
    N, C = xp.shape[0], xp.shape[1]
    S = Do * Ho * Wo
    taps = []
    for od in offs_d:
        for oh in offs_h:
            for ow in offs_w:
                sl = xp[:, :,
                        od:od + stride * (Do - 1) + 1:stride,
                        oh:oh + stride * (Ho - 1) + 1:stride,
                        ow:ow + stride * (Wo - 1) + 1:stride]
                sl = sl.reshape(N, C, S).transpose(1, 0, 2)    # (C, N, S)
                taps.append(sl.reshape(C, 1, N * S))
    pat = jnp.concatenate(taps, axis=1)                        # (C, T, N*S)
    return pat.reshape(C * len(taps), N * S)


def conv3d(x, w, b, stride, pad, out_dtype=jnp.bfloat16):
    """PyTorch-semantics Conv3d (k=3).  x: (N, Cin, D, H, W), w: (Cout, Cin, 3,3,3)."""
    N, Cin, D, H, W = x.shape
    Cout = w.shape[0]
    Do = (D + 2 * pad - 3) // stride + 1
    Ho = (H + 2 * pad - 3) // stride + 1
    Wo = (W + 2 * pad - 3) // stride + 1
    S = Do * Ho * Wo
    xp = jnp.pad(x.astype(jnp.bfloat16),
                 ((0, 0), (0, 0), (pad, pad), (pad, pad), (pad, pad)))
    patches = _extract_patches(xp, (0, 1, 2), (0, 1, 2), (0, 1, 2),
                               stride, Do, Ho, Wo)              # (K, N*S)
    w_mat = w.reshape(Cout, Cin * 27)
    out = conv_matmul(w_mat[None], patches[None], b, out_dtype)[0]   # (Cout, N*S)
    return out.reshape(Cout, N, S).transpose(1, 0, 2).reshape(N, Cout, Do, Ho, Wo)


# Sub-pixel decomposition of ConvTranspose3d(k=3, stride=2, pad=1, out_pad=1):
#   even output:  out[2j]   = w_t[..., 1] * x[j]
#   odd  output:  out[2j+1] = w_t[..., 2] * x[j] + w_t[..., 0] * x[j+1]
# All 8 output-parity classes run as ONE pallas_call (parity grid axis), with
# per-parity weights/patches zero-padded to a common K = Cin*8.
_CT_KIDX = {0: (1,), 1: (2, 0)}      # kernel taps per output parity
_CT_OFFS = {0: (0,), 1: (0, 1)}      # matching input offsets (into high-padded x)


def conv_transpose3d(x, w_t, b, out_dtype=jnp.bfloat16):
    """PyTorch-semantics ConvTranspose3d(k=3, s=2, p=1, op=1).  w_t: (Cin, Cout, 3,3,3)."""
    N, Cin, D, H, W = x.shape
    Cout = w_t.shape[1]
    K_common = Cin * 8
    xp = jnp.pad(x.astype(jnp.bfloat16),
                 ((0, 0), (0, 0), (0, 1), (0, 1), (0, 1)))
    w_list, p_list = [], []
    for pd in (0, 1):
        for ph in (0, 1):
            for pw in (0, 1):
                wk = jnp.take(w_t, jnp.array(_CT_KIDX[pd]), axis=2)
                wk = jnp.take(wk, jnp.array(_CT_KIDX[ph]), axis=3)
                wk = jnp.take(wk, jnp.array(_CT_KIDX[pw]), axis=4)
                wk = jnp.transpose(wk, (1, 0, 2, 3, 4)).reshape(Cout, -1)
                pat = _extract_patches(xp, _CT_OFFS[pd], _CT_OFFS[ph],
                                       _CT_OFFS[pw], 1, D, H, W)
                kp = wk.shape[1]
                w_list.append(jnp.pad(wk, ((0, 0), (0, K_common - kp))))
                p_list.append(jnp.pad(pat, ((0, K_common - kp), (0, 0))))
    w_stack = jnp.stack(w_list)                       # (8, Cout, K_common)
    p_stack = jnp.stack(p_list)                       # (8, K_common, N*S)
    res = conv_matmul(w_stack, p_stack, b, out_dtype)  # (8, Cout, N*S)
    res = res.reshape(2, 2, 2, Cout, N, D, H, W)
    out = jnp.transpose(res, (4, 3, 5, 0, 6, 1, 7, 2))  # (N, Cout, D,2, H,2, W,2)
    return out.reshape(N, Cout, 2 * D, 2 * H, 2 * W)


# ------------------------------- SimSiam model ------------------------------ #

IN_CHANNELS = 2
LATENT_DIM = 16
HIDDEN_DIMS = [8, 16]                     # small stand-in for [32, 32, 64, 64, 128, 256]
SPATIAL = 2 * (2 ** len(HIDDEN_DIMS))     # encoder must reduce spatial to 2


def init_params(key):
    p = {}
    keys = iter(jax.random.split(key, 64))

    def w(shape, scale=0.1):
        return (scale * jax.random.normal(next(keys), shape)).astype(jnp.float32)

    enc = []
    cin = IN_CHANNELS
    for h in HIDDEN_DIMS:
        enc.append((w((h, cin, 3, 3, 3)), jnp.zeros((h,), jnp.float32),
                    jnp.ones((h,), jnp.float32), jnp.zeros((h,), jnp.float32)))
        cin = h
    p['encoder'] = enc

    flat_dim = HIDDEN_DIMS[-1] * 8
    p['proj_w'] = w((flat_dim, LATENT_DIM))
    p['proj_b'] = jnp.zeros((LATENT_DIM,), jnp.float32)
    p['pred_w1'] = w((LATENT_DIM, LATENT_DIM))
    p['pred_b1'] = jnp.zeros((LATENT_DIM,), jnp.float32)
    p['pred_bn_g'] = jnp.ones((LATENT_DIM,), jnp.float32)
    p['pred_bn_b'] = jnp.zeros((LATENT_DIM,), jnp.float32)
    p['pred_w2'] = w((LATENT_DIM, LATENT_DIM))
    p['pred_b2'] = jnp.zeros((LATENT_DIM,), jnp.float32)
    p['dec_in_w'] = w((LATENT_DIM, flat_dim))
    p['dec_in_b'] = jnp.zeros((flat_dim,), jnp.float32)
    rev = list(reversed(HIDDEN_DIMS))
    dec = []
    for i in range(len(rev) - 1):
        ci, co = rev[i], rev[i + 1]
        dec.append((w((ci, co, 3, 3, 3)), jnp.zeros((co,), jnp.float32),
                    jnp.ones((co,), jnp.float32), jnp.zeros((co,), jnp.float32)))
    p['decoder'] = dec
    hf = rev[-1]
    p['final_ct'] = (w((hf, hf, 3, 3, 3)), jnp.zeros((hf,), jnp.float32),
                     jnp.ones((hf,), jnp.float32), jnp.zeros((hf,), jnp.float32))
    p['final_conv_w'] = w((IN_CHANNELS, hf, 3, 3, 3))
    p['final_conv_b'] = jnp.zeros((IN_CHANNELS,), jnp.float32)
    return p


def encode(params, x):
    for (cw, cb, g, be) in params['encoder']:
        x = conv3d(x, cw, cb, stride=2, pad=1)
        x = group_norm_lrelu(x, g, be, num_groups=cw.shape[0] // 2)
    return x.reshape(x.shape[0], -1)          # torch.flatten(start_dim=1)


def decode(params, dec_h, batch):
    x = dec_h.reshape(batch, HIDDEN_DIMS[-1], 2, 2, 2)
    for (cw, cb, g, be) in params['decoder']:
        x = conv_transpose3d(x, cw, cb)
        x = group_norm_lrelu(x, g, be, num_groups=cw.shape[1] // 2)
    cw, cb, g, be = params['final_ct']
    x = conv_transpose3d(x, cw, cb)
    x = group_norm_lrelu(x, g, be, num_groups=cw.shape[1] // 2)
    return conv3d(x, params['final_conv_w'], params['final_conv_b'],
                  stride=1, pad=1, out_dtype=jnp.float32)


@jax.jit
def simsiam_forward(params, input1, input2, pos_img, neg_img):
    B = input1.shape[0]
    # One encoder pass over all four views (4x fewer launches, fuller lanes).
    x_all = jnp.concatenate([input1, input2, pos_img, neg_img], axis=0)
    flat = encode(params, x_all)                            # (4B, flat_dim)
    z_all, p_all, dec_h = fused_tail(flat, params, B)
    z1, z2 = z_all[0:B], z_all[B:2 * B]
    z_pos, z_neg = z_all[2 * B:3 * B], z_all[3 * B:4 * B]
    p1, p2 = p_all[0:B], p_all[B:2 * B]
    recon = decode(params, dec_h, B)
    return (p1, p2, z1, z2, input1, recon, z_pos, z_neg)


# ----------------------------------- main ----------------------------------- #

if __name__ == "__main__":
    key = jax.random.PRNGKey(0)
    kp, k1, k2, k3, k4 = jax.random.split(key, 5)
    params = init_params(kp)

    B = 2
    shape = (B, IN_CHANNELS, SPATIAL, SPATIAL, SPATIAL)   # (2, 2, 8, 8, 8), NCDHW
    input1 = jax.random.normal(k1, shape, jnp.float32)
    input2 = jax.random.normal(k2, shape, jnp.float32)
    pos_img = jax.random.normal(k3, shape, jnp.float32)
    neg_img = jax.random.normal(k4, shape, jnp.float32)

    outs = simsiam_forward(params, input1, input2, pos_img, neg_img)
    outs = jax.block_until_ready(outs)

    p1, p2, z1, z2, inp, recon, z_pos, z_neg = outs
    assert p1.shape == (B, LATENT_DIM) and p2.shape == (B, LATENT_DIM)
    assert z1.shape == (B, LATENT_DIM) and z2.shape == (B, LATENT_DIM)
    assert recon.shape == shape and inp.shape == shape
    assert z_pos.shape == (B, LATENT_DIM) and z_neg.shape == (B, LATENT_DIM)
    assert all(bool(jnp.all(jnp.isfinite(o.astype(jnp.float32)))) for o in
               (p1, p2, z1, z2, recon, z_pos, z_neg))
    print("KERNEL_OK")
</pallas_src>

<mosaic_0001>
module attributes {stable_mosaic.version = 11 : i64} {
  func.func @_conv_mm_kernel(%arg0: i32, %arg1: i32, %arg2: memref<1x8x64xbf16, #tpu.memory_space<vmem>>, %arg3: memref<1x64x512xbf16, #tpu.memory_space<vmem>>, %arg4: memref<8x1xf32, #tpu.memory_space<vmem>>, %arg5: memref<1x8x512xbf16, #tpu.memory_space<vmem>>) attributes {dimension_semantics = [#tpu.dimension_semantics<parallel>, #tpu.dimension_semantics<parallel>], iteration_bounds = array<i64: 1, 1>, scalar_prefetch = 0 : i64, scratch_operands = 0 : i64, tpu.core_type = #tpu.core_type<tc>, window_params = [{transform_indices = @transform_0, window_bounds = array<i64: 1, 8, 64>}, {transform_indices = @transform_1, window_bounds = array<i64: 1, 64, 512>}, {pipeline_mode = #tpu.pipeline_mode<synchronous>, transform_indices = @transform_2, window_bounds = array<i64: 8, 1>}, {transform_indices = @transform_3, window_bounds = array<i64: 1, 8, 512>}]} {
    %c0 = arith.constant 0 : index
    %c0_0 = arith.constant 0 : index
    %c0_1 = arith.constant 0 : index
    %0 = vector.load %arg2[%c0, %c0_0, %c0_1] : memref<1x8x64xbf16, #tpu.memory_space<vmem>>, vector<1x8x64xbf16>
    %1 = vector.shape_cast %0 : vector<1x8x64xbf16> to vector<8x64xbf16>
    %c0_2 = arith.constant 0 : index
    %c0_3 = arith.constant 0 : index
    %c0_4 = arith.constant 0 : index
    %2 = vector.load %arg3[%c0_2, %c0_3, %c0_4] : memref<1x64x512xbf16, #tpu.memory_space<vmem>>, vector<1x64x512xbf16>
    %3 = vector.shape_cast %2 : vector<1x64x512xbf16> to vector<64x512xbf16>
    %cst = arith.constant dense<0.000000e+00> : vector<8x512xf32>
    %4 = tpu.matmul %1, %3, %cst {dimension_numbers = #tpu.dot_dimension_numbers<[1], [0], [0], [1], [0, 0, 1, 1], [], []>} : vector<8x64xbf16>, vector<64x512xbf16>, vector<8x512xf32> -> vector<8x512xf32>
    %c0_5 = arith.constant 0 : index
    %c0_6 = arith.constant 0 : index
    %5 = vector.load %arg4[%c0_5, %c0_6] : memref<8x1xf32, #tpu.memory_space<vmem>>, vector<8x1xf32>
    %6 = vector.broadcast %5 : vector<8x1xf32> to vector<8x512xf32>
    %7 = arith.addf %4, %6 : vector<8x512xf32>
    %8 = arith.truncf %7 : vector<8x512xf32> to vector<8x512xbf16>
    %c0_7 = arith.constant 0 : index
    %c0_8 = arith.constant 0 : index
    %c0_9 = arith.constant 0 : index
    %9 = vector.load %arg5[%c0_7, %c0_8, %c0_9] : memref<1x8x512xbf16, #tpu.memory_space<vmem>>, vector<1x8x512xbf16>
    %10 = vector.shape_cast %9 : vector<1x8x512xbf16> to vector<8x512xbf16>
    %11 = vector.shape_cast %8 : vector<8x512xbf16> to vector<1x8x512xbf16>
    tpu.vector_store %arg5[%c0_7, %c0_8, %c0_9], %11 {strides = array<i32>} : memref<1x8x512xbf16, #tpu.memory_space<vmem>>, vector<1x8x512xbf16>,
    return
  }
  func.func @transform_0(%arg0: i32, %arg1: i32) -> (i32, i32, i32) {
    %c0_i32 = arith.constant 0 : i32
    %c0_i32_0 = arith.constant 0 : i32
    %c0_i32_1 = arith.constant 0 : i32
    return %arg0, %c0_i32, %c0_i32_0 : i32, i32, i32
  }
  func.func @transform_1(%arg0: i32, %arg1: i32) -> (i32, i32, i32) {
    %c0_i32 = arith.constant 0 : i32
    %c0_i32_0 = arith.constant 0 : i32
    return %arg0, %c0_i32, %arg1 : i32, i32, i32
  }
  func.func @transform_2(%arg0: i32, %arg1: i32) -> (i32, i32) {
    %c0_i32 = arith.constant 0 : i32
    %c0_i32_0 = arith.constant 0 : i32
    %c0_i32_1 = arith.constant 0 : i32
    return %c0_i32, %c0_i32_0 : i32, i32
  }
  func.func @transform_3(%arg0: i32, %arg1: i32) -> (i32, i32, i32) {
    %c0_i32 = arith.constant 0 : i32
    %c0_i32_0 = arith.constant 0 : i32
    return %arg0, %c0_i32, %arg1 : i32, i32, i32
  }
}

module attributes {stable_mosaic.version = 11 : i64} {
  func.func @_gn_lrelu_kernel(%arg0: i32, %arg1: memref<16x128xbf16, #tpu.memory_space<vmem>>, %arg2: memref<16x128xf32, #tpu.memory_space<vmem>>, %arg3: memref<16x128xf32, #tpu.memory_space<vmem>>, %arg4: memref<16x128xbf16, #tpu.memory_space<vmem>>) attributes {dimension_semantics = [#tpu.dimension_semantics<parallel>], iteration_bounds = array<i64: 2>, scalar_prefetch = 0 : i64, scratch_operands = 0 : i64, tpu.core_type = #tpu.core_type<tc>, window_params = [{transform_indices = @transform_0, window_bounds = array<i64: 16, 128>}, {pipeline_mode = #tpu.pipeline_mode<synchronous>, transform_indices = @transform_1, window_bounds = array<i64: 16, 128>}, {pipeline_mode = #tpu.pipeline_mode<synchronous>, transform_indices = @transform_2, window_bounds = array<i64: 16, 128>}, {transform_indices = @transform_3, window_bounds = array<i64: 16, 128>}]} {
    %c0 = arith.constant 0 : index
    %c0_0 = arith.constant 0 : index
    %0 = vector.load %arg1[%c0, %c0_0] : memref<16x128xbf16, #tpu.memory_space<vmem>>, vector<16x128xbf16>
    %1 = arith.extf %0 : vector<16x128xbf16> to vector<16x128xf32>
    %cst = arith.constant dense<0.000000e+00> : vector<16xf32>
    %2 = vector.multi_reduction <add>, %1, %cst [1] : vector<16x128xf32> to vector<16xf32>
    %3 = vector.shape_cast %2 : vector<16xf32> to vector<16x1xf32>
    %cst_1 = arith.constant 1.280000e+02 : f32
    %4 = vector.broadcast %cst_1 : f32 to vector<16x1xf32>
    %5 = arith.divf %3, %4 : vector<16x1xf32>
    %6 = arith.mulf %1, %1 : vector<16x128xf32>
    %cst_2 = arith.constant dense<0.000000e+00> : vector<16xf32>
    %7 = vector.multi_reduction <add>, %6, %cst_2 [1] : vector<16x128xf32> to vector<16xf32>
    %8 = vector.shape_cast %7 : vector<16xf32> to vector<16x1xf32>
    %cst_3 = arith.constant 1.280000e+02 : f32
    %9 = vector.broadcast %cst_3 : f32 to vector<16x1xf32>
    %10 = arith.divf %8, %9 : vector<16x1xf32>
    %11 = arith.mulf %5, %5 : vector<16x1xf32>
    %12 = arith.subf %10, %11 : vector<16x1xf32>
    %cst_4 = arith.constant 0.000000e+00 : f32
    %13 = vector.broadcast %cst_4 : f32 to vector<16x1xf32>
    %14 = arith.maximumf %12, %13 : vector<16x1xf32>
    %15 = vector.broadcast %5 : vector<16x1xf32> to vector<16x128xf32>
    %16 = arith.subf %1, %15 : vector<16x128xf32>
    %cst_5 = arith.constant 9.99999974E-6 : f32
    %17 = vector.broadcast %cst_5 : f32 to vector<16x1xf32>
    %18 = arith.addf %14, %17 : vector<16x1xf32>
    %19 = math.rsqrt %18 : vector<16x1xf32>
    %20 = vector.broadcast %19 : vector<16x1xf32> to vector<16x128xf32>
    %21 = arith.mulf %16, %20 : vector<16x128xf32>
    %c0_6 = arith.constant 0 : index
    %c0_7 = arith.constant 0 : index
    %22 = vector.load %arg2[%c0_6, %c0_7] : memref<16x128xf32, #tpu.memory_space<vmem>>, vector<16x128xf32>
    %23 = arith.mulf %21, %22 : vector<16x128xf32>
    %c0_8 = arith.constant 0 : index
    %c0_9 = arith.constant 0 : index
    %24 = vector.load %arg3[%c0_8, %c0_9] : memref<16x128xf32, #tpu.memory_space<vmem>>, vector<16x128xf32>
    %25 = arith.addf %23, %24 : vector<16x128xf32>
    %cst_10 = arith.constant 0.000000e+00 : f32
    %26 = vector.broadcast %cst_10 : f32 to vector<16x128xf32>
    %27 = arith.cmpf oge, %25, %26 : vector<16x128xf32>
    %cst_11 = arith.constant 0.00999999977 : f32
    %28 = vector.broadcast %cst_11 : f32 to vector<16x128xf32>
    %29 = arith.mulf %28, %25 : vector<16x128xf32>
    %30 = arith.select %27, %25, %29 : vector<16x128xi1>, vector<16x128xf32>
    %31 = arith.truncf %30 : vector<16x128xf32> to vector<16x128xbf16>
    %c0_12 = arith.constant 0 : index
    %c0_13 = arith.constant 0 : index
    %32 = vector.load %arg4[%c0_12, %c0_13] : memref<16x128xbf16, #tpu.memory_space<vmem>>, vector<16x128xbf16>
    tpu.vector_store %arg4[%c0_12, %c0_13], %31 {strides = array<i32>} : memref<16x128xbf16, #tpu.memory_space<vmem>>, vector<16x128xbf16>,
    return
  }
  func.func @transform_0(%arg0: i32) -> (i32, i32) {
    %c0_i32 = arith.constant 0 : i32
    %c0_i32_0 = arith.constant 0 : i32
    return %arg0, %c0_i32 : i32, i32
  }
  func.func @transform_1(%arg0: i32) -> (i32, i32) {
    %c0_i32 = arith.constant 0 : i32
    %c0_i32_0 = arith.constant 0 : i32
    %c0_i32_1 = arith.constant 0 : i32
    return %c0_i32, %c0_i32_0 : i32, i32
  }
  func.func @transform_2(%arg0: i32) -> (i32, i32) {
    %c0_i32 = arith.constant 0 : i32
    %c0_i32_0 = arith.constant 0 : i32
    %c0_i32_1 = arith.constant 0 : i32
    return %c0_i32, %c0_i32_0 : i32, i32
  }
  func.func @transform_3(%arg0: i32) -> (i32, i32) {
    %c0_i32 = arith.constant 0 : i32
    %c0_i32_0 = arith.constant 0 : i32
    return %arg0, %c0_i32 : i32, i32
  }
}

module attributes {stable_mosaic.version = 11 : i64} {
  func.func @_conv_mm_kernel(%arg0: i32, %arg1: i32, %arg2: memref<1x16x224xbf16, #tpu.memory_space<vmem>>, %arg3: memref<1x224x128xbf16, #tpu.memory_space<vmem>>, %arg4: memref<16x1xf32, #tpu.memory_space<vmem>>, %arg5: memref<1x16x128xbf16, #tpu.memory_space<vmem>>) attributes {dimension_semantics = [#tpu.dimension_semantics<parallel>, #tpu.dimension_semantics<parallel>], iteration_bounds = array<i64: 1, 1>, scalar_prefetch = 0 : i64, scratch_operands = 0 : i64, tpu.core_type = #tpu.core_type<tc>, window_params = [{transform_indices = @transform_0, window_bounds = array<i64: 1, 16, 224>}, {transform_indices = @transform_1, window_bounds = array<i64: 1, 224, 128>}, {pipeline_mode = #tpu.pipeline_mode<synchronous>, transform_indices = @transform_2, window_bounds = array<i64: 16, 1>}, {transform_indices = @transform_3, window_bounds = array<i64: 1, 16, 128>}]} {
    %c0 = arith.constant 0 : index
    %c0_0 = arith.constant 0 : index
    %c0_1 = arith.constant 0 : index
    %0 = vector.load %arg2[%c0, %c0_0, %c0_1] : memref<1x16x224xbf16, #tpu.memory_space<vmem>>, vector<1x16x224xbf16>
    %1 = vector.shape_cast %0 : vector<1x16x224xbf16> to vector<16x224xbf16>
    %c0_2 = arith.constant 0 : index
    %c0_3 = arith.constant 0 : index
    %c0_4 = arith.constant 0 : index
    %2 = vector.load %arg3[%c0_2, %c0_3, %c0_4] : memref<1x224x128xbf16, #tpu.memory_space<vmem>>, vector<1x224x128xbf16>
    %3 = vector.shape_cast %2 : vector<1x224x128xbf16> to vector<224x128xbf16>
    %cst = arith.constant dense<0.000000e+00> : vector<16x128xf32>
    %4 = tpu.matmul %1, %3, %cst {dimension_numbers = #tpu.dot_dimension_numbers<[1], [0], [0], [1], [0, 0, 1, 1], [], []>} : vector<16x224xbf16>, vector<224x128xbf16>, vector<16x128xf32> -> vector<16x128xf32>
    %c0_5 = arith.constant 0 : index
    %c0_6 = arith.constant 0 : index
    %5 = vector.load %arg4[%c0_5, %c0_6] : memref<16x1xf32, #tpu.memory_space<vmem>>, vector<16x1xf32>
    %6 = vector.broadcast %5 : vector<16x1xf32> to vector<16x128xf32>
    %7 = arith.addf %4, %6 : vector<16x128xf32>
    %8 = arith.truncf %7 : vector<16x128xf32> to vector<16x128xbf16>
    %c0_7 = arith.constant 0 : index
    %c0_8 = arith.constant 0 : index
    %c0_9 = arith.constant 0 : index
    %9 = vector.load %arg5[%c0_7, %c0_8, %c0_9] : memref<1x16x128xbf16, #tpu.memory_space<vmem>>, vector<1x16x128xbf16>
    %10 = vector.shape_cast %9 : vector<1x16x128xbf16> to vector<16x128xbf16>
    %11 = vector.shape_cast %8 : vector<16x128xbf16> to vector<1x16x128xbf16>
    tpu.vector_store %arg5[%c0_7, %c0_8, %c0_9], %11 {strides = array<i32>} : memref<1x16x128xbf16, #tpu.memory_space<vmem>>, vector<1x16x128xbf16>,
    return
  }
  func.func @transform_0(%arg0: i32, %arg1: i32) -> (i32, i32, i32) {
    %c0_i32 = arith.constant 0 : i32
    %c0_i32_0 = arith.constant 0 : i32
    %c0_i32_1 = arith.constant 0 : i32
    return %arg0, %c0_i32, %c0_i32_0 : i32, i32, i32
  }
  func.func @transform_1(%arg0: i32, %arg1: i32) -> (i32, i32, i32) {
    %c0_i32 = arith.constant 0 : i32
    %c0_i32_0 = arith.constant 0 : i32
    return %arg0, %c0_i32, %arg1 : i32, i32, i32
  }
  func.func @transform_2(%arg0: i32, %arg1: i32) -> (i32, i32) {
    %c0_i32 = arith.constant 0 : i32
    %c0_i32_0 = arith.constant 0 : i32
    %c0_i32_1 = arith.constant 0 : i32
    return %c0_i32, %c0_i32_0 : i32, i32
  }
  func.func @transform_3(%arg0: i32, %arg1: i32) -> (i32, i32, i32) {
    %c0_i32 = arith.constant 0 : i32
    %c0_i32_0 = arith.constant 0 : i32
    return %arg0, %c0_i32, %arg1 : i32, i32, i32
  }
}

module attributes {stable_mosaic.version = 11 : i64} {
  func.func @_gn_lrelu_kernel(%arg0: i32, %arg1: memref<16x128xbf16, #tpu.memory_space<vmem>>, %arg2: memref<16x128xf32, #tpu.memory_space<vmem>>, %arg3: memref<16x128xf32, #tpu.memory_space<vmem>>, %arg4: memref<16x128xbf16, #tpu.memory_space<vmem>>) attributes {dimension_semantics = [#tpu.dimension_semantics<parallel>], iteration_bounds = array<i64: 4>, scalar_prefetch = 0 : i64, scratch_operands = 0 : i64, tpu.core_type = #tpu.core_type<tc>, window_params = [{transform_indices = @transform_0, window_bounds = array<i64: 16, 128>}, {pipeline_mode = #tpu.pipeline_mode<synchronous>, transform_indices = @transform_1, window_bounds = array<i64: 16, 128>}, {pipeline_mode = #tpu.pipeline_mode<synchronous>, transform_indices = @transform_2, window_bounds = array<i64: 16, 128>}, {transform_indices = @transform_3, window_bounds = array<i64: 16, 128>}]} {
    %c0 = arith.constant 0 : index
    %c0_0 = arith.constant 0 : index
    %0 = vector.load %arg1[%c0, %c0_0] : memref<16x128xbf16, #tpu.memory_space<vmem>>, vector<16x128xbf16>
    %1 = arith.extf %0 : vector<16x128xbf16> to vector<16x128xf32>
    %cst = arith.constant dense<0.000000e+00> : vector<16xf32>
    %2 = vector.multi_reduction <add>, %1, %cst [1] : vector<16x128xf32> to vector<16xf32>
    %3 = vector.shape_cast %2 : vector<16xf32> to vector<16x1xf32>
    %cst_1 = arith.constant 1.600000e+01 : f32
    %4 = vector.broadcast %cst_1 : f32 to vector<16x1xf32>
    %5 = arith.divf %3, %4 : vector<16x1xf32>
    %6 = arith.mulf %1, %1 : vector<16x128xf32>
    %cst_2 = arith.constant dense<0.000000e+00> : vector<16xf32>
    %7 = vector.multi_reduction <add>, %6, %cst_2 [1] : vector<16x128xf32> to vector<16xf32>
    %8 = vector.shape_cast %7 : vector<16xf32> to vector<16x1xf32>
    %cst_3 = arith.constant 1.600000e+01 : f32
    %9 = vector.broadcast %cst_3 : f32 to vector<16x1xf32>
    %10 = arith.divf %8, %9 : vector<16x1xf32>
    %11 = arith.mulf %5, %5 : vector<16x1xf32>
    %12 = arith.subf %10, %11 : vector<16x1xf32>
    %cst_4 = arith.constant 0.000000e+00 : f32
    %13 = vector.broadcast %cst_4 : f32 to vector<16x1xf32>
    %14 = arith.maximumf %12, %13 : vector<16x1xf32>
    %15 = vector.broadcast %5 : vector<16x1xf32> to vector<16x128xf32>
    %16 = arith.subf %1, %15 : vector<16x128xf32>
    %cst_5 = arith.constant 9.99999974E-6 : f32
    %17 = vector.broadcast %cst_5 : f32 to vector<16x1xf32>
    %18 = arith.addf %14, %17 : vector<16x1xf32>
    %19 = math.rsqrt %18 : vector<16x1xf32>
    %20 = vector.broadcast %19 : vector<16x1xf32> to vector<16x128xf32>
    %21 = arith.mulf %16, %20 : vector<16x128xf32>
    %c0_6 = arith.constant 0 : index
    %c0_7 = arith.constant 0 : index
    %22 = vector.load %arg2[%c0_6, %c0_7] : memref<16x128xf32, #tpu.memory_space<vmem>>, vector<16x128xf32>
    %23 = arith.mulf %21, %22 : vector<16x128xf32>
    %c0_8 = arith.constant 0 : index
    %c0_9 = arith.constant 0 : index
    %24 = vector.load %arg3[%c0_8, %c0_9] : memref<16x128xf32, #tpu.memory_space<vmem>>, vector<16x128xf32>
    %25 = arith.addf %23, %24 : vector<16x128xf32>
    %cst_10 = arith.constant 0.000000e+00 : f32
    %26 = vector.broadcast %cst_10 : f32 to vector<16x128xf32>
    %27 = arith.cmpf oge, %25, %26 : vector<16x128xf32>
    %cst_11 = arith.constant 0.00999999977 : f32
    %28 = vector.broadcast %cst_11 : f32 to vector<16x128xf32>
    %29 = arith.mulf %28, %25 : vector<16x128xf32>
    %30 = arith.select %27, %25, %29 : vector<16x128xi1>, vector<16x128xf32>
    %31 = arith.truncf %30 : vector<16x128xf32> to vector<16x128xbf16>
    %c0_12 = arith.constant 0 : index
    %c0_13 = arith.constant 0 : index
    %32 = vector.load %arg4[%c0_12, %c0_13] : memref<16x128xbf16, #tpu.memory_space<vmem>>, vector<16x128xbf16>
    tpu.vector_store %arg4[%c0_12, %c0_13], %31 {strides = array<i32>} : memref<16x128xbf16, #tpu.memory_space<vmem>>, vector<16x128xbf16>,
    return
  }
  func.func @transform_0(%arg0: i32) -> (i32, i32) {
    %c0_i32 = arith.constant 0 : i32
    %c0_i32_0 = arith.constant 0 : i32
    return %arg0, %c0_i32 : i32, i32
  }
  func.func @transform_1(%arg0: i32) -> (i32, i32) {
    %c0_i32 = arith.constant 0 : i32
    %c0_i32_0 = arith.constant 0 : i32
    %c0_i32_1 = arith.constant 0 : i32
    return %c0_i32, %c0_i32_0 : i32, i32
  }
  func.func @transform_2(%arg0: i32) -> (i32, i32) {
    %c0_i32 = arith.constant 0 : i32
    %c0_i32_0 = arith.constant 0 : i32
    %c0_i32_1 = arith.constant 0 : i32
    return %c0_i32, %c0_i32_0 : i32, i32
  }
  func.func @transform_3(%arg0: i32) -> (i32, i32) {
    %c0_i32 = arith.constant 0 : i32
    %c0_i32_0 = arith.constant 0 : i32
    return %arg0, %c0_i32 : i32, i32
  }
}

module attributes {stable_mosaic.version = 11 : i64} {
  func.func @_tail_kernel(%arg0: memref<8x128xbf16, #tpu.memory_space<vmem>>, %arg1: memref<128x16xf32, #tpu.memory_space<vmem>>, %arg2: memref<1x16xf32, #tpu.memory_space<vmem>>, %arg3: memref<16x16xf32, #tpu.memory_space<vmem>>, %arg4: memref<1x16xf32, #tpu.memory_space<vmem>>, %arg5: memref<1x16xf32, #tpu.memory_space<vmem>>, %arg6: memref<1x16xf32, #tpu.memory_space<vmem>>, %arg7: memref<16x16xf32, #tpu.memory_space<vmem>>, %arg8: memref<1x16xf32, #tpu.memory_space<vmem>>, %arg9: memref<16x128xf32, #tpu.memory_space<vmem>>, %arg10: memref<1x128xf32, #tpu.memory_space<vmem>>, %arg11: memref<8x16xf32, #tpu.memory_space<vmem>>, %arg12: memref<4x16xf32, #tpu.memory_space<vmem>>, %arg13: memref<2x128xf32, #tpu.memory_space<vmem>>) attributes {dimension_semantics = [], scalar_prefetch = 0 : i64, scratch_operands = 0 : i64, tpu.core_type = #tpu.core_type<tc>} {
    %c0 = arith.constant 0 : index
    %c0_0 = arith.constant 0 : index
    %0 = vector.load %arg0[%c0, %c0_0] : memref<8x128xbf16, #tpu.memory_space<vmem>>, vector<8x128xbf16>
    %1 = arith.extf %0 : vector<8x128xbf16> to vector<8x128xf32>
    %c0_1 = arith.constant 0 : index
    %c0_2 = arith.constant 0 : index
    %2 = vector.load %arg1[%c0_1, %c0_2] : memref<128x16xf32, #tpu.memory_space<vmem>>, vector<128x16xf32>
    %cst = arith.constant dense<0.000000e+00> : vector<8x16xf32>
    %3 = tpu.matmul %1, %2, %cst {dimension_numbers = #tpu.dot_dimension_numbers<[1], [0], [0], [1], [0, 0, 1, 1], [], []>} : vector<8x128xf32>, vector<128x16xf32>, vector<8x16xf32> -> vector<8x16xf32>
    %c0_3 = arith.constant 0 : index
    %c0_4 = arith.constant 0 : index
    %4 = vector.load %arg2[%c0_3, %c0_4] : memref<1x16xf32, #tpu.memory_space<vmem>>, vector<1x16xf32>
    %5 = vector.broadcast %4 : vector<1x16xf32> to vector<8x16xf32>
    %6 = arith.addf %3, %5 : vector<8x16xf32>
    %7 = arith.mulf %6, %6 : vector<8x16xf32>
    %cst_5 = arith.constant dense<0.000000e+00> : vector<8xf32>
    %8 = vector.multi_reduction <add>, %7, %cst_5 [1] : vector<8x16xf32> to vector<8xf32>
    %9 = vector.shape_cast %8 : vector<8xf32> to vector<8x1xf32>
    %cst_6 = arith.constant 1.000000e-24 : f32
    %10 = vector.broadcast %cst_6 : f32 to vector<8x1xf32>
    %11 = arith.maximumf %9, %10 : vector<8x1xf32>
    %12 = math.rsqrt %11 : vector<8x1xf32>
    %13 = vector.broadcast %12 : vector<8x1xf32> to vector<8x16xf32>
    %14 = arith.mulf %6, %13 : vector<8x16xf32>
    %c0_7 = arith.constant 0 : index
    %c0_8 = arith.constant 0 : index
    %15 = vector.load %arg11[%c0_7, %c0_8] : memref<8x16xf32, #tpu.memory_space<vmem>>, vector<8x16xf32>
    tpu.vector_store %arg11[%c0_7, %c0_8], %14 {strides = array<i32>} : memref<8x16xf32, #tpu.memory_space<vmem>>, vector<8x16xf32>,
    %16 = vector.extract_strided_slice %14 {offsets = [0, 0], sizes = [4, 16], strides = [1, 1]} : vector<8x16xf32> to vector<4x16xf32>
    %c0_9 = arith.constant 0 : index
    %c0_10 = arith.constant 0 : index
    %17 = vector.load %arg3[%c0_9, %c0_10] : memref<16x16xf32, #tpu.memory_space<vmem>>, vector<16x16xf32>
    %cst_11 = arith.constant dense<0.000000e+00> : vector<4x16xf32>
    %18 = tpu.matmul %16, %17, %cst_11 {dimension_numbers = #tpu.dot_dimension_numbers<[1], [0], [0], [1], [0, 0, 1, 1], [], []>} : vector<4x16xf32>, vector<16x16xf32>, vector<4x16xf32> -> vector<4x16xf32>
    %c0_12 = arith.constant 0 : index
    %c0_13 = arith.constant 0 : index
    %19 = vector.load %arg4[%c0_12, %c0_13] : memref<1x16xf32, #tpu.memory_space<vmem>>, vector<1x16xf32>
    %20 = vector.broadcast %19 : vector<1x16xf32> to vector<4x16xf32>
    %21 = arith.addf %18, %20 : vector<4x16xf32>
    %22 = vector.extract_strided_slice %21 {offsets = [0, 0], sizes = [2, 16], strides = [1, 1]} : vector<4x16xf32> to vector<2x16xf32>
    %23 = vector.extract_strided_slice %21 {offsets = [2, 0], sizes = [2, 16], strides = [1, 1]} : vector<4x16xf32> to vector<2x16xf32>
    %cst_14 = arith.constant dense<0.000000e+00> : vector<16xf32>
    %24 = vector.multi_reduction <add>, %22, %cst_14 [0] : vector<2x16xf32> to vector<16xf32>
    %25 = vector.shape_cast %24 : vector<16xf32> to vector<1x16xf32>
    %cst_15 = arith.constant 2.000000e+00 : f32
    %26 = vector.broadcast %cst_15 : f32 to vector<1x16xf32>
    %27 = arith.divf %25, %26 : vector<1x16xf32>
    %28 = vector.broadcast %27 : vector<1x16xf32> to vector<2x16xf32>
    %29 = arith.subf %22, %28 : vector<2x16xf32>
    %30 = arith.mulf %29, %29 : vector<2x16xf32>
    %cst_16 = arith.constant dense<0.000000e+00> : vector<16xf32>
    %31 = vector.multi_reduction <add>, %30, %cst_16 [0] : vector<2x16xf32> to vector<16xf32>
    %32 = vector.shape_cast %31 : vector<16xf32> to vector<1x16xf32>
    %cst_17 = arith.constant 2.000000e+00 : f32
    %33 = vector.broadcast %cst_17 : f32 to vector<1x16xf32>
    %34 = arith.divf %32, %33 : vector<1x16xf32>
    %cst_18 = arith.constant dense<0.000000e+00> : vector<16xf32>
    %35 = vector.multi_reduction <add>, %23, %cst_18 [0] : vector<2x16xf32> to vector<16xf32>
    %36 = vector.shape_cast %35 : vector<16xf32> to vector<1x16xf32>
    %cst_19 = arith.constant 2.000000e+00 : f32
    %37 = vector.broadcast %cst_19 : f32 to vector<1x16xf32>
    %38 = arith.divf %36, %37 : vector<1x16xf32>
    %39 = vector.broadcast %38 : vector<1x16xf32> to vector<2x16xf32>
    %40 = arith.subf %23, %39 : vector<2x16xf32>
    %41 = arith.mulf %40, %40 : vector<2x16xf32>
    %cst_20 = arith.constant dense<0.000000e+00> : vector<16xf32>
    %42 = vector.multi_reduction <add>, %41, %cst_20 [0] : vector<2x16xf32> to vector<16xf32>
    %43 = vector.shape_cast %42 : vector<16xf32> to vector<1x16xf32>
    %cst_21 = arith.constant 2.000000e+00 : f32
    %44 = vector.broadcast %cst_21 : f32 to vector<1x16xf32>
    %45 = arith.divf %43, %44 : vector<1x16xf32>
    %46 = tpu.iota {dimensions = array<i32: 0>} : vector<4x16xi32>
    %c2_i32 = arith.constant 2 : i32
    %47 = vector.broadcast %c2_i32 : i32 to vector<4x16xi32>
    %48 = arith.cmpi slt, %46, %47 : vector<4x16xi32>
    %49 = vector.shape_cast %27 : vector<1x16xf32> to vector<1x16xf32>
    %50 = vector.broadcast %49 : vector<1x16xf32> to vector<4x16xf32>
    %51 = vector.shape_cast %38 : vector<1x16xf32> to vector<1x16xf32>
    %52 = vector.broadcast %51 : vector<1x16xf32> to vector<4x16xf32>
    %53 = arith.select %48, %50, %52 : vector<4x16xi1>, vector<4x16xf32>
    %54 = vector.shape_cast %34 : vector<1x16xf32> to vector<1x16xf32>
    %55 = vector.broadcast %54 : vector<1x16xf32> to vector<4x16xf32>
    %56 = vector.shape_cast %45 : vector<1x16xf32> to vector<1x16xf32>
    %57 = vector.broadcast %56 : vector<1x16xf32> to vector<4x16xf32>
    %58 = arith.select %48, %55, %57 : vector<4x16xi1>, vector<4x16xf32>
    %59 = arith.subf %21, %53 : vector<4x16xf32>
    %cst_22 = arith.constant 9.99999974E-6 : f32
    %60 = vector.broadcast %cst_22 : f32 to vector<4x16xf32>
    %61 = arith.addf %58, %60 : vector<4x16xf32>
    %62 = math.rsqrt %61 : vector<4x16xf32>
    %63 = arith.mulf %59, %62 : vector<4x16xf32>
    %c0_23 = arith.constant 0 : index
    %c0_24 = arith.constant 0 : index
    %64 = vector.load %arg5[%c0_23, %c0_24] : memref<1x16xf32, #tpu.memory_space<vmem>>, vector<1x16xf32>
    %65 = vector.broadcast %64 : vector<1x16xf32> to vector<4x16xf32>
    %66 = arith.mulf %63, %65 : vector<4x16xf32>
    %c0_25 = arith.constant 0 : index
    %c0_26 = arith.constant 0 : index
    %67 = vector.load %arg6[%c0_25, %c0_26] : memref<1x16xf32, #tpu.memory_space<vmem>>, vector<1x16xf32>
    %68 = vector.broadcast %67 : vector<1x16xf32> to vector<4x16xf32>
    %69 = arith.addf %66, %68 : vector<4x16xf32>
    %cst_27 = arith.constant 0.000000e+00 : f32
    %70 = vector.broadcast %cst_27 : f32 to vector<4x16xf32>
    %71 = arith.cmpf oge, %69, %70 : vector<4x16xf32>
    %cst_28 = arith.constant 0.00999999977 : f32
    %72 = vector.broadcast %cst_28 : f32 to vector<4x16xf32>
    %73 = arith.mulf %72, %69 : vector<4x16xf32>
    %74 = arith.select %71, %69, %73 : vector<4x16xi1>, vector<4x16xf32>
    %c0_29 = arith.constant 0 : index
    %c0_30 = arith.constant 0 : index
    %75 = vector.load %arg7[%c0_29, %c0_30] : memref<16x16xf32, #tpu.memory_space<vmem>>, vector<16x16xf32>
    %cst_31 = arith.constant dense<0.000000e+00> : vector<4x16xf32>
    %76 = tpu.matmul %74, %75, %cst_31 {dimension_numbers = #tpu.dot_dimension_numbers<[1], [0], [0], [1], [0, 0, 1, 1], [], []>} : vector<4x16xf32>, vector<16x16xf32>, vector<4x16xf32> -> vector<4x16xf32>
    %c0_32 = arith.constant 0 : index
    %c0_33 = arith.constant 0 : index
    %77 = vector.load %arg8[%c0_32, %c0_33] : memref<1x16xf32, #tpu.memory_space<vmem>>, vector<1x16xf32>
    %78 = vector.broadcast %77 : vector<1x16xf32> to vector<4x16xf32>
    %79 = arith.addf %76, %78 : vector<4x16xf32>
    %c0_34 = arith.constant 0 : index
    %c0_35 = arith.constant 0 : index
    %80 = vector.load %arg12[%c0_34, %c0_35] : memref<4x16xf32, #tpu.memory_space<vmem>>, vector<4x16xf32>
    tpu.vector_store %arg12[%c0_34, %c0_35], %79 {strides = array<i32>} : memref<4x16xf32, #tpu.memory_space<vmem>>, vector<4x16xf32>,
    %81 = vector.extract_strided_slice %14 {offsets = [0, 0], sizes = [2, 16], strides = [1, 1]} : vector<8x16xf32> to vector<2x16xf32>
    %c0_36 = arith.constant 0 : index
    %c0_37 = arith.constant 0 : index
    %82 = vector.load %arg9[%c0_36, %c0_37] : memref<16x128xf32, #tpu.memory_space<vmem>>, vector<16x128xf32>
    %cst_38 = arith.constant dense<0.000000e+00> : vector<2x128xf32>
    %83 = tpu.matmul %81, %82, %cst_38 {dimension_numbers = #tpu.dot_dimension_numbers<[1], [0], [0], [1], [0, 0, 1, 1], [], []>} : vector<2x16xf32>, vector<16x128xf32>, vector<2x128xf32> -> vector<2x128xf32>
    %c0_39 = arith.constant 0 : index
    %c0_40 = arith.constant 0 : index
    %84 = vector.load %arg10[%c0_39, %c0_40] : memref<1x128xf32, #tpu.memory_space<vmem>>, vector<1x128xf32>
    %85 = vector.broadcast %84 : vector<1x128xf32> to vector<2x128xf32>
    %86 = arith.addf %83, %85 : vector<2x128xf32>
    %c0_41 = arith.constant 0 : index
    %c0_42 = arith.constant 0 : index
    %87 = vector.load %arg13[%c0_41, %c0_42] : memref<2x128xf32, #tpu.memory_space<vmem>>, vector<2x128xf32>
    tpu.vector_store %arg13[%c0_41, %c0_42], %86 {strides = array<i32>} : memref<2x128xf32, #tpu.memory_space<vmem>>, vector<2x128xf32>,
    return
  }
}

module attributes {stable_mosaic.version = 11 : i64} {
  func.func @_conv_mm_kernel(%arg0: i32, %arg1: i32, %arg2: memref<1x8x128xbf16, #tpu.memory_space<vmem>>, %arg3: memref<1x128x128xbf16, #tpu.memory_space<vmem>>, %arg4: memref<8x1xf32, #tpu.memory_space<vmem>>, %arg5: memref<1x8x128xbf16, #tpu.memory_space<vmem>>) attributes {dimension_semantics = [#tpu.dimension_semantics<parallel>, #tpu.dimension_semantics<parallel>], iteration_bounds = array<i64: 8, 1>, scalar_prefetch = 0 : i64, scratch_operands = 0 : i64, tpu.core_type = #tpu.core_type<tc>, window_params = [{transform_indices = @transform_0, window_bounds = array<i64: 1, 8, 128>}, {transform_indices = @transform_1, window_bounds = array<i64: 1, 128, 128>}, {pipeline_mode = #tpu.pipeline_mode<synchronous>, transform_indices = @transform_2, window_bounds = array<i64: 8, 1>}, {transform_indices = @transform_3, window_bounds = array<i64: 1, 8, 128>}]} {
    %c0 = arith.constant 0 : index
    %c0_0 = arith.constant 0 : index
    %c0_1 = arith.constant 0 : index
    %0 = vector.load %arg2[%c0, %c0_0, %c0_1] : memref<1x8x128xbf16, #tpu.memory_space<vmem>>, vector<1x8x128xbf16>
    %1 = vector.shape_cast %0 : vector<1x8x128xbf16> to vector<8x128xbf16>
    %c0_2 = arith.constant 0 : index
    %c0_3 = arith.constant 0 : index
    %c0_4 = arith.constant 0 : index
    %2 = vector.load %arg3[%c0_2, %c0_3, %c0_4] : memref<1x128x128xbf16, #tpu.memory_space<vmem>>, vector<1x128x128xbf16>
    %3 = vector.shape_cast %2 : vector<1x128x128xbf16> to vector<128x128xbf16>
    %cst = arith.constant dense<0.000000e+00> : vector<8x128xf32>
    %4 = tpu.matmul %1, %3, %cst {dimension_numbers = #tpu.dot_dimension_numbers<[1], [0], [0], [1], [0, 0, 1, 1], [], []>} : vector<8x128xbf16>, vector<128x128xbf16>, vector<8x128xf32> -> vector<8x128xf32>
    %c0_5 = arith.constant 0 : index
    %c0_6 = arith.constant 0 : index
    %5 = vector.load %arg4[%c0_5, %c0_6] : memref<8x1xf32, #tpu.memory_space<vmem>>, vector<8x1xf32>
    %6 = vector.broadcast %5 : vector<8x1xf32> to vector<8x128xf32>
    %7 = arith.addf %4, %6 : vector<8x128xf32>
    %8 = arith.truncf %7 : vector<8x128xf32> to vector<8x128xbf16>
    %c0_7 = arith.constant 0 : index
    %c0_8 = arith.constant 0 : index
    %c0_9 = arith.constant 0 : index
    %9 = vector.load %arg5[%c0_7, %c0_8, %c0_9] : memref<1x8x128xbf16, #tpu.memory_space<vmem>>, vector<1x8x128xbf16>
    %10 = vector.shape_cast %9 : vector<1x8x128xbf16> to vector<8x128xbf16>
    %11 = vector.shape_cast %8 : vector<8x128xbf16> to vector<1x8x128xbf16>
    tpu.vector_store %arg5[%c0_7, %c0_8, %c0_9], %11 {strides = array<i32>} : memref<1x8x128xbf16, #tpu.memory_space<vmem>>, vector<1x8x128xbf16>,
    return
  }
  func.func @transform_0(%arg0: i32, %arg1: i32) -> (i32, i32, i32) {
    %c0_i32 = arith.constant 0 : i32
    %c0_i32_0 = arith.constant 0 : i32
    %c0_i32_1 = arith.constant 0 : i32
    return %arg0, %c0_i32, %c0_i32_0 : i32, i32, i32
  }
  func.func @transform_1(%arg0: i32, %arg1: i32) -> (i32, i32, i32) {
    %c0_i32 = arith.constant 0 : i32
    %c0_i32_0 = arith.constant 0 : i32
    return %arg0, %c0_i32, %arg1 : i32, i32, i32
  }
  func.func @transform_2(%arg0: i32, %arg1: i32) -> (i32, i32) {
    %c0_i32 = arith.constant 0 : i32
    %c0_i32_0 = arith.constant 0 : i32
    %c0_i32_1 = arith.constant 0 : i32
    return %c0_i32, %c0_i32_0 : i32, i32
  }
  func.func @transform_3(%arg0: i32, %arg1: i32) -> (i32, i32, i32) {
    %c0_i32 = arith.constant 0 : i32
    %c0_i32_0 = arith.constant 0 : i32
    return %arg0, %c0_i32, %arg1 : i32, i32, i32
  }
}

module attributes {stable_mosaic.version = 11 : i64} {
  func.func @_gn_lrelu_kernel(%arg0: i32, %arg1: memref<8x128xbf16, #tpu.memory_space<vmem>>, %arg2: memref<8x128xf32, #tpu.memory_space<vmem>>, %arg3: memref<8x128xf32, #tpu.memory_space<vmem>>, %arg4: memref<8x128xbf16, #tpu.memory_space<vmem>>) attributes {dimension_semantics = [#tpu.dimension_semantics<parallel>], iteration_bounds = array<i64: 1>, scalar_prefetch = 0 : i64, scratch_operands = 0 : i64, tpu.core_type = #tpu.core_type<tc>, window_params = [{transform_indices = @transform_0, window_bounds = array<i64: 8, 128>}, {pipeline_mode = #tpu.pipeline_mode<synchronous>, transform_indices = @transform_1, window_bounds = array<i64: 8, 128>}, {pipeline_mode = #tpu.pipeline_mode<synchronous>, transform_indices = @transform_2, window_bounds = array<i64: 8, 128>}, {transform_indices = @transform_3, window_bounds = array<i64: 8, 128>}]} {
    %c0 = arith.constant 0 : index
    %c0_0 = arith.constant 0 : index
    %0 = vector.load %arg1[%c0, %c0_0] : memref<8x128xbf16, #tpu.memory_space<vmem>>, vector<8x128xbf16>
    %1 = arith.extf %0 : vector<8x128xbf16> to vector<8x128xf32>
    %cst = arith.constant dense<0.000000e+00> : vector<8xf32>
    %2 = vector.multi_reduction <add>, %1, %cst [1] : vector<8x128xf32> to vector<8xf32>
    %3 = vector.shape_cast %2 : vector<8xf32> to vector<8x1xf32>
    %cst_1 = arith.constant 1.280000e+02 : f32
    %4 = vector.broadcast %cst_1 : f32 to vector<8x1xf32>
    %5 = arith.divf %3, %4 : vector<8x1xf32>
    %6 = arith.mulf %1, %1 : vector<8x128xf32>
    %cst_2 = arith.constant dense<0.000000e+00> : vector<8xf32>
    %7 = vector.multi_reduction <add>, %6, %cst_2 [1] : vector<8x128xf32> to vector<8xf32>
    %8 = vector.shape_cast %7 : vector<8xf32> to vector<8x1xf32>
    %cst_3 = arith.constant 1.280000e+02 : f32
    %9 = vector.broadcast %cst_3 : f32 to vector<8x1xf32>
    %10 = arith.divf %8, %9 : vector<8x1xf32>
    %11 = arith.mulf %5, %5 : vector<8x1xf32>
    %12 = arith.subf %10, %11 : vector<8x1xf32>
    %cst_4 = arith.constant 0.000000e+00 : f32
    %13 = vector.broadcast %cst_4 : f32 to vector<8x1xf32>
    %14 = arith.maximumf %12, %13 : vector<8x1xf32>
    %15 = vector.broadcast %5 : vector<8x1xf32> to vector<8x128xf32>
    %16 = arith.subf %1, %15 : vector<8x128xf32>
    %cst_5 = arith.constant 9.99999974E-6 : f32
    %17 = vector.broadcast %cst_5 : f32 to vector<8x1xf32>
    %18 = arith.addf %14, %17 : vector<8x1xf32>
    %19 = math.rsqrt %18 : vector<8x1xf32>
    %20 = vector.broadcast %19 : vector<8x1xf32> to vector<8x128xf32>
    %21 = arith.mulf %16, %20 : vector<8x128xf32>
    %c0_6 = arith.constant 0 : index
    %c0_7 = arith.constant 0 : index
    %22 = vector.load %arg2[%c0_6, %c0_7] : memref<8x128xf32, #tpu.memory_space<vmem>>, vector<8x128xf32>
    %23 = arith.mulf %21, %22 : vector<8x128xf32>
    %c0_8 = arith.constant 0 : index
    %c0_9 = arith.constant 0 : index
    %24 = vector.load %arg3[%c0_8, %c0_9] : memref<8x128xf32, #tpu.memory_space<vmem>>, vector<8x128xf32>
    %25 = arith.addf %23, %24 : vector<8x128xf32>
    %cst_10 = arith.constant 0.000000e+00 : f32
    %26 = vector.broadcast %cst_10 : f32 to vector<8x128xf32>
    %27 = arith.cmpf oge, %25, %26 : vector<8x128xf32>
    %cst_11 = arith.constant 0.00999999977 : f32
    %28 = vector.broadcast %cst_11 : f32 to vector<8x128xf32>
    %29 = arith.mulf %28, %25 : vector<8x128xf32>
    %30 = arith.select %27, %25, %29 : vector<8x128xi1>, vector<8x128xf32>
    %31 = arith.truncf %30 : vector<8x128xf32> to vector<8x128xbf16>
    %c0_12 = arith.constant 0 : index
    %c0_13 = arith.constant 0 : index
    %32 = vector.load %arg4[%c0_12, %c0_13] : memref<8x128xbf16, #tpu.memory_space<vmem>>, vector<8x128xbf16>
    tpu.vector_store %arg4[%c0_12, %c0_13], %31 {strides = array<i32>} : memref<8x128xbf16, #tpu.memory_space<vmem>>, vector<8x128xbf16>,
    return
  }
  func.func @transform_0(%arg0: i32) -> (i32, i32) {
    %c0_i32 = arith.constant 0 : i32
    %c0_i32_0 = arith.constant 0 : i32
    return %arg0, %c0_i32 : i32, i32
  }
  func.func @transform_1(%arg0: i32) -> (i32, i32) {
    %c0_i32 = arith.constant 0 : i32
    %c0_i32_0 = arith.constant 0 : i32
    %c0_i32_1 = arith.constant 0 : i32
    return %c0_i32, %c0_i32_0 : i32, i32
  }
  func.func @transform_2(%arg0: i32) -> (i32, i32) {
    %c0_i32 = arith.constant 0 : i32
    %c0_i32_0 = arith.constant 0 : i32
    %c0_i32_1 = arith.constant 0 : i32
    return %c0_i32, %c0_i32_0 : i32, i32
  }
  func.func @transform_3(%arg0: i32) -> (i32, i32) {
    %c0_i32 = arith.constant 0 : i32
    %c0_i32_0 = arith.constant 0 : i32
    return %arg0, %c0_i32 : i32, i32
  }
}

module attributes {stable_mosaic.version = 11 : i64} {
  func.func @_conv_mm_kernel(%arg0: i32, %arg1: i32, %arg2: memref<1x8x64xbf16, #tpu.memory_space<vmem>>, %arg3: memref<1x64x128xbf16, #tpu.memory_space<vmem>>, %arg4: memref<8x1xf32, #tpu.memory_space<vmem>>, %arg5: memref<1x8x128xbf16, #tpu.memory_space<vmem>>) attributes {dimension_semantics = [#tpu.dimension_semantics<parallel>, #tpu.dimension_semantics<parallel>], iteration_bounds = array<i64: 8, 1>, scalar_prefetch = 0 : i64, scratch_operands = 0 : i64, tpu.core_type = #tpu.core_type<tc>, window_params = [{transform_indices = @transform_0, window_bounds = array<i64: 1, 8, 64>}, {transform_indices = @transform_1, window_bounds = array<i64: 1, 64, 128>}, {pipeline_mode = #tpu.pipeline_mode<synchronous>, transform_indices = @transform_2, window_bounds = array<i64: 8, 1>}, {transform_indices = @transform_3, window_bounds = array<i64: 1, 8, 128>}]} {
    %c0 = arith.constant 0 : index
    %c0_0 = arith.constant 0 : index
    %c0_1 = arith.constant 0 : index
    %0 = vector.load %arg2[%c0, %c0_0, %c0_1] : memref<1x8x64xbf16, #tpu.memory_space<vmem>>, vector<1x8x64xbf16>
    %1 = vector.shape_cast %0 : vector<1x8x64xbf16> to vector<8x64xbf16>
    %c0_2 = arith.constant 0 : index
    %c0_3 = arith.constant 0 : index
    %c0_4 = arith.constant 0 : index
    %2 = vector.load %arg3[%c0_2, %c0_3, %c0_4] : memref<1x64x128xbf16, #tpu.memory_space<vmem>>, vector<1x64x128xbf16>
    %3 = vector.shape_cast %2 : vector<1x64x128xbf16> to vector<64x128xbf16>
    %cst = arith.constant dense<0.000000e+00> : vector<8x128xf32>
    %4 = tpu.matmul %1, %3, %cst {dimension_numbers = #tpu.dot_dimension_numbers<[1], [0], [0], [1], [0, 0, 1, 1], [], []>} : vector<8x64xbf16>, vector<64x128xbf16>, vector<8x128xf32> -> vector<8x128xf32>
    %c0_5 = arith.constant 0 : index
    %c0_6 = arith.constant 0 : index
    %5 = vector.load %arg4[%c0_5, %c0_6] : memref<8x1xf32, #tpu.memory_space<vmem>>, vector<8x1xf32>
    %6 = vector.broadcast %5 : vector<8x1xf32> to vector<8x128xf32>
    %7 = arith.addf %4, %6 : vector<8x128xf32>
    %8 = arith.truncf %7 : vector<8x128xf32> to vector<8x128xbf16>
    %c0_7 = arith.constant 0 : index
    %c0_8 = arith.constant 0 : index
    %c0_9 = arith.constant 0 : index
    %9 = vector.load %arg5[%c0_7, %c0_8, %c0_9] : memref<1x8x128xbf16, #tpu.memory_space<vmem>>, vector<1x8x128xbf16>
    %10 = vector.shape_cast %9 : vector<1x8x128xbf16> to vector<8x128xbf16>
    %11 = vector.shape_cast %8 : vector<8x128xbf16> to vector<1x8x128xbf16>
    tpu.vector_store %arg5[%c0_7, %c0_8, %c0_9], %11 {strides = array<i32>} : memref<1x8x128xbf16, #tpu.memory_space<vmem>>, vector<1x8x128xbf16>,
    return
  }
  func.func @transform_0(%arg0: i32, %arg1: i32) -> (i32, i32, i32) {
    %c0_i32 = arith.constant 0 : i32
    %c0_i32_0 = arith.constant 0 : i32
    %c0_i32_1 = arith.constant 0 : i32
    return %arg0, %c0_i32, %c0_i32_0 : i32, i32, i32
  }
  func.func @transform_1(%arg0: i32, %arg1: i32) -> (i32, i32, i32) {
    %c0_i32 = arith.constant 0 : i32
    %c0_i32_0 = arith.constant 0 : i32
    return %arg0, %c0_i32, %arg1 : i32, i32, i32
  }
  func.func @transform_2(%arg0: i32, %arg1: i32) -> (i32, i32) {
    %c0_i32 = arith.constant 0 : i32
    %c0_i32_0 = arith.constant 0 : i32
    %c0_i32_1 = arith.constant 0 : i32
    return %c0_i32, %c0_i32_0 : i32, i32
  }
  func.func @transform_3(%arg0: i32, %arg1: i32) -> (i32, i32, i32) {
    %c0_i32 = arith.constant 0 : i32
    %c0_i32_0 = arith.constant 0 : i32
    return %arg0, %c0_i32, %arg1 : i32, i32, i32
  }
}

module attributes {stable_mosaic.version = 11 : i64} {
  func.func @_gn_lrelu_kernel(%arg0: i32, %arg1: memref<8x1024xbf16, #tpu.memory_space<vmem>>, %arg2: memref<8x1024xf32, #tpu.memory_space<vmem>>, %arg3: memref<8x1024xf32, #tpu.memory_space<vmem>>, %arg4: memref<8x1024xbf16, #tpu.memory_space<vmem>>) attributes {dimension_semantics = [#tpu.dimension_semantics<parallel>], iteration_bounds = array<i64: 1>, scalar_prefetch = 0 : i64, scratch_operands = 0 : i64, tpu.core_type = #tpu.core_type<tc>, window_params = [{transform_indices = @transform_0, window_bounds = array<i64: 8, 1024>}, {pipeline_mode = #tpu.pipeline_mode<synchronous>, transform_indices = @transform_1, window_bounds = array<i64: 8, 1024>}, {pipeline_mode = #tpu.pipeline_mode<synchronous>, transform_indices = @transform_2, window_bounds = array<i64: 8, 1024>}, {transform_indices = @transform_3, window_bounds = array<i64: 8, 1024>}]} {
    %c0 = arith.constant 0 : index
    %c0_0 = arith.constant 0 : index
    %0 = vector.load %arg1[%c0, %c0_0] : memref<8x1024xbf16, #tpu.memory_space<vmem>>, vector<8x1024xbf16>
    %1 = arith.extf %0 : vector<8x1024xbf16> to vector<8x1024xf32>
    %cst = arith.constant dense<0.000000e+00> : vector<8xf32>
    %2 = vector.multi_reduction <add>, %1, %cst [1] : vector<8x1024xf32> to vector<8xf32>
    %3 = vector.shape_cast %2 : vector<8xf32> to vector<8x1xf32>
    %cst_1 = arith.constant 1.024000e+03 : f32
    %4 = vector.broadcast %cst_1 : f32 to vector<8x1xf32>
    %5 = arith.divf %3, %4 : vector<8x1xf32>
    %6 = arith.mulf %1, %1 : vector<8x1024xf32>
    %cst_2 = arith.constant dense<0.000000e+00> : vector<8xf32>
    %7 = vector.multi_reduction <add>, %6, %cst_2 [1] : vector<8x1024xf32> to vector<8xf32>
    %8 = vector.shape_cast %7 : vector<8xf32> to vector<8x1xf32>
    %cst_3 = arith.constant 1.024000e+03 : f32
    %9 = vector.broadcast %cst_3 : f32 to vector<8x1xf32>
    %10 = arith.divf %8, %9 : vector<8x1xf32>
    %11 = arith.mulf %5, %5 : vector<8x1xf32>
    %12 = arith.subf %10, %11 : vector<8x1xf32>
    %cst_4 = arith.constant 0.000000e+00 : f32
    %13 = vector.broadcast %cst_4 : f32 to vector<8x1xf32>
    %14 = arith.maximumf %12, %13 : vector<8x1xf32>
    %15 = vector.broadcast %5 : vector<8x1xf32> to vector<8x1024xf32>
    %16 = arith.subf %1, %15 : vector<8x1024xf32>
    %cst_5 = arith.constant 9.99999974E-6 : f32
    %17 = vector.broadcast %cst_5 : f32 to vector<8x1xf32>
    %18 = arith.addf %14, %17 : vector<8x1xf32>
    %19 = math.rsqrt %18 : vector<8x1xf32>
    %20 = vector.broadcast %19 : vector<8x1xf32> to vector<8x1024xf32>
    %21 = arith.mulf %16, %20 : vector<8x1024xf32>
    %c0_6 = arith.constant 0 : index
    %c0_7 = arith.constant 0 : index
    %22 = vector.load %arg2[%c0_6, %c0_7] : memref<8x1024xf32, #tpu.memory_space<vmem>>, vector<8x1024xf32>
    %23 = arith.mulf %21, %22 : vector<8x1024xf32>
    %c0_8 = arith.constant 0 : index
    %c0_9 = arith.constant 0 : index
    %24 = vector.load %arg3[%c0_8, %c0_9] : memref<8x1024xf32, #tpu.memory_space<vmem>>, vector<8x1024xf32>
    %25 = arith.addf %23, %24 : vector<8x1024xf32>
    %cst_10 = arith.constant 0.000000e+00 : f32
    %26 = vector.broadcast %cst_10 : f32 to vector<8x1024xf32>
    %27 = arith.cmpf oge, %25, %26 : vector<8x1024xf32>
    %cst_11 = arith.constant 0.00999999977 : f32
    %28 = vector.broadcast %cst_11 : f32 to vector<8x1024xf32>
    %29 = arith.mulf %28, %25 : vector<8x1024xf32>
    %30 = arith.select %27, %25, %29 : vector<8x1024xi1>, vector<8x1024xf32>
    %31 = arith.truncf %30 : vector<8x1024xf32> to vector<8x1024xbf16>
    %c0_12 = arith.constant 0 : index
    %c0_13 = arith.constant 0 : index
    %32 = vector.load %arg4[%c0_12, %c0_13] : memref<8x1024xbf16, #tpu.memory_space<vmem>>, vector<8x1024xbf16>
    tpu.vector_store %arg4[%c0_12, %c0_13], %31 {strides = array<i32>} : memref<8x1024xbf16, #tpu.memory_space<vmem>>, vector<8x1024xbf16>,
    return
  }
  func.func @transform_0(%arg0: i32) -> (i32, i32) {
    %c0_i32 = arith.constant 0 : i32
    %c0_i32_0 = arith.constant 0 : i32
    return %arg0, %c0_i32 : i32, i32
  }
  func.func @transform_1(%arg0: i32) -> (i32, i32) {
    %c0_i32 = arith.constant 0 : i32
    %c0_i32_0 = arith.constant 0 : i32
    %c0_i32_1 = arith.constant 0 : i32
    return %c0_i32, %c0_i32_0 : i32, i32
  }
  func.func @transform_2(%arg0: i32) -> (i32, i32) {
    %c0_i32 = arith.constant 0 : i32
    %c0_i32_0 = arith.constant 0 : i32
    %c0_i32_1 = arith.constant 0 : i32
    return %c0_i32, %c0_i32_0 : i32, i32
  }
  func.func @transform_3(%arg0: i32) -> (i32, i32) {
    %c0_i32 = arith.constant 0 : i32
    %c0_i32_0 = arith.constant 0 : i32
    return %arg0, %c0_i32 : i32, i32
  }
}

module attributes {stable_mosaic.version = 11 : i64} {
  func.func @_conv_mm_kernel(%arg0: i32, %arg1: i32, %arg2: memref<1x2x224xbf16, #tpu.memory_space<vmem>>, %arg3: memref<1x224x512xbf16, #tpu.memory_space<vmem>>, %arg4: memref<2x1xf32, #tpu.memory_space<vmem>>, %arg5: memref<1x2x512xf32, #tpu.memory_space<vmem>>) attributes {dimension_semantics = [#tpu.dimension_semantics<parallel>, #tpu.dimension_semantics<parallel>], iteration_bounds = array<i64: 1, 2>, scalar_prefetch = 0 : i64, scratch_operands = 0 : i64, tpu.core_type = #tpu.core_type<tc>, window_params = [{transform_indices = @transform_0, window_bounds = array<i64: 1, 2, 224>}, {transform_indices = @transform_1, window_bounds = array<i64: 1, 224, 512>}, {pipeline_mode = #tpu.pipeline_mode<synchronous>, transform_indices = @transform_2, window_bounds = array<i64: 2, 1>}, {transform_indices = @transform_3, window_bounds = array<i64: 1, 2, 512>}]} {
    %c0 = arith.constant 0 : index
    %c0_0 = arith.constant 0 : index
    %c0_1 = arith.constant 0 : index
    %0 = vector.load %arg2[%c0, %c0_0, %c0_1] : memref<1x2x224xbf16, #tpu.memory_space<vmem>>, vector<1x2x224xbf16>
    %1 = vector.shape_cast %0 : vector<1x2x224xbf16> to vector<2x224xbf16>
    %c0_2 = arith.constant 0 : index
    %c0_3 = arith.constant 0 : index
    %c0_4 = arith.constant 0 : index
    %2 = vector.load %arg3[%c0_2, %c0_3, %c0_4] : memref<1x224x512xbf16, #tpu.memory_space<vmem>>, vector<1x224x512xbf16>
    %3 = vector.shape_cast %2 : vector<1x224x512xbf16> to vector<224x512xbf16>
    %cst = arith.constant dense<0.000000e+00> : vector<2x512xf32>
    %4 = tpu.matmul %1, %3, %cst {dimension_numbers = #tpu.dot_dimension_numbers<[1], [0], [0], [1], [0, 0, 1, 1], [], []>} : vector<2x224xbf16>, vector<224x512xbf16>, vector<2x512xf32> -> vector<2x512xf32>
    %c0_5 = arith.constant 0 : index
    %c0_6 = arith.constant 0 : index
    %5 = vector.load %arg4[%c0_5, %c0_6] : memref<2x1xf32, #tpu.memory_space<vmem>>, vector<2x1xf32>
    %6 = vector.broadcast %5 : vector<2x1xf32> to vector<2x512xf32>
    %7 = arith.addf %4, %6 : vector<2x512xf32>
    %c0_7 = arith.constant 0 : index
    %c0_8 = arith.constant 0 : index
    %c0_9 = arith.constant 0 : index
    %8 = vector.load %arg5[%c0_7, %c0_8, %c0_9] : memref<1x2x512xf32, #tpu.memory_space<vmem>>, vector<1x2x512xf32>
    %9 = vector.shape_cast %8 : vector<1x2x512xf32> to vector<2x512xf32>
    %10 = vector.shape_cast %7 : vector<2x512xf32> to vector<1x2x512xf32>
    tpu.vector_store %arg5[%c0_7, %c0_8, %c0_9], %10 {strides = array<i32>} : memref<1x2x512xf32, #tpu.memory_space<vmem>>, vector<1x2x512xf32>,
    return
  }
  func.func @transform_0(%arg0: i32, %arg1: i32) -> (i32, i32, i32) {
    %c0_i32 = arith.constant 0 : i32
    %c0_i32_0 = arith.constant 0 : i32
    %c0_i32_1 = arith.constant 0 : i32
    return %arg0, %c0_i32, %c0_i32_0 : i32, i32, i32
  }
  func.func @transform_1(%arg0: i32, %arg1: i32) -> (i32, i32, i32) {
    %c0_i32 = arith.constant 0 : i32
    %c0_i32_0 = arith.constant 0 : i32
    return %arg0, %c0_i32, %arg1 : i32, i32, i32
  }
  func.func @transform_2(%arg0: i32, %arg1: i32) -> (i32, i32) {
    %c0_i32 = arith.constant 0 : i32
    %c0_i32_0 = arith.constant 0 : i32
    %c0_i32_1 = arith.constant 0 : i32
    return %c0_i32, %c0_i32_0 : i32, i32
  }
  func.func @transform_3(%arg0: i32, %arg1: i32) -> (i32, i32, i32) {
    %c0_i32 = arith.constant 0 : i32
    %c0_i32_0 = arith.constant 0 : i32
    return %arg0, %c0_i32, %arg1 : i32, i32, i32
  }
}

</mosaic_0001>

<llo_original>
// kernel: tile.63
$region0: #{tile.63}
  %s0 = inlined_call_operand.vmem [shape: f32[2,4,1024], index: 0, kind: input, shape index: {}]
  %s1 = inlined_call_operand.vmem [shape: f32[8,1024], index: 1, kind: output, shape index: {}]
  $region1: #{tile.63} parent=0
    #allocation0 [shape = 'u8[65536]{0}', space=vmem, size = 0x10000, scoped, tag = 'scoped mem for input reshape']
    %s3 = sshll.u32 1, 4
    %s4 = ssub.s32 %s3, 1
    %s5 = smul.addr 4, 15
    %s6 = scalar_lea.vmem %s0, %s5
    %v7 = vld [vmem:[%s6] sm:%s4]
    %s8 = scalar_lea.vmem [#allocation0], 120
    %9 = vst [vmem:[%s8] sm:%s4] %v7
    %s10 = smul.addr 4, 14
    %s11 = scalar_lea.vmem %s0, %s10
    %v12 = vld [vmem:[%s11] sm:%s4]
    %s13 = scalar_lea.vmem [#allocation0], 112
    %14 = vst [vmem:[%s13] sm:%s4] %v12
    %s15 = smul.addr 4, 13
    %s16 = scalar_lea.vmem %s0, %s15
    %v17 = vld [vmem:[%s16] sm:%s4]
    %s18 = scalar_lea.vmem [#allocation0], 104
    %19 = vst [vmem:[%s18] sm:%s4] %v17
    %s20 = smul.addr 4, 12
    %s21 = scalar_lea.vmem %s0, %s20
    %v22 = vld [vmem:[%s21] sm:%s4]
    %s23 = scalar_lea.vmem [#allocation0], 96
    %24 = vst [vmem:[%s23] sm:%s4] %v22
    %s25 = smul.addr 4, 11
    %s26 = scalar_lea.vmem %s0, %s25
    %v27 = vld [vmem:[%s26] sm:%s4]
    %s28 = scalar_lea.vmem [#allocation0], 88
    %29 = vst [vmem:[%s28] sm:%s4] %v27
    %s30 = smul.addr 4, 10
    %s31 = scalar_lea.vmem %s0, %s30
    %v32 = vld [vmem:[%s31] sm:%s4]
    %s33 = scalar_lea.vmem [#allocation0], 80
    %34 = vst [vmem:[%s33] sm:%s4] %v32
    %s35 = smul.addr 4, 9
    %s36 = scalar_lea.vmem %s0, %s35
    %v37 = vld [vmem:[%s36] sm:%s4]
    %s38 = scalar_lea.vmem [#allocation0], 72
    %39 = vst [vmem:[%s38] sm:%s4] %v37
    %s40 = smul.addr 4, 8
    %s41 = scalar_lea.vmem %s0, %s40
    %v42 = vld [vmem:[%s41] sm:%s4]
    %s43 = scalar_lea.vmem [#allocation0], 64
    %44 = vst [vmem:[%s43] sm:%s4] %v42
    %s45 = smul.addr 4, 7
    %s46 = scalar_lea.vmem %s0, %s45
    %v47 = vld [vmem:[%s46] sm:%s4]
    %s48 = scalar_lea.vmem [#allocation0], 56
    %49 = vst [vmem:[%s48] sm:%s4] %v47
    %s50 = smul.addr 4, 6
    %s51 = scalar_lea.vmem %s0, %s50
    %v52 = vld [vmem:[%s51] sm:%s4]
    %s53 = scalar_lea.vmem [#allocation0], 48
    %54 = vst [vmem:[%s53] sm:%s4] %v52
    %s55 = smul.addr 4, 5
    %s56 = scalar_lea.vmem %s0, %s55
    %v57 = vld [vmem:[%s56] sm:%s4]
    %s58 = scalar_lea.vmem [#allocation0], 40
    %59 = vst [vmem:[%s58] sm:%s4] %v57
    %s60 = smul.addr 4, 4
    %s61 = scalar_lea.vmem %s0, %s60
    %v62 = vld [vmem:[%s61] sm:%s4]
    %s63 = scalar_lea.vmem [#allocation0], 32
    %64 = vst [vmem:[%s63] sm:%s4] %v62
    %s65 = smul.addr 4, 3
    %s66 = scalar_lea.vmem %s0, %s65
    %v67 = vld [vmem:[%s66] sm:%s4]
    %s68 = scalar_lea.vmem [#allocation0], 24
    %69 = vst [vmem:[%s68] sm:%s4] %v67
    %s70 = smul.addr 4, 2
    %s71 = scalar_lea.vmem %s0, %s70
    %v72 = vld [vmem:[%s71] sm:%s4]
    %s73 = scalar_lea.vmem [#allocation0], 16
    %74 = vst [vmem:[%s73] sm:%s4] %v72
    %s75 = scalar_lea.vmem %s0, 4
    %v76 = vld [vmem:[%s75] sm:%s4]
    %s77 = scalar_lea.vmem [#allocation0], 8
    %78 = vst [vmem:[%s77] sm:%s4] %v76
    %v79 = vld [vmem:[%s0] sm:%s4]
    %80 = vst [vmem:[#allocation0] sm:%s4] %v79
    %v81 = vld [vmem:[#allocation0] sm:$0xf]
    %82 = vst [vmem:[%s1] sm:$0xf] %v81
    %s83 = scalar_lea.vmem [#allocation0], 8
    %v84 = vld [vmem:[%s83] sm:$0xf]
    %s85 = scalar_lea.vmem %s1, 8
    %86 = vst [vmem:[%s85] sm:$0xf] %v84
    %s87 = scalar_lea.vmem [#allocation0], 16
    %v88 = vld [vmem:[%s87] sm:$0xf]
    %s89 = scalar_lea.vmem %s1, 16
    %90 = vst [vmem:[%s89] sm:$0xf] %v88
    %s91 = scalar_lea.vmem [#allocation0], 24
    %v92 = vld [vmem:[%s91] sm:$0xf]
    %s93 = scalar_lea.vmem %s1, 24
    %94 = vst [vmem:[%s93] sm:$0xf] %v92
    %s95 = scalar_lea.vmem [#allocation0], 32
    %v96 = vld [vmem:[%s95] sm:$0xf]
    %s97 = scalar_lea.vmem %s1, 32
    %98 = vst [vmem:[%s97] sm:$0xf] %v96
    %s99 = scalar_lea.vmem [#allocation0], 40
    %v100 = vld [vmem:[%s99] sm:$0xf]
    %s101 = scalar_lea.vmem %s1, 40
    %102 = vst [vmem:[%s101] sm:$0xf] %v100
    %s103 = scalar_lea.vmem [#allocation0], 48
    %v104 = vld [vmem:[%s103] sm:$0xf]
    %s105 = scalar_lea.vmem %s1, 48
    %106 = vst [vmem:[%s105] sm:$0xf] %v104
    %s107 = scalar_lea.vmem [#allocation0], 56
    %v108 = vld [vmem:[%s107] sm:$0xf]
    %s109 = scalar_lea.vmem %s1, 56
    %110 = vst [vmem:[%s109] sm:$0xf] %v108
    %s111 = scalar_lea.vmem [#allocation0], 64
    %v112 = vld [vmem:[%s111] sm:$0xf]
    %s113 = scalar_lea.vmem %s1, 4
    %114 = vst [vmem:[%s113] sm:$0xf] %v112
    %s115 = scalar_lea.vmem [#allocation0], 72
    %v116 = vld [vmem:[%s115] sm:$0xf]
    %s117 = scalar_lea.vmem %s1, 12
    %118 = vst [vmem:[%s117] sm:$0xf] %v116
    %s119 = scalar_lea.vmem [#allocation0], 80
    %v120 = vld [vmem:[%s119] sm:$0xf]
    %s121 = scalar_lea.vmem %s1, 20
    %122 = vst [vmem:[%s121] sm:$0xf] %v120
    %s123 = scalar_lea.vmem [#allocation0], 88
    %v124 = vld [vmem:[%s123] sm:$0xf]
    %s125 = scalar_lea.vmem %s1, 28
    %126 = vst [vmem:[%s125] sm:$0xf] %v124
    %s127 = scalar_lea.vmem [#allocation0], 96
    %v128 = vld [vmem:[%s127] sm:$0xf]
    %s129 = scalar_lea.vmem %s1, 36
    %130 = vst [vmem:[%s129] sm:$0xf] %v128
    %s131 = scalar_lea.vmem [#allocation0], 104
    %v132 = vld [vmem:[%s131] sm:$0xf]
    %s133 = scalar_lea.vmem %s1, 44
    %134 = vst [vmem:[%s133] sm:$0xf] %v132
    %s135 = scalar_lea.vmem [#allocation0], 112
    %v136 = vld [vmem:[%s135] sm:$0xf]
    %s137 = scalar_lea.vmem %s1, 52
    %138 = vst [vmem:[%s137] sm:$0xf] %v136
    %s139 = scalar_lea.vmem [#allocation0], 120
    %v140 = vld [vmem:[%s139] sm:$0xf]
    %s141 = scalar_lea.vmem %s1, 60
    %142 = vst [vmem:[%s141] sm:$0xf] %v140

// kernel: squeeze.3
$region0: #{squeeze.3}
  %s0 = inlined_call_operand.vmem [shape: bf16[1,8,512], index: 0, kind: input, shape index: {}]
  %s1 = inlined_call_operand.vmem [shape: bf16[8,8,64], index: 1, kind: output, shape index: {}]
  $region1: #{squeeze.3} parent=0
    #allocation0 [shape = 'u8[32768]{0}', space=vmem, size = 0x8000, scoped, tag = 'scoped mem for output reshape']
    #allocation1 [shape = 'u8[16384]{0}', space=vmem, size = 0x4000, scoped, tag = 'scoped mem for input reshape']
    %s3 = smul.u32 4, 2
    %s4 = sshll.u32 1, %s3
    %s5 = ssub.s32 %s4, 1
    %s6 = smul.addr 4, 3
    %s7 = scalar_lea.vmem %s0, %s6
    %s8 = sshrl.u32 %s5, 1
    %s9 = sor.u32 %s5, %s8
    %s10 = sand.u32 %s9, 85
    %s11 = sshrl.u32 %s10, 1
    %s12 = sor.u32 %s10, %s11
    %s13 = sand.u32 51, %s12
    %s14 = sshrl.u32 %s13, 2
    %s15 = sor.u32 %s13, %s14
    %s16 = sand.u32 15, %s15
    %v17 = vld [vmem:[%s7] sm:%s16]
    %v18 = vunpack.c.l.bf16 %v17
    %v19 = vunpack.c.h.bf16 %v17
    %s20 = scalar_lea.vmem [#allocation1], 24
    %21 = vst [vmem:[%s20] sm:%s5] %v18
    %s22 = smul.addr 4, 2
    %s23 = scalar_lea.vmem %s0, %s22
    %s24 = sshrl.u32 %s5, 1
    %s25 = sor.u32 %s5, %s24
    %s26 = sand.u32 %s25, 85
    %s27 = sshrl.u32 %s26, 1
    %s28 = sor.u32 %s26, %s27
    %s29 = sand.u32 51, %s28
    %s30 = sshrl.u32 %s29, 2
    %s31 = sor.u32 %s29, %s30
    %s32 = sand.u32 15, %s31
    %v33 = vld [vmem:[%s23] sm:%s32]
    %v34 = vunpack.c.l.bf16 %v33
    %v35 = vunpack.c.h.bf16 %v33
    %s36 = scalar_lea.vmem [#allocation1], 16
    %37 = vst [vmem:[%s36] sm:%s5] %v34
    %s38 = scalar_lea.vmem %s0, 4
    %s39 = sshrl.u32 %s5, 1
    %s40 = sor.u32 %s5, %s39
    %s41 = sand.u32 %s40, 85
    %s42 = sshrl.u32 %s41, 1
    %s43 = sor.u32 %s41, %s42
    %s44 = sand.u32 51, %s43
    %s45 = sshrl.u32 %s44, 2
    %s46 = sor.u32 %s44, %s45
    %s47 = sand.u32 15, %s46
    %v48 = vld [vmem:[%s38] sm:%s47]
    %v49 = vunpack.c.l.bf16 %v48
    %v50 = vunpack.c.h.bf16 %v48
    %s51 = scalar_lea.vmem [#allocation1], 8
    %52 = vst [vmem:[%s51] sm:%s5] %v49
    %s53 = sshrl.u32 %s5, 1
    %s54 = sor.u32 %s5, %s53
    %s55 = sand.u32 %s54, 85
    %s56 = sshrl.u32 %s55, 1
    %s57 = sor.u32 %s55, %s56
    %s58 = sand.u32 51, %s57
    %s59 = sshrl.u32 %s58, 2
    %s60 = sor.u32 %s58, %s59
    %s61 = sand.u32 15, %s60
    %v62 = vld [vmem:[%s0] sm:%s61]
    %v63 = vunpack.c.l.bf16 %v62
    %v64 = vunpack.c.h.bf16 %v62
    %65 = vst [vmem:[#allocation1] sm:%s5] %v63
    %v66 = vld [vmem:[#allocation1] sm:$0xff]
    %vm67 = vcmask 523264
    %68 = vst.msk [vmem:[#allocation0] ss:$8 sm:$0xf] %vm67, %v66
    %69 = vst.msk [vmem:[#allocation0] ss:$8 sm:$0xf0] %vm67, %v66
    %s70 = scalar_lea.vmem [#allocation1], 8
    %v71 = vld [vmem:[%s70] sm:$0xff]
    %vm72 = vcmask 523264
    %s73 = scalar_lea.vmem [#allocation0], 2
    %74 = vst.msk [vmem:[%s73] ss:$8 sm:$0xf] %vm72, %v71
    %s75 = scalar_lea.vmem [#allocation0], 2
    %76 = vst.msk [vmem:[%s75] ss:$8 sm:$0xf0] %vm72, %v71
    %s77 = scalar_lea.vmem [#allocation1], 16
    %v78 = vld [vmem:[%s77] sm:$0xff]
    %vm79 = vcmask 523264
    %s80 = scalar_lea.vmem [#allocation0], 4
    %81 = vst.msk [vmem:[%s80] ss:$8 sm:$0xf] %vm79, %v78
    %s82 = scalar_lea.vmem [#allocation0], 4
    %83 = vst.msk [vmem:[%s82] ss:$8 sm:$0xf0] %vm79, %v78
    %s84 = scalar_lea.vmem [#allocation1], 24
    %v85 = vld [vmem:[%s84] sm:$0xff]
    %vm86 = vcmask 523264
    %s87 = scalar_lea.vmem [#allocation0], 6
    %88 = vst.msk [vmem:[%s87] ss:$8 sm:$0xf] %vm86, %v85
    %s89 = scalar_lea.vmem [#allocation0], 6
    %90 = vst.msk [vmem:[%s89] ss:$8 sm:$0xf0] %vm86, %v85
    %v91 = vld [vmem:[#allocation1] ss:$8 sm:$0xf]
    %s92 = scalar_lea.vmem [#allocation1], 4294967265
    %v93 = vld [vmem:[%s92] ss:$8 sm:$0xf0]
    %vm94 = vcmask 1047556
    %v95 = vsel %vm94, %v93, %v91
    %96 = vrot.lane.b32.xlu0 %v95, 64
    %v97 = vpop.permute.xlu0 %96
    %vm98 = vcmask 523264
    %s99 = scalar_lea.vmem [#allocation0], 1
    %100 = vst.msk [vmem:[%s99] ss:$2 sm:$0xff] %vm98, %v97
    %s101 = scalar_lea.vmem [#allocation1], 4
    %v102 = vld [vmem:[%s101] ss:$8 sm:$0xf]
    %s103 = scalar_lea.vmem [#allocation1], 4294967269
    %v104 = vld [vmem:[%s103] ss:$8 sm:$0xf0]
    %vm105 = vcmask 1047556
    %v106 = vsel %vm105, %v104, %v102
    %107 = vrot.lane.b32.xlu0 %v106, 64
    %v108 = vpop.permute.xlu0 %107
    %vm109 = vcmask 523264
    %s110 = scalar_lea.vmem [#allocation0], 33
    %111 = vst.msk [vmem:[%s110] ss:$2 sm:$0xff] %vm109, %v108
    %s112 = scalar_lea.vmem [#allocation1], 2
    %v113 = vld [vmem:[%s112] ss:$8 sm:$0xf]
    %s114 = scalar_lea.vmem [#allocation1], 4294967267
    %v115 = vld [vmem:[%s114] ss:$8 sm:$0xf0]
    %vm116 = vcmask 1047556
    %v117 = vsel %vm116, %v115, %v113
    %118 = vrot.lane.b32.xlu0 %v117, 64
    %v119 = vpop.permute.xlu0 %118
    %vm120 = vcmask 523264
    %s121 = scalar_lea.vmem [#allocation0], 17
    %122 = vst.msk [vmem:[%s121] ss:$2 sm:$0xff] %vm120, %v119
    %s123 = scalar_lea.vmem [#allocation1], 6
    %v124 = vld [vmem:[%s123] ss:$8 sm:$0xf]
    %s125 = scalar_lea.vmem [#allocation1], 4294967271
    %v126 = vld [vmem:[%s125] ss:$8 sm:$0xf0]
    %vm127 = vcmask 1047556
    %v128 = vsel %vm127, %v126, %v124
    %129 = vrot.lane.b32.xlu0 %v128, 64
    %v130 = vpop.permute.xlu0 %129
    %vm131 = vcmask 523264
    %s132 = scalar_lea.vmem [#allocation0], 49
    %133 = vst.msk [vmem:[%s132] ss:$2 sm:$0xff] %vm131, %v130
    %s135 = smul.u32 4, 2
    %s136 = sshll.u32 1, %s135
    %s137 = ssub.s32 %s136, 1
    %s138 = sshrl.u32 %s135, 1
    %v139 = vld [vmem:[#allocation0] sm:%s137]
    %v140 = vpack.c.bf16 0.0, %v139
    %s141 = sshll.u32 1, %s138
    %s142 = ssub.s32 %s141, 1
    %143 = vst [vmem:[%s1] sm:%s142] %v140
    %s144 = scalar_lea.vmem [#allocation0], 8
    %v145 = vld [vmem:[%s144] sm:%s137]
    %v146 = vpack.c.bf16 0.0, %v145
    %s147 = sshll.u32 1, %s138
    %s148 = ssub.s32 %s147, 1
    %s149 = scalar_lea.vmem %s1, 4
    %150 = vst [vmem:[%s149] sm:%s148] %v146
    %s151 = scalar_lea.vmem [#allocation0], 16
    %v152 = vld [vmem:[%s151] sm:%s137]
    %v153 = vpack.c.bf16 0.0, %v152
    %s154 = sshll.u32 1, %s138
    %s155 = ssub.s32 %s154, 1
    %s156 = smul.addr 4, 2
    %s157 = scalar_lea.vmem %s1, %s156
    %158 = vst [vmem:[%s157] sm:%s155] %v153
    %s159 = scalar_lea.vmem [#allocation0], 24
    %v160 = vld [vmem:[%s159] sm:%s137]
    %v161 = vpack.c.bf16 0.0, %v160
    %s162 = sshll.u32 1, %s138
    %s163 = ssub.s32 %s162, 1
    %s164 = smul.addr 4, 3
    %s165 = scalar_lea.vmem %s1, %s164
    %166 = vst [vmem:[%s165] sm:%s163] %v161
    %s167 = scalar_lea.vmem [#allocation0], 32
    %v168 = vld [vmem:[%s167] sm:%s137]
    %v169 = vpack.c.bf16 0.0, %v168
    %s170 = sshll.u32 1, %s138
    %s171 = ssub.s32 %s170, 1
    %s172 = smul.addr 4, 4
    %s173 = scalar_lea.vmem %s1, %s172
    %174 = vst [vmem:[%s173] sm:%s171] %v169
    %s175 = scalar_lea.vmem [#allocation0], 40
    %v176 = vld [vmem:[%s175] sm:%s137]
    %v177 = vpack.c.bf16 0.0, %v176
    %s178 = sshll.u32 1, %s138
    %s179 = ssub.s32 %s178, 1
    %s180 = smul.addr 4, 5
    %s181 = scalar_lea.vmem %s1, %s180
    %182 = vst [vmem:[%s181] sm:%s179] %v177
    %s183 = scalar_lea.vmem [#allocation0], 48
    %v184 = vld [vmem:[%s183] sm:%s137]
    %v185 = vpack.c.bf16 0.0, %v184
    %s186 = sshll.u32 1, %s138
    %s187 = ssub.s32 %s186, 1
    %s188 = smul.addr 4, 6
    %s189 = scalar_lea.vmem %s1, %s188
    %190 = vst [vmem:[%s189] sm:%s187] %v185
    %s191 = scalar_lea.vmem [#allocation0], 56
    %v192 = vld [vmem:[%s191] sm:%s137]
    %v193 = vpack.c.bf16 0.0, %v192
    %s194 = sshll.u32 1, %s138
    %s195 = ssub.s32 %s194, 1
    %s196 = smul.addr 4, 7
    %s197 = scalar_lea.vmem %s1, %s196
    %198 = vst [vmem:[%s197] sm:%s195] %v193

// kernel: simsiam_forward.11
$region0: #{simsiam_forward.11}
  #allocation0 [shape = 'u32[]', space=smem, size = 0x4, offset = 0x4, fixed_abs, tag = 'smem constant byte address 0x4 - core index']
  #allocation1 [shape = 'u32[144,128]{1,0:T(1,128)}', space=vmem, size = 0x12000, scoped, tag = 'internal scratch']
  %s0 = inlined_call_operand.vmem [shape: bf16[32,128], index: 0, kind: input, shape index: {}]
  %s1 = inlined_call_operand.vmem [shape: f32[16,128], index: 1, kind: input, shape index: {}]
  %s2 = inlined_call_operand.vmem [shape: f32[16,128], index: 2, kind: input, shape index: {}]
  %s3 = inlined_call_operand.vmem [shape: bf16[32,128], index: 3, kind: output, shape index: {}]
  %s4 = sld [smem:[#allocation0]]
  $region45: #{simsiam_forward.11} parent=0
    _
  %s6 = ssub.s32 1, %s4
  %s7 = scalar_select 0, %s6, %s4
  loop: start=0, step=1, limit=4
  $region2: #{simsiam_forward.11} parent=0 // loop_pre_header
    _
  $region3: #{simsiam_forward.11} parent=0 // loop_header
    %s9 = sphi 0, %s13
    %p10 = scmp.ge.s32.totalorder %s9, 4
    %s19 = sphi 0, %s21
    %s22 = sphi 0, %s19
    %s23 = sphi 0, %s22
    %s39 = sphi 0, %s23
    %s43 = sphi 0, %s43
    %s45 = sphi 0, %s43
    %s46 = sphi 0, %s45
    %s60 = sphi 0, %s46
    %s64 = sphi 0, %s64
    %s66 = sphi 0, %s64
    %s67 = sphi 0, %s66
    %s81 = sphi 0, %s67
    %s87 = sphi 0, %s89
    %s90 = sphi 0, %s87
    %s91 = sphi 0, %s90
    %s107 = sphi 0, %s91
  $region4: #{simsiam_forward.11} parent=0 // loop_header_branch
    %12 = sbr.rel (%p10) target = $region8
  $region5: #{simsiam_forward.11} parent=0 // loop_body
    %s14 = ssub.s32 %s9, 1
    %s15 = ssub.s32 %s9, 2
    %s16 = sadd.s32 %s9, 1
    %s17 = ssub.s32 %s9, %s16
    %p18 = scmp.eq.s32.totalorder %s17, 0
    %s20 = sadd.s32 %s19, 1
    %s21 = scalar_select %p18, %s19, %s20
    %p24 = pneg %p18
    %p25 = scmp.eq.s32.totalorder %s9, 1
    %p26 = por %p24, %p25
    %p27 = scmp.ne.s32.totalorder %s19, %s22
    %p28 = scmp.eq.s32.totalorder %s9, 0
    %p29 = por %p27, %p28
    %p30 = scmp.ne.s32.totalorder %s19, %s22
    %p31 = scmp.eq.s32.totalorder %s14, 1
    %p32 = por %p30, %p31
    %p33 = scmp.ne.s32.totalorder %s22, %s23
    %p34 = scmp.eq.s32.totalorder %s14, 0
    %p35 = por %p33, %p34
    %p36 = scmp.ne.s32.totalorder %s22, %s23
    %p37 = scmp.eq.s32.totalorder %s15, 1
    %p38 = por %p36, %p37
    %p40 = scmp.ne.s32.totalorder %s23, %s39
    %p41 = scmp.eq.s32.totalorder %s15, 0
    %p42 = por %p40, %p41
    %s44 = sadd.s32 %s43, 1
    %p47 = scmp.eq.s32.totalorder %s9, 1
    %p48 = scmp.ne.s32.totalorder %s43, %s45
    %p49 = scmp.eq.s32.totalorder %s9, 0
    %p50 = por %p48, %p49
    %p51 = scmp.ne.s32.totalorder %s43, %s45
    %p52 = scmp.eq.s32.totalorder %s14, 1
    %p53 = por %p51, %p52
    %p54 = scmp.ne.s32.totalorder %s45, %s46
    %p55 = scmp.eq.s32.totalorder %s14, 0
    %p56 = por %p54, %p55
    %p57 = scmp.ne.s32.totalorder %s45, %s46
    %p58 = scmp.eq.s32.totalorder %s15, 1
    %p59 = por %p57, %p58
    %p61 = scmp.ne.s32.totalorder %s46, %s60
    %p62 = scmp.eq.s32.totalorder %s15, 0
    %p63 = por %p61, %p62
    %s65 = sadd.s32 %s64, 1
    %p68 = scmp.eq.s32.totalorder %s9, 1
    %p69 = scmp.ne.s32.totalorder %s64, %s66
    %p70 = scmp.eq.s32.totalorder %s9, 0
    %p71 = por %p69, %p70
    %p72 = scmp.ne.s32.totalorder %s64, %s66
    %p73 = scmp.eq.s32.totalorder %s14, 1
    %p74 = por %p72, %p73
    %p75 = scmp.ne.s32.totalorder %s66, %s67
    %p76 = scmp.eq.s32.totalorder %s14, 0
    %p77 = por %p75, %p76
    %p78 = scmp.ne.s32.totalorder %s66, %s67
    %p79 = scmp.eq.s32.totalorder %s15, 1
    %p80 = por %p78, %p79
    %p82 = scmp.ne.s32.totalorder %s67, %s81
    %p83 = scmp.eq.s32.totalorder %s15, 0
    %p84 = por %p82, %p83
    %s85 = ssub.s32 %s9, %s16
    %p86 = scmp.eq.s32.totalorder %s85, 0
    %s88 = sadd.s32 %s87, 1
    %s89 = scalar_select %p86, %s87, %s88
    %p92 = pneg %p86
    %p93 = scmp.eq.s32.totalorder %s9, 1
    %p94 = por %p92, %p93
    %p95 = scmp.ne.s32.totalorder %s87, %s90
    %p96 = scmp.eq.s32.totalorder %s9, 0
    %p97 = por %p95, %p96
    %p98 = scmp.ne.s32.totalorder %s87, %s90
    %p99 = scmp.eq.s32.totalorder %s14, 1
    %p100 = por %p98, %p99
    %p101 = scmp.ne.s32.totalorder %s90, %s91
    %p102 = scmp.eq.s32.totalorder %s14, 0
    %p103 = por %p101, %p102
    %p104 = scmp.ne.s32.totalorder %s90, %s91
    %p105 = scmp.eq.s32.totalorder %s15, 1
    %p106 = por %p104, %p105
    %p108 = scmp.ne.s32.totalorder %s91, %s107
    %p109 = scmp.eq.s32.totalorder %s15, 0
    %p110 = por %p108, %p109
    %p111 = scmp.le.s32.totalorder 1, %s9
    %p112 = scmp.lt.s32.totalorder %s9, 3
    %p113 = pnand %p111, %p112
    %p114 = pneg %p113
    // Predicated region
    $region9: #{simsiam_forward.11} parent=5 // pred_check
      _
    $region10: #{simsiam_forward.11} parent=5 // pred_check_branch
      %116 = sbr.rel (%p113) target = $region12
    $region11: #{simsiam_forward.11} parent=5 // pred_region
      %s117 = ssub.s32 %s9, 1
      // Predicated region
      $region13: #{simsiam_forward.11} parent=11 // pred_check
        %p118 = pneg %p56
      $region14: #{simsiam_forward.11} parent=11 // pred_check_branch
        %120 = sbr.rel (%p118) target = $region16
      $region15: #{simsiam_forward.11} parent=11 // pred_region
        _
      $region16: #{simsiam_forward.11} parent=11 // pred_fallthru
        _
      // Predicated region
      $region17: #{simsiam_forward.11} parent=11 // pred_check
        %p121 = pneg %p77
      $region18: #{simsiam_forward.11} parent=11 // pred_check_branch
        %123 = sbr.rel (%p121) target = $region20
      $region19: #{simsiam_forward.11} parent=11 // pred_region
        _
      $region20: #{simsiam_forward.11} parent=11 // pred_fallthru
        _
    $region12: #{simsiam_forward.11} parent=5 // pred_fallthru
      _
    %p124 = scmp.lt.s32.totalorder %s9, 2
    // Predicated region
    $region21: #{simsiam_forward.11} parent=5 // pred_check
      %p125 = pneg %p124
    $region22: #{simsiam_forward.11} parent=5 // pred_check_branch
      %127 = sbr.rel (%p125) target = $region24
    $region23: #{simsiam_forward.11} parent=5 // pred_region
      // Predicated region
      $region25: #{simsiam_forward.11} parent=23 // pred_check
        %p128 = pneg %p29
      $region26: #{simsiam_forward.11} parent=23 // pred_check_branch
        %130 = sbr.rel (%p128) target = $region28
      $region27: #{simsiam_forward.11} parent=23 // pred_region
        %s131 = smul.u32 2, %s9
        %p132 = scmp.lt.s32.totalorder %s131, 3
        %s133 = scalar_select %p132, %s131, 3
        %s134 = smul.addr %s133, 4
        %s135 = scalar_lea.vmem %s0, %s134
        %s136 = smul.u32 2, %s9
      $region28: #{simsiam_forward.11} parent=23 // pred_fallthru
        _
    $region24: #{simsiam_forward.11} parent=5 // pred_fallthru
      _
    %p137 = scmp.le.s32.totalorder 1, %s9
    %p138 = scmp.lt.s32.totalorder %s9, 3
    %p139 = pnand %p137, %p138
    %p140 = pneg %p139
    // Predicated region
    $region29: #{simsiam_forward.11} parent=5 // pred_check
      _
    $region30: #{simsiam_forward.11} parent=5 // pred_check_branch
      %142 = sbr.rel (%p139) target = $region32
    $region31: #{simsiam_forward.11} parent=5 // pred_region
      %s143 = ssub.s32 %s9, 1
      %s144 = smul.u32 2, %s14
      %p145 = scmp.lt.s32.totalorder %s144, 3
      %s146 = scalar_select %p145, %s144, 3
      %s147 = smul.addr %s146, 4
      %s148 = scalar_lea.vmem %s0, %s147
      %p149 = pneg %p35
      %p150 = pneg %p32
      %p151 = pneg %p56
      %p152 = pneg %p53
      %p153 = pneg %p77
      %p154 = pneg %p74
      %p155 = pneg %p103
      %p156 = pneg %p100
      %s157 = smul.u32 2, %s14
      %p158 = scmp.lt.s32.totalorder %s157, 3
      %s159 = scalar_select %p158, %s157, 3
      %s160 = smul.addr %s159, 4
      %s161 = scalar_lea.vmem %s3, %s160
      %s162 = smul.u32 2, %s14
      %p163 = scmp.lt.s32.totalorder %s162, 3
      %s164 = scalar_select %p163, %s162, 3
      %s165 = smul.addr %s164, 4
      %s166 = scalar_lea.vmem %s0, %s165
      %s167 = smul.u32 2, %s14
      %s168 = smul.u32 2, %s14
      %p169 = scmp.lt.s32.totalorder %s168, 3
      %s170 = scalar_select %p169, %s168, 3
      %s171 = smul.addr %s170, 4
      %s172 = scalar_lea.vmem %s3, %s171
      %s173 = smul.u32 2, %s14
      %v174 = vld [vmem:[%s166] sm:$0xf]
      %v175 = vld [vmem:[%s166 + $0x4] sm:$0xf]
      %v176 = vunpack.c.l.bf16 %v174
      %v177 = vunpack.c.l.bf16 %v175
      %178 = vadd.xlane.f32.xlu0 %v176
      %v179 = vpop.xlane.xlu0 %178
      %180 = vadd.xlane.f32.xlu0 %v177
      %v181 = vpop.xlane.xlu0 %180
      %v182 = vrcp.pop 128.0
      %v183 = vmul.f32 %v179, %v182
      %v184 = vmul.f32 %v181, %v182
      %v185 = vmul.f32 %v176, %v176
      %v186 = vmul.f32 %v177, %v177
      %187 = vadd.xlane.f32.xlu0 %v185
      %v188 = vpop.xlane.xlu0 %187
      %189 = vadd.xlane.f32.xlu0 %v186
      %v190 = vpop.xlane.xlu0 %189
      %v191 = vmul.f32 %v188, %v182
      %v192 = vmul.f32 %v190, %v182
      %v193 = vmul.f32 %v183, %v183
      %v194 = vmul.f32 %v184, %v184
      %v195 = vsub.f32 %v191, %v193
      %v196 = vsub.f32 %v192, %v194
      %v197 = vmax.f32 %v195, 0.0
      %v198 = vmax.f32 %v196, 0.0
      %v199 = vsub.f32 %v176, %v183
      %v200 = vsub.f32 %v177, %v184
      %v201 = vadd.f32 %v197, 1e-05
      %v202 = vadd.f32 %v198, 1e-05
      %v203 = vrsqrt.pop %v201
      %v204 = vrsqrt.pop %v202
      %v205 = vmul.f32 %v199, %v203
      %v206 = vmul.f32 %v200, %v204
      %v207 = vld [vmem:[%s1] sm:$0xff]
      %v208 = vld [vmem:[%s1 + $0x8] sm:$0xff]
      %v209 = vmul.f32 %v205, %v207
      %v210 = vmul.f32 %v206, %v208
      %v211 = vld [vmem:[%s2] sm:$0xff]
      %v212 = vld [vmem:[%s2 + $0x8] sm:$0xff]
      %v213 = vadd.f32 %v209, %v211
      %v214 = vadd.f32 %v210, %v212
      %vm215 = vcmp.ge.f32.partialorder %v213, 0.0
      %vm216 = vcmp.ge.f32.partialorder %v214, 0.0
      %v217 = vmul.f32 %v213, 0.01
      %v218 = vmul.f32 %v214, 0.01
      %v219 = vsel %vm215, %v213, %v217
      %v220 = vsel %vm216, %v214, %v218
      %v221 = vpack.c.bf16 %v220, %v219
      %v223 = vunpack.c.l.b16 %v221
      %v224 = vunpack.c.h.b16 %v221
      %v225 = vpack.c.b16 %v223, %v223
      %v226 = vpack.c.b16 %v224, %v224
      %229 = vst [vmem:[%s172] sm:$0xf] %v225
      %230 = vst [vmem:[%s172 + $0x4] sm:$0xf] %v226
      %s231 = smul.u32 2, %s14
      %p232 = scmp.lt.s32.totalorder %s231, 3
      %s233 = scalar_select %p232, %s231, 3
      %s234 = smul.addr %s233, 4
      %s235 = scalar_lea.vmem %s3, %s234
      // Predicated region
      $region33: #{simsiam_forward.11} parent=31 // pred_check
        %p236 = pneg %p100
      $region34: #{simsiam_forward.11} parent=31 // pred_check_branch
        %238 = sbr.rel (%p236) target = $region36
      $region35: #{simsiam_forward.11} parent=31 // pred_region
        %s239 = smul.u32 2, %s14
      $region36: #{simsiam_forward.11} parent=31 // pred_fallthru
        _
    $region32: #{simsiam_forward.11} parent=5 // pred_fallthru
      _
    %p240 = scmp.le.s32.totalorder 2, %s9
    // Predicated region
    $region37: #{simsiam_forward.11} parent=5 // pred_check
      %p241 = pneg %p240
    $region38: #{simsiam_forward.11} parent=5 // pred_check_branch
      %243 = sbr.rel (%p241) target = $region40
    $region39: #{simsiam_forward.11} parent=5 // pred_region
      %s244 = ssub.s32 %s9, 2
      // Predicated region
      $region41: #{simsiam_forward.11} parent=39 // pred_check
        %p245 = pneg %p106
      $region42: #{simsiam_forward.11} parent=39 // pred_check_branch
        %247 = sbr.rel (%p245) target = $region44
      $region43: #{simsiam_forward.11} parent=39 // pred_region
        %s248 = smul.u32 2, %s15
        %p249 = scmp.lt.s32.totalorder %s248, 3
        %s250 = scalar_select %p249, %s248, 3
        %s251 = smul.addr %s250, 4
        %s252 = scalar_lea.vmem %s3, %s251
      $region44: #{simsiam_forward.11} parent=39 // pred_fallthru
        _
    $region40: #{simsiam_forward.11} parent=5 // pred_fallthru
      _
  $region6: #{simsiam_forward.11} parent=0 // loop_footer
    %s13 = sadd.s32 1, %s9
  $region7: #{simsiam_forward.11} parent=0 // loop_footer_branch
    %8 = sbr.rel target = $region3
  $region8: #{simsiam_forward.11} parent=0 // loop_exit
    _

// kernel: simsiam_forward.10
$region0: #{simsiam_forward.10}
  #allocation0 [shape = 'u32[]', space=smem, size = 0x4, offset = 0x4, fixed_abs, tag = 'smem constant byte address 0x4 - core index']
  #allocation1 [shape = 'u32[144,128]{1,0:T(1,128)}', space=vmem, size = 0x12000, scoped, tag = 'internal scratch']
  %s0 = inlined_call_operand.vmem [shape: bf16[1,8,64], index: 0, kind: input, shape index: {}]
  %s1 = inlined_call_operand.vmem [shape: bf16[1,64,512], index: 1, kind: input, shape index: {}]
  %s2 = inlined_call_operand.vmem [shape: f32[8,1], index: 2, kind: input, shape index: {}]
  %s3 = inlined_call_operand.vmem [shape: bf16[1,8,512], index: 3, kind: output, shape index: {}]
  %s4 = sld [smem:[#allocation0]]
  $region22: #{simsiam_forward.10} parent=0
    _
  %s6 = ssub.s32 1, %s4
  %s7 = scalar_select 0, %s6, %s4
  // Predicated region
  $region2: #{simsiam_forward.10} parent=0 // pred_check
    _
  $region3: #{simsiam_forward.10} parent=0 // pred_check_branch
    %9 = sbr.rel (0) target = $region5
  $region4: #{simsiam_forward.10} parent=0 // pred_region
    _
  $region5: #{simsiam_forward.10} parent=0 // pred_fallthru
    _
  // Predicated region
  $region6: #{simsiam_forward.10} parent=0 // pred_check
    _
  $region7: #{simsiam_forward.10} parent=0 // pred_check_branch
    %11 = sbr.rel (0) target = $region9
  $region8: #{simsiam_forward.10} parent=0 // pred_region
    _
  $region9: #{simsiam_forward.10} parent=0 // pred_fallthru
    _
  // Predicated region
  $region10: #{simsiam_forward.10} parent=0 // pred_check
    _
  $region11: #{simsiam_forward.10} parent=0 // pred_check_branch
    %13 = sbr.rel (0) target = $region13
  $region12: #{simsiam_forward.10} parent=0 // pred_region
    _
  $region13: #{simsiam_forward.10} parent=0 // pred_fallthru
    _
  %v15 = vld [vmem:[%s0] sm:$0xf]
  %v16 = vld [vmem:[%s1] sm:$0xff]
  %v17 = vld [vmem:[%s1 + $0x8] sm:$0xff]
  %v18 = vld [vmem:[%s1 + $0x10] sm:$0xff]
  %v19 = vld [vmem:[%s1 + $0x18] sm:$0xff]
  %v20 = vld [vmem:[%s1 + $0x20] sm:$0xff]
  %v21 = vld [vmem:[%s1 + $0x28] sm:$0xff]
  %v22 = vld [vmem:[%s1 + $0x30] sm:$0xff]
  %v23 = vld [vmem:[%s1 + $0x38] sm:$0xff]
  %v24 = vld [vmem:[%s1 + $0x40] sm:$0xff]
  %v25 = vld [vmem:[%s1 + $0x48] sm:$0xff]
  %v26 = vld [vmem:[%s1 + $0x50] sm:$0xff]
  %v27 = vld [vmem:[%s1 + $0x58] sm:$0xff]
  %v28 = vld [vmem:[%s1 + $0x60] sm:$0xff]
  %v29 = vld [vmem:[%s1 + $0x68] sm:$0xff]
  %v30 = vld [vmem:[%s1 + $0x70] sm:$0xff]
  %v31 = vld [vmem:[%s1 + $0x78] sm:$0xff]
  %v32 = vld [vmem:[%s2] sm:$0xff]
  %34 = vset.pattern.permute.xlu0 0
  %35 = vperm.xlu0 %34, %v32
  %v36 = vpop.permute.xlu0 %35
  %v54 = vunpack.c.l.b16 %v16
  %v55 = vunpack.c.h.b16 %v16
  %v56 = vunpack.c.l.b16 %v17
  %v57 = vunpack.c.h.b16 %v17
  %v58 = vunpack.c.l.b16 %v18
  %v59 = vunpack.c.h.b16 %v18
  %v60 = vunpack.c.l.b16 %v19
  %v61 = vunpack.c.h.b16 %v19
  %v62 = vunpack.c.l.b16 %v20
  %v63 = vunpack.c.h.b16 %v20
  %v64 = vunpack.c.l.b16 %v21
  %v65 = vunpack.c.h.b16 %v21
  %v66 = vunpack.c.l.b16 %v22
  %v67 = vunpack.c.h.b16 %v22
  %v68 = vunpack.c.l.b16 %v23
  %v69 = vunpack.c.h.b16 %v23
  %v70 = vunpack.c.l.b16 %v24
  %v71 = vunpack.c.h.b16 %v24
  %v72 = vunpack.c.l.b16 %v25
  %v73 = vunpack.c.h.b16 %v25
  %v74 = vunpack.c.l.b16 %v26
  %v75 = vunpack.c.h.b16 %v26
  %v76 = vunpack.c.l.b16 %v27
  %v77 = vunpack.c.h.b16 %v27
  %v78 = vunpack.c.l.b16 %v28
  %v79 = vunpack.c.h.b16 %v28
  %v80 = vunpack.c.l.b16 %v29
  %v81 = vunpack.c.h.b16 %v29
  %v82 = vunpack.c.l.b16 %v30
  %v83 = vunpack.c.h.b16 %v30
  %v84 = vunpack.c.l.b16 %v31
  %v85 = vunpack.c.h.b16 %v31
  %v86 = vpack.c.b16 %v58, %v54
  %v87 = vpack.c.b16 %v59, %v55
  %v88 = vpack.c.b16 %v60, %v56
  %v89 = vpack.c.b16 %v61, %v57
  %v90 = vpack.c.b16 %v66, %v62
  %v91 = vpack.c.b16 %v67, %v63
  %v92 = vpack.c.b16 %v68, %v64
  %v93 = vpack.c.b16 %v69, %v65
  %v94 = vpack.c.b16 %v74, %v70
  %v95 = vpack.c.b16 %v75, %v71
  %v96 = vpack.c.b16 %v76, %v72
  %v97 = vpack.c.b16 %v77, %v73
  %v98 = vpack.c.b16 %v82, %v78
  %v99 = vpack.c.b16 %v83, %v79
  %v100 = vpack.c.b16 %v84, %v80
  %v101 = vpack.c.b16 %v85, %v81
  %vm118 = vcmask 523264
  %v120 = vsel %vm118, %v15, 0
  %122 = vmatprep.subr.bf16.mxu0 0
  %123 = vmatpush1.bf16.msra.mxu0 0
  %124 = vmatprep.subr.bf16.mxu0 0
  %125 = vmatpush1.bf16.msra.mxu0 0
  %126 = vmatprep.subr.bf16.mxu0 0
  %127 = vmatpush1.bf16.msra.mxu0 0
  %128 = vmatprep.subr.bf16.mxu0 0
  %129 = vmatpush1.bf16.msra.mxu0 0
  %130 = vmatprep.subr.bf16.mxu0 %v99
  %131 = vmatpush1.bf16.msra.mxu0 %v98
  %132 = vmatprep.subr.bf16.mxu0 %v95
  %133 = vmatpush1.bf16.msra.mxu0 %v94
  %134 = vmatprep.subr.bf16.mxu0 %v91
  %135 = vmatpush1.bf16.msra.mxu0 %v90
  %136 = vmatprep.subr.bf16.mxu0 %v87
  %137 = vmatpush1.bf16.msra.mxu0 %v86
  %138 = vmatprep.subr.bf16.mxu0 0
  %139 = vmatpush2.bf16.msra.mxu0 0
  %140 = vmatprep.subr.bf16.mxu0 0
  %141 = vmatpush2.bf16.msra.mxu0 0
  %142 = vmatprep.subr.bf16.mxu0 0
  %143 = vmatpush2.bf16.msra.mxu0 0
  %144 = vmatprep.subr.bf16.mxu0 0
  %145 = vmatpush2.bf16.msra.mxu0 0
  %146 = vmatprep.subr.bf16.mxu0 0
  %147 = vmatpush2.bf16.msra.mxu0 0
  %148 = vmatprep.subr.bf16.mxu0 0
  %149 = vmatpush2.bf16.msra.mxu0 0
  %150 = vmatprep.subr.bf16.mxu0 0
  %151 = vmatpush2.bf16.msra.mxu0 0
  %152 = vmatprep.subr.bf16.mxu0 0
  %153 = vmatpush2.bf16.msra.mxu0 0
  %154 = vmatprep.mubr.bf16.mxu0 0
  %155 = vmatmul.mubr.bf16.gmra.mxu0 %v120
  %v156 = vpop.f32.mrf.mxu0
  %v157 = vadd.f32 %v36, %v156
  %v158 = vpop.f32.mrf.mxu0
  %v159 = vadd.f32 %v36, %v158
  %v160 = vpop.f32.mrf.mxu0
  %v161 = vpop.f32.mrf.mxu0
  %162 = vdwg.mxu0
  %163 = vmatprep.subr.bf16.mxu0 0
  %164 = vmatpush1.bf16.msra.mxu0 0
  %165 = vmatprep.subr.bf16.mxu0 0
  %166 = vmatpush1.bf16.msra.mxu0 0
  %167 = vmatprep.subr.bf16.mxu0 0
  %168 = vmatpush1.bf16.msra.mxu0 0
  %169 = vmatprep.subr.bf16.mxu0 0
  %170 = vmatpush1.bf16.msra.mxu0 0
  %171 = vmatprep.subr.bf16.mxu0 %v101
  %172 = vmatpush1.bf16.msra.mxu0 %v100
  %173 = vmatprep.subr.bf16.mxu0 %v97
  %174 = vmatpush1.bf16.msra.mxu0 %v96
  %175 = vmatprep.subr.bf16.mxu0 %v93
  %176 = vmatpush1.bf16.msra.mxu0 %v92
  %177 = vmatprep.subr.bf16.mxu0 %v89
  %178 = vmatpush1.bf16.msra.mxu0 %v88
  %179 = vmatprep.subr.bf16.mxu0 0
  %180 = vmatpush2.bf16.msra.mxu0 0
  %181 = vmatprep.subr.bf16.mxu0 0
  %182 = vmatpush2.bf16.msra.mxu0 0
  %183 = vmatprep.subr.bf16.mxu0 0
  %184 = vmatpush2.bf16.msra.mxu0 0
  %185 = vmatprep.subr.bf16.mxu0 0
  %186 = vmatpush2.bf16.msra.mxu0 0
  %187 = vmatprep.subr.bf16.mxu0 0
  %188 = vmatpush2.bf16.msra.mxu0 0
  %189 = vmatprep.subr.bf16.mxu0 0
  %190 = vmatpush2.bf16.msra.mxu0 0
  %191 = vmatprep.subr.bf16.mxu0 0
  %192 = vmatpush2.bf16.msra.mxu0 0
  %193 = vmatprep.subr.bf16.mxu0 0
  %194 = vmatpush2.bf16.msra.mxu0 0
  %195 = vmatprep.mubr.bf16.mxu0 0
  %196 = vmatmul.mubr.bf16.gmra.mxu0 %v120
  %v197 = vpop.f32.mrf.mxu0
  %v198 = vadd.f32 %v36, %v197
  %v199 = vpop.f32.mrf.mxu0
  %v200 = vadd.f32 %v36, %v199
  %v201 = vpop.f32.mrf.mxu0
  %v202 = vpop.f32.mrf.mxu0
  %203 = vdwg.mxu0
  %v204 = vpack.c.bf16 %v157, %v157
  %v205 = vpack.c.bf16 %v159, %v159
  %v206 = vpack.c.bf16 %v198, %v198
  %v207 = vpack.c.bf16 %v200, %v200
  %v212 = vunpack.c.l.b16 %v204
  %v213 = vunpack.c.l.b16 %v205
  %v214 = vunpack.c.l.b16 %v206
  %v215 = vunpack.c.l.b16 %v207
  %v216 = vpack.c.b16 %v213, %v212
  %v217 = vpack.c.b16 %v215, %v214
  %220 = vst [vmem:[%s3] sm:$0xff] %v216
  %221 = vst [vmem:[%s3 + $0x8] sm:$0xff] %v217
  // Predicated region
  $region14: #{simsiam_forward.10} parent=0 // pred_check
    _
  $region15: #{simsiam_forward.10} parent=0 // pred_check_branch
    %223 = sbr.rel (0) target = $region17
  $region16: #{simsiam_forward.10} parent=0 // pred_region
    _
  $region17: #{simsiam_forward.10} parent=0 // pred_fallthru
    _
  // Predicated region
  $region18: #{simsiam_forward.10} parent=0 // pred_check
    _
  $region19: #{simsiam_forward.10} parent=0 // pred_check_branch
    %225 = sbr.rel (0) target = $region21
  $region20: #{simsiam_forward.10} parent=0 // pred_region
    _
  $region21: #{simsiam_forward.10} parent=0 // pred_fallthru
    _

// kernel: simsiam_forward.12
$region0: #{simsiam_forward.12}
  #allocation0 [shape = 'u32[]', space=smem, size = 0x4, offset = 0x4, fixed_abs, tag = 'smem constant byte address 0x4 - core index']
  #allocation1 [shape = 'u32[144,128]{1,0:T(1,128)}', space=vmem, size = 0x12000, scoped, tag = 'internal scratch']
  %s0 = inlined_call_operand.vmem [shape: bf16[1,16,224], index: 0, kind: input, shape index: {}]
  %s1 = inlined_call_operand.vmem [shape: bf16[1,224,128], index: 1, kind: input, shape index: {}]
  %s2 = inlined_call_operand.vmem [shape: f32[16,1], index: 2, kind: input, shape index: {}]
  %s3 = inlined_call_operand.vmem [shape: bf16[1,16,128], index: 3, kind: output, shape index: {}]
  %s4 = sld [smem:[#allocation0]]
  $region22: #{simsiam_forward.12} parent=0
    _
  %s6 = ssub.s32 1, %s4
  %s7 = scalar_select 0, %s6, %s4
  // Predicated region
  $region2: #{simsiam_forward.12} parent=0 // pred_check
    _
  $region3: #{simsiam_forward.12} parent=0 // pred_check_branch
    %9 = sbr.rel (0) target = $region5
  $region4: #{simsiam_forward.12} parent=0 // pred_region
    _
  $region5: #{simsiam_forward.12} parent=0 // pred_fallthru
    _
  // Predicated region
  $region6: #{simsiam_forward.12} parent=0 // pred_check
    _
  $region7: #{simsiam_forward.12} parent=0 // pred_check_branch
    %11 = sbr.rel (0) target = $region9
  $region8: #{simsiam_forward.12} parent=0 // pred_region
    _
  $region9: #{simsiam_forward.12} parent=0 // pred_fallthru
    _
  // Predicated region
  $region10: #{simsiam_forward.12} parent=0 // pred_check
    _
  $region11: #{simsiam_forward.12} parent=0 // pred_check_branch
    %13 = sbr.rel (0) target = $region13
  $region12: #{simsiam_forward.12} parent=0 // pred_region
    _
  $region13: #{simsiam_forward.12} parent=0 // pred_fallthru
    _
  %v15 = vld [vmem:[%s0] sm:$0xff]
  %v16 = vld [vmem:[%s0 + $0x8] sm:$0xff]
  %v17 = vld [vmem:[%s1] sm:$0xf]
  %v18 = vld [vmem:[%s1 + $0x4] sm:$0xf]
  %v19 = vld [vmem:[%s1 + $0x8] sm:$0xf]
  %v20 = vld [vmem:[%s1 + $0xc] sm:$0xf]
  %v21 = vld [vmem:[%s1 + $0x10] sm:$0xf]
  %v22 = vld [vmem:[%s1 + $0x14] sm:$0xf]
  %v23 = vld [vmem:[%s1 + $0x18] sm:$0xf]
  %v24 = vld [vmem:[%s1 + $0x1c] sm:$0xf]
  %v25 = vld [vmem:[%s1 + $0x20] sm:$0xf]
  %v26 = vld [vmem:[%s1 + $0x24] sm:$0xf]
  %v27 = vld [vmem:[%s1 + $0x28] sm:$0xf]
  %v28 = vld [vmem:[%s1 + $0x2c] sm:$0xf]
  %v29 = vld [vmem:[%s1 + $0x30] sm:$0xf]
  %v30 = vld [vmem:[%s1 + $0x34] sm:$0xf]
  %v31 = vld [vmem:[%s1 + $0x38] sm:$0xf]
  %v32 = vld [vmem:[%s1 + $0x3c] sm:$0xf]
  %v33 = vld [vmem:[%s1 + $0x40] sm:$0xf]
  %v34 = vld [vmem:[%s1 + $0x44] sm:$0xf]
  %v35 = vld [vmem:[%s1 + $0x48] sm:$0xf]
  %v36 = vld [vmem:[%s1 + $0x4c] sm:$0xf]
  %v37 = vld [vmem:[%s1 + $0x50] sm:$0xf]
  %v38 = vld [vmem:[%s1 + $0x54] sm:$0xf]
  %v39 = vld [vmem:[%s1 + $0x58] sm:$0xf]
  %v40 = vld [vmem:[%s1 + $0x5c] sm:$0xf]
  %v41 = vld [vmem:[%s1 + $0x60] sm:$0xf]
  %v42 = vld [vmem:[%s1 + $0x64] sm:$0xf]
  %v43 = vld [vmem:[%s1 + $0x68] sm:$0xf]
  %v44 = vld [vmem:[%s1 + $0x6c] sm:$0xf]
  %v45 = vld [vmem:[%s2] sm:$0xff]
  %v46 = vld [vmem:[%s2 + $0x8] sm:$0xff]
  %48 = vset.pattern.permute.xlu0 0
  %49 = vperm.xlu0 %48, %v45
  %v50 = vpop.permute.xlu0 %49
  %53 = vset.pattern.permute.xlu0 0
  %54 = vperm.xlu0 %53, %v46
  %v55 = vpop.permute.xlu0 %54
  %v59 = vunpack.c.l.b16 %v15
  %v60 = vunpack.c.h.b16 %v15
  %v61 = vunpack.c.l.b16 %v16
  %v62 = vunpack.c.h.b16 %v16
  %v63 = vpack.c.b16 %v61, %v59
  %v64 = vpack.c.b16 %v62, %v60
  %v94 = vunpack.c.l.b16 %v17
  %v95 = vunpack.c.l.b16 %v18
  %v96 = vunpack.c.l.b16 %v19
  %v97 = vunpack.c.l.b16 %v20
  %v98 = vunpack.c.l.b16 %v21
  %v99 = vunpack.c.l.b16 %v22
  %v100 = vunpack.c.l.b16 %v23
  %v101 = vunpack.c.l.b16 %v24
  %v102 = vunpack.c.l.b16 %v25
  %v103 = vunpack.c.l.b16 %v26
  %v104 = vunpack.c.l.b16 %v27
  %v105 = vunpack.c.l.b16 %v28
  %v106 = vunpack.c.l.b16 %v29
  %v107 = vunpack.c.l.b16 %v30
  %v108 = vunpack.c.l.b16 %v31
  %v109 = vunpack.c.l.b16 %v32
  %v110 = vunpack.c.l.b16 %v33
  %v111 = vunpack.c.l.b16 %v34
  %v112 = vunpack.c.l.b16 %v35
  %v113 = vunpack.c.l.b16 %v36
  %v114 = vunpack.c.l.b16 %v37
  %v115 = vunpack.c.l.b16 %v38
  %v116 = vunpack.c.l.b16 %v39
  %v117 = vunpack.c.l.b16 %v40
  %v118 = vunpack.c.l.b16 %v41
  %v119 = vunpack.c.l.b16 %v42
  %v120 = vunpack.c.l.b16 %v43
  %v121 = vunpack.c.l.b16 %v44
  %v122 = vpack.c.b16 %v95, %v94
  %v123 = vpack.c.b16 %v97, %v96
  %v124 = vpack.c.b16 %v99, %v98
  %v125 = vpack.c.b16 %v101, %v100
  %v126 = vpack.c.b16 %v103, %v102
  %v127 = vpack.c.b16 %v105, %v104
  %v128 = vpack.c.b16 %v107, %v106
  %v129 = vpack.c.b16 %v109, %v108
  %v130 = vpack.c.b16 %v111, %v110
  %v131 = vpack.c.b16 %v113, %v112
  %v132 = vpack.c.b16 %v115, %v114
  %v133 = vpack.c.b16 %v117, %v116
  %v134 = vpack.c.b16 %v119, %v118
  %v135 = vpack.c.b16 %v121, %v120
  %vm150 = vcmask 785408
  %v152 = vsel %vm150, %v64, 0
  %154 = vmatprep.subr.bf16.mxu0 0
  %155 = vmatpush1.bf16.msra.mxu0 %v129
  %156 = vmatprep.subr.bf16.mxu0 0
  %157 = vmatpush1.bf16.msra.mxu0 %v128
  %158 = vmatprep.subr.bf16.mxu0 0
  %159 = vmatpush1.bf16.msra.mxu0 %v127
  %160 = vmatprep.subr.bf16.mxu0 0
  %161 = vmatpush1.bf16.msra.mxu0 %v126
  %162 = vmatprep.subr.bf16.mxu0 0
  %163 = vmatpush1.bf16.msra.mxu0 %v125
  %164 = vmatprep.subr.bf16.mxu0 0
  %165 = vmatpush1.bf16.msra.mxu0 %v124
  %166 = vmatprep.subr.bf16.mxu0 0
  %167 = vmatpush1.bf16.msra.mxu0 %v123
  %168 = vmatprep.subr.bf16.mxu0 0
  %169 = vmatpush1.bf16.msra.mxu0 %v122
  %170 = vmatprep.subr.bf16.mxu0 0
  %171 = vmatpush2.bf16.msra.mxu0 0
  %172 = vmatprep.subr.bf16.mxu0 0
  %173 = vmatpush2.bf16.msra.mxu0 0
  %174 = vmatprep.subr.bf16.mxu0 0
  %175 = vmatpush2.bf16.msra.mxu0 %v135
  %176 = vmatprep.subr.bf16.mxu0 0
  %177 = vmatpush2.bf16.msra.mxu0 %v134
  %178 = vmatprep.subr.bf16.mxu0 0
  %179 = vmatpush2.bf16.msra.mxu0 %v133
  %180 = vmatprep.subr.bf16.mxu0 0
  %181 = vmatpush2.bf16.msra.mxu0 %v132
  %182 = vmatprep.subr.bf16.mxu0 0
  %183 = vmatpush2.bf16.msra.mxu0 %v131
  %184 = vmatprep.subr.bf16.mxu0 0
  %185 = vmatpush2.bf16.msra.mxu0 %v130
  %186 = vmatprep.mubr.bf16.mxu0 %v152
  %187 = vmatmul.mubr.bf16.gmra.mxu0 %v63
  %v188 = vpop.f32.mrf.mxu0
  %v189 = vadd.f32 %v50, %v188
  %v190 = vpop.f32.mrf.mxu0
  %v191 = vpop.f32.mrf.mxu0
  %v192 = vadd.f32 %v55, %v191
  %v193 = vpop.f32.mrf.mxu0
  %194 = vdwg.mxu0
  %v195 = vpack.c.bf16 %v192, %v189
  %v197 = vunpack.c.l.b16 %v195
  %v198 = vunpack.c.h.b16 %v195
  %v199 = vpack.c.b16 %v197, %v197
  %v200 = vpack.c.b16 %v198, %v198
  %203 = vst [vmem:[%s3] sm:$0xf] %v199
  %204 = vst [vmem:[%s3 + $0x4] sm:$0xf] %v200
  // Predicated region
  $region14: #{simsiam_forward.12} parent=0 // pred_check
    _
  $region15: #{simsiam_forward.12} parent=0 // pred_check_branch
    %206 = sbr.rel (0) target = $region17
  $region16: #{simsiam_forward.12} parent=0 // pred_region
    _
  $region17: #{simsiam_forward.12} parent=0 // pred_fallthru
    _
  // Predicated region
  $region18: #{simsiam_forward.12} parent=0 // pred_check
    _
  $region19: #{simsiam_forward.12} parent=0 // pred_check_branch
    %208 = sbr.rel (0) target = $region21
  $region20: #{simsiam_forward.12} parent=0 // pred_region
    _
  $region21: #{simsiam_forward.12} parent=0 // pred_fallthru
    _

// kernel: simsiam_forward.13
$region0: #{simsiam_forward.13}
  #allocation0 [shape = 'u32[]', space=smem, size = 0x4, offset = 0x4, fixed_abs, tag = 'smem constant byte address 0x4 - core index']
  #allocation1 [shape = 'u32[144,128]{1,0:T(1,128)}', space=vmem, size = 0x12000, scoped, tag = 'internal scratch']
  %s0 = inlined_call_operand.vmem [shape: bf16[64,128], index: 0, kind: input, shape index: {}]
  %s1 = inlined_call_operand.vmem [shape: f32[16,128], index: 1, kind: input, shape index: {}]
  %s2 = inlined_call_operand.vmem [shape: f32[16,128], index: 2, kind: input, shape index: {}]
  %s3 = inlined_call_operand.vmem [shape: bf16[64,128], index: 3, kind: output, shape index: {}]
  %s4 = sld [smem:[#allocation0]]
  $region45: #{simsiam_forward.13} parent=0
    _
  %s6 = ssub.s32 1, %s4
  %s7 = scalar_select 0, %s6, %s4
  loop: start=0, step=1, limit=6
  $region2: #{simsiam_forward.13} parent=0 // loop_pre_header
    _
  $region3: #{simsiam_forward.13} parent=0 // loop_header
    %s9 = sphi 0, %s13
    %p10 = scmp.ge.s32.totalorder %s9, 6
    %s19 = sphi 0, %s21
    %s22 = sphi 0, %s19
    %s23 = sphi 0, %s22
    %s39 = sphi 0, %s23
    %s43 = sphi 0, %s43
    %s45 = sphi 0, %s43
    %s46 = sphi 0, %s45
    %s60 = sphi 0, %s46
    %s64 = sphi 0, %s64
    %s66 = sphi 0, %s64
    %s67 = sphi 0, %s66
    %s81 = sphi 0, %s67
    %s87 = sphi 0, %s89
    %s90 = sphi 0, %s87
    %s91 = sphi 0, %s90
    %s107 = sphi 0, %s91
  $region4: #{simsiam_forward.13} parent=0 // loop_header_branch
    %12 = sbr.rel (%p10) target = $region8
  $region5: #{simsiam_forward.13} parent=0 // loop_body
    %s14 = ssub.s32 %s9, 1
    %s15 = ssub.s32 %s9, 2
    %s16 = sadd.s32 %s9, 1
    %s17 = ssub.s32 %s9, %s16
    %p18 = scmp.eq.s32.totalorder %s17, 0
    %s20 = sadd.s32 %s19, 1
    %s21 = scalar_select %p18, %s19, %s20
    %p24 = pneg %p18
    %p25 = scmp.eq.s32.totalorder %s9, 3
    %p26 = por %p24, %p25
    %p27 = scmp.ne.s32.totalorder %s19, %s22
    %p28 = scmp.eq.s32.totalorder %s9, 0
    %p29 = por %p27, %p28
    %p30 = scmp.ne.s32.totalorder %s19, %s22
    %p31 = scmp.eq.s32.totalorder %s14, 3
    %p32 = por %p30, %p31
    %p33 = scmp.ne.s32.totalorder %s22, %s23
    %p34 = scmp.eq.s32.totalorder %s14, 0
    %p35 = por %p33, %p34
    %p36 = scmp.ne.s32.totalorder %s22, %s23
    %p37 = scmp.eq.s32.totalorder %s15, 3
    %p38 = por %p36, %p37
    %p40 = scmp.ne.s32.totalorder %s23, %s39
    %p41 = scmp.eq.s32.totalorder %s15, 0
    %p42 = por %p40, %p41
    %s44 = sadd.s32 %s43, 1
    %p47 = scmp.eq.s32.totalorder %s9, 3
    %p48 = scmp.ne.s32.totalorder %s43, %s45
    %p49 = scmp.eq.s32.totalorder %s9, 0
    %p50 = por %p48, %p49
    %p51 = scmp.ne.s32.totalorder %s43, %s45
    %p52 = scmp.eq.s32.totalorder %s14, 3
    %p53 = por %p51, %p52
    %p54 = scmp.ne.s32.totalorder %s45, %s46
    %p55 = scmp.eq.s32.totalorder %s14, 0
    %p56 = por %p54, %p55
    %p57 = scmp.ne.s32.totalorder %s45, %s46
    %p58 = scmp.eq.s32.totalorder %s15, 3
    %p59 = por %p57, %p58
    %p61 = scmp.ne.s32.totalorder %s46, %s60
    %p62 = scmp.eq.s32.totalorder %s15, 0
    %p63 = por %p61, %p62
    %s65 = sadd.s32 %s64, 1
    %p68 = scmp.eq.s32.totalorder %s9, 3
    %p69 = scmp.ne.s32.totalorder %s64, %s66
    %p70 = scmp.eq.s32.totalorder %s9, 0
    %p71 = por %p69, %p70
    %p72 = scmp.ne.s32.totalorder %s64, %s66
    %p73 = scmp.eq.s32.totalorder %s14, 3
    %p74 = por %p72, %p73
    %p75 = scmp.ne.s32.totalorder %s66, %s67
    %p76 = scmp.eq.s32.totalorder %s14, 0
    %p77 = por %p75, %p76
    %p78 = scmp.ne.s32.totalorder %s66, %s67
    %p79 = scmp.eq.s32.totalorder %s15, 3
    %p80 = por %p78, %p79
    %p82 = scmp.ne.s32.totalorder %s67, %s81
    %p83 = scmp.eq.s32.totalorder %s15, 0
    %p84 = por %p82, %p83
    %s85 = ssub.s32 %s9, %s16
    %p86 = scmp.eq.s32.totalorder %s85, 0
    %s88 = sadd.s32 %s87, 1
    %s89 = scalar_select %p86, %s87, %s88
    %p92 = pneg %p86
    %p93 = scmp.eq.s32.totalorder %s9, 3
    %p94 = por %p92, %p93
    %p95 = scmp.ne.s32.totalorder %s87, %s90
    %p96 = scmp.eq.s32.totalorder %s9, 0
    %p97 = por %p95, %p96
    %p98 = scmp.ne.s32.totalorder %s87, %s90
    %p99 = scmp.eq.s32.totalorder %s14, 3
    %p100 = por %p98, %p99
    %p101 = scmp.ne.s32.totalorder %s90, %s91
    %p102 = scmp.eq.s32.totalorder %s14, 0
    %p103 = por %p101, %p102
    %p104 = scmp.ne.s32.totalorder %s90, %s91
    %p105 = scmp.eq.s32.totalorder %s15, 3
    %p106 = por %p104, %p105
    %p108 = scmp.ne.s32.totalorder %s91, %s107
    %p109 = scmp.eq.s32.totalorder %s15, 0
    %p110 = por %p108, %p109
    %p111 = scmp.le.s32.totalorder 1, %s9
    %p112 = scmp.lt.s32.totalorder %s9, 5
    %p113 = pnand %p111, %p112
    %p114 = pneg %p113
    // Predicated region
    $region9: #{simsiam_forward.13} parent=5 // pred_check
      _
    $region10: #{simsiam_forward.13} parent=5 // pred_check_branch
      %116 = sbr.rel (%p113) target = $region12
    $region11: #{simsiam_forward.13} parent=5 // pred_region
      %s117 = ssub.s32 %s9, 1
      // Predicated region
      $region13: #{simsiam_forward.13} parent=11 // pred_check
        %p118 = pneg %p56
      $region14: #{simsiam_forward.13} parent=11 // pred_check_branch
        %120 = sbr.rel (%p118) target = $region16
      $region15: #{simsiam_forward.13} parent=11 // pred_region
        _
      $region16: #{simsiam_forward.13} parent=11 // pred_fallthru
        _
      // Predicated region
      $region17: #{simsiam_forward.13} parent=11 // pred_check
        %p121 = pneg %p77
      $region18: #{simsiam_forward.13} parent=11 // pred_check_branch
        %123 = sbr.rel (%p121) target = $region20
      $region19: #{simsiam_forward.13} parent=11 // pred_region
        _
      $region20: #{simsiam_forward.13} parent=11 // pred_fallthru
        _
    $region12: #{simsiam_forward.13} parent=5 // pred_fallthru
      _
    %p124 = scmp.lt.s32.totalorder %s9, 4
    // Predicated region
    $region21: #{simsiam_forward.13} parent=5 // pred_check
      %p125 = pneg %p124
    $region22: #{simsiam_forward.13} parent=5 // pred_check_branch
      %127 = sbr.rel (%p125) target = $region24
    $region23: #{simsiam_forward.13} parent=5 // pred_region
      // Predicated region
      $region25: #{simsiam_forward.13} parent=23 // pred_check
        %p128 = pneg %p29
      $region26: #{simsiam_forward.13} parent=23 // pred_check_branch
        %130 = sbr.rel (%p128) target = $region28
      $region27: #{simsiam_forward.13} parent=23 // pred_region
        %s131 = smul.u32 2, %s9
        %p132 = scmp.lt.s32.totalorder %s131, 7
        %s133 = scalar_select %p132, %s131, 7
        %s134 = smul.addr %s133, 4
        %s135 = scalar_lea.vmem %s0, %s134
        %s136 = smul.u32 2, %s9
      $region28: #{simsiam_forward.13} parent=23 // pred_fallthru
        _
    $region24: #{simsiam_forward.13} parent=5 // pred_fallthru
      _
    %p137 = scmp.le.s32.totalorder 1, %s9
    %p138 = scmp.lt.s32.totalorder %s9, 5
    %p139 = pnand %p137, %p138
    %p140 = pneg %p139
    // Predicated region
    $region29: #{simsiam_forward.13} parent=5 // pred_check
      _
    $region30: #{simsiam_forward.13} parent=5 // pred_check_branch
      %142 = sbr.rel (%p139) target = $region32
    $region31: #{simsiam_forward.13} parent=5 // pred_region
      %s143 = ssub.s32 %s9, 1
      %s144 = smul.u32 2, %s14
      %p145 = scmp.lt.s32.totalorder %s144, 7
      %s146 = scalar_select %p145, %s144, 7
      %s147 = smul.addr %s146, 4
      %s148 = scalar_lea.vmem %s0, %s147
      %p149 = pneg %p35
      %p150 = pneg %p32
      %p151 = pneg %p56
      %p152 = pneg %p53
      %p153 = pneg %p77
      %p154 = pneg %p74
      %p155 = pneg %p103
      %p156 = pneg %p100
      %s157 = smul.u32 2, %s14
      %p158 = scmp.lt.s32.totalorder %s157, 7
      %s159 = scalar_select %p158, %s157, 7
      %s160 = smul.addr %s159, 4
      %s161 = scalar_lea.vmem %s3, %s160
      %s162 = smul.u32 2, %s14
      %p163 = scmp.lt.s32.totalorder %s162, 7
      %s164 = scalar_select %p163, %s162, 7
      %s165 = smul.addr %s164, 4
      %s166 = scalar_lea.vmem %s0, %s165
      %s167 = smul.u32 2, %s14
      %s168 = smul.u32 2, %s14
      %p169 = scmp.lt.s32.totalorder %s168, 7
      %s170 = scalar_select %p169, %s168, 7
      %s171 = smul.addr %s170, 4
      %s172 = scalar_lea.vmem %s3, %s171
      %s173 = smul.u32 2, %s14
      %v174 = vld [vmem:[%s166] sm:$0xf]
      %v175 = vld [vmem:[%s166 + $0x4] sm:$0xf]
      %v176 = vunpack.c.l.bf16 %v174
      %v177 = vunpack.c.l.bf16 %v175
      %178 = vadd.xlane.f32.xlu0 %v176
      %v179 = vpop.xlane.xlu0 %178
      %180 = vadd.xlane.f32.xlu0 %v177
      %v181 = vpop.xlane.xlu0 %180
      %v182 = vrcp.pop 16.0
      %v183 = vmul.f32 %v179, %v182
      %v184 = vmul.f32 %v181, %v182
      %v185 = vmul.f32 %v176, %v176
      %v186 = vmul.f32 %v177, %v177
      %187 = vadd.xlane.f32.xlu0 %v185
      %v188 = vpop.xlane.xlu0 %187
      %189 = vadd.xlane.f32.xlu0 %v186
      %v190 = vpop.xlane.xlu0 %189
      %v191 = vmul.f32 %v188, %v182
      %v192 = vmul.f32 %v190, %v182
      %v193 = vmul.f32 %v183, %v183
      %v194 = vmul.f32 %v184, %v184
      %v195 = vsub.f32 %v191, %v193
      %v196 = vsub.f32 %v192, %v194
      %v197 = vmax.f32 %v195, 0.0
      %v198 = vmax.f32 %v196, 0.0
      %v199 = vsub.f32 %v176, %v183
      %v200 = vsub.f32 %v177, %v184
      %v201 = vadd.f32 %v197, 1e-05
      %v202 = vadd.f32 %v198, 1e-05
      %v203 = vrsqrt.pop %v201
      %v204 = vrsqrt.pop %v202
      %v205 = vmul.f32 %v199, %v203
      %v206 = vmul.f32 %v200, %v204
      %v207 = vld [vmem:[%s1] sm:$0xff]
      %v208 = vld [vmem:[%s1 + $0x8] sm:$0xff]
      %v209 = vmul.f32 %v205, %v207
      %v210 = vmul.f32 %v206, %v208
      %v211 = vld [vmem:[%s2] sm:$0xff]
      %v212 = vld [vmem:[%s2 + $0x8] sm:$0xff]
      %v213 = vadd.f32 %v209, %v211
      %v214 = vadd.f32 %v210, %v212
      %vm215 = vcmp.ge.f32.partialorder %v213, 0.0
      %vm216 = vcmp.ge.f32.partialorder %v214, 0.0
      %v217 = vmul.f32 %v213, 0.01
      %v218 = vmul.f32 %v214, 0.01
      %v219 = vsel %vm215, %v213, %v217
      %v220 = vsel %vm216, %v214, %v218
      %v221 = vpack.c.bf16 %v220, %v219
      %v223 = vunpack.c.l.b16 %v221
      %v224 = vunpack.c.h.b16 %v221
      %v225 = vpack.c.b16 %v223, %v223
      %v226 = vpack.c.b16 %v224, %v224
      %229 = vst [vmem:[%s172] sm:$0xf] %v225
      %230 = vst [vmem:[%s172 + $0x4] sm:$0xf] %v226
      %s231 = smul.u32 2, %s14
      %p232 = scmp.lt.s32.totalorder %s231, 7
      %s233 = scalar_select %p232, %s231, 7
      %s234 = smul.addr %s233, 4
      %s235 = scalar_lea.vmem %s3, %s234
      // Predicated region
      $region33: #{simsiam_forward.13} parent=31 // pred_check
        %p236 = pneg %p100
      $region34: #{simsiam_forward.13} parent=31 // pred_check_branch
        %238 = sbr.rel (%p236) target = $region36
      $region35: #{simsiam_forward.13} parent=31 // pred_region
        %s239 = smul.u32 2, %s14
      $region36: #{simsiam_forward.13} parent=31 // pred_fallthru
        _
    $region32: #{simsiam_forward.13} parent=5 // pred_fallthru
      _
    %p240 = scmp.le.s32.totalorder 2, %s9
    // Predicated region
    $region37: #{simsiam_forward.13} parent=5 // pred_check
      %p241 = pneg %p240
    $region38: #{simsiam_forward.13} parent=5 // pred_check_branch
      %243 = sbr.rel (%p241) target = $region40
    $region39: #{simsiam_forward.13} parent=5 // pred_region
      %s244 = ssub.s32 %s9, 2
      // Predicated region
      $region41: #{simsiam_forward.13} parent=39 // pred_check
        %p245 = pneg %p106
      $region42: #{simsiam_forward.13} parent=39 // pred_check_branch
        %247 = sbr.rel (%p245) target = $region44
      $region43: #{simsiam_forward.13} parent=39 // pred_region
        %s248 = smul.u32 2, %s15
        %p249 = scmp.lt.s32.totalorder %s248, 7
        %s250 = scalar_select %p249, %s248, 7
        %s251 = smul.addr %s250, 4
        %s252 = scalar_lea.vmem %s3, %s251
      $region44: #{simsiam_forward.13} parent=39 // pred_fallthru
        _
    $region40: #{simsiam_forward.13} parent=5 // pred_fallthru
      _
  $region6: #{simsiam_forward.13} parent=0 // loop_footer
    %s13 = sadd.s32 1, %s9
  $region7: #{simsiam_forward.13} parent=0 // loop_footer_branch
    %8 = sbr.rel target = $region3
  $region8: #{simsiam_forward.13} parent=0 // loop_exit
    _

// kernel: simsiam_forward.14
$region0: #{simsiam_forward.14}
  #allocation0 [shape = 'u32[]', space=smem, size = 0x4, offset = 0x4, fixed_abs, tag = 'smem constant byte address 0x4 - core index']
  #allocation1 [shape = 'u32[144,128]{1,0:T(1,128)}', space=vmem, size = 0x12000, scoped, tag = 'internal scratch']
  %s0 = inlined_call_operand.vmem [shape: bf16[8,128], index: 0, kind: input, shape index: {}]
  %s1 = inlined_call_operand.vmem [shape: f32[128,16], index: 1, kind: input, shape index: {}]
  %s2 = inlined_call_operand.vmem [shape: f32[1,16], index: 2, kind: input, shape index: {}]
  %s3 = inlined_call_operand.vmem [shape: f32[16,16], index: 3, kind: input, shape index: {}]
  %s4 = inlined_call_operand.vmem [shape: f32[1,16], index: 4, kind: input, shape index: {}]
  %s5 = inlined_call_operand.vmem [shape: f32[1,16], index: 5, kind: input, shape index: {}]
  %s6 = inlined_call_operand.vmem [shape: f32[1,16], index: 6, kind: input, shape index: {}]
  %s7 = inlined_call_operand.vmem [shape: f32[16,16], index: 7, kind: input, shape index: {}]
  %s8 = inlined_call_operand.vmem [shape: f32[1,16], index: 8, kind: input, shape index: {}]
  %s9 = inlined_call_operand.vmem [shape: f32[16,128], index: 9, kind: input, shape index: {}]
  %s10 = inlined_call_operand.vmem [shape: f32[1,128], index: 10, kind: input, shape index: {}]
  %s11 = inlined_call_operand.vmem [shape: f32[8,16], index: 11, kind: output, shape index: {0}]
  %s12 = inlined_call_operand.vmem [shape: f32[4,16], index: 12, kind: output, shape index: {1}]
  %s13 = inlined_call_operand.vmem [shape: f32[2,128], index: 13, kind: output, shape index: {2}]
  %14 = xla_tuple %s11, %s12, %s13
  %s15 = sld [smem:[#allocation0]]
  $region70: #{simsiam_forward.14} parent=0
    _
  %s17 = ssub.s32 1, %s15
  %s18 = scalar_select 0, %s17, %s15
  // Predicated region
  $region2: #{simsiam_forward.14} parent=0 // pred_check
    _
  $region3: #{simsiam_forward.14} parent=0 // pred_check_branch
    %20 = sbr.rel (0) target = $region5
  $region4: #{simsiam_forward.14} parent=0 // pred_region
    _
  $region5: #{simsiam_forward.14} parent=0 // pred_fallthru
    _
  // Predicated region
  $region6: #{simsiam_forward.14} parent=0 // pred_check
    _
  $region7: #{simsiam_forward.14} parent=0 // pred_check_branch
    %22 = sbr.rel (0) target = $region9
  $region8: #{simsiam_forward.14} parent=0 // pred_region
    _
  $region9: #{simsiam_forward.14} parent=0 // pred_fallthru
    _
  // Predicated region
  $region10: #{simsiam_forward.14} parent=0 // pred_check
    _
  $region11: #{simsiam_forward.14} parent=0 // pred_check_branch
    %24 = sbr.rel (0) target = $region13
  $region12: #{simsiam_forward.14} parent=0 // pred_region
    _
  $region13: #{simsiam_forward.14} parent=0 // pred_fallthru
    _
  // Predicated region
  $region14: #{simsiam_forward.14} parent=0 // pred_check
    _
  $region15: #{simsiam_forward.14} parent=0 // pred_check_branch
    %26 = sbr.rel (0) target = $region17
  $region16: #{simsiam_forward.14} parent=0 // pred_region
    _
  $region17: #{simsiam_forward.14} parent=0 // pred_fallthru
    _
  // Predicated region
  $region18: #{simsiam_forward.14} parent=0 // pred_check
    _
  $region19: #{simsiam_forward.14} parent=0 // pred_check_branch
    %28 = sbr.rel (0) target = $region21
  $region20: #{simsiam_forward.14} parent=0 // pred_region
    _
  $region21: #{simsiam_forward.14} parent=0 // pred_fallthru
    _
  // Predicated region
  $region22: #{simsiam_forward.14} parent=0 // pred_check
    _
  $region23: #{simsiam_forward.14} parent=0 // pred_check_branch
    %30 = sbr.rel (0) target = $region25
  $region24: #{simsiam_forward.14} parent=0 // pred_region
    _
  $region25: #{simsiam_forward.14} parent=0 // pred_fallthru
    _
  // Predicated region
  $region26: #{simsiam_forward.14} parent=0 // pred_check
    _
  $region27: #{simsiam_forward.14} parent=0 // pred_check_branch
    %32 = sbr.rel (0) target = $region29
  $region28: #{simsiam_forward.14} parent=0 // pred_region
    _
  $region29: #{simsiam_forward.14} parent=0 // pred_fallthru
    _
  // Predicated region
  $region30: #{simsiam_forward.14} parent=0 // pred_check
    _
  $region31: #{simsiam_forward.14} parent=0 // pred_check_branch
    %34 = sbr.rel (0) target = $region33
  $region32: #{simsiam_forward.14} parent=0 // pred_region
    _
  $region33: #{simsiam_forward.14} parent=0 // pred_fallthru
    _
  // Predicated region
  $region34: #{simsiam_forward.14} parent=0 // pred_check
    _
  $region35: #{simsiam_forward.14} parent=0 // pred_check_branch
    %36 = sbr.rel (0) target = $region37
  $region36: #{simsiam_forward.14} parent=0 // pred_region
    _
  $region37: #{simsiam_forward.14} parent=0 // pred_fallthru
    _
  // Predicated region
  $region38: #{simsiam_forward.14} parent=0 // pred_check
    _
  $region39: #{simsiam_forward.14} parent=0 // pred_check_branch
    %38 = sbr.rel (0) target = $region41
  $region40: #{simsiam_forward.14} parent=0 // pred_region
    _
  $region41: #{simsiam_forward.14} parent=0 // pred_fallthru
    _
  // Predicated region
  $region42: #{simsiam_forward.14} parent=0 // pred_check
    _
  $region43: #{simsiam_forward.14} parent=0 // pred_check_branch
    %40 = sbr.rel (0) target = $region45
  $region44: #{simsiam_forward.14} parent=0 // pred_region
    _
  $region45: #{simsiam_forward.14} parent=0 // pred_fallthru
    _
  %v41 = vld [vmem:[%s0] sm:$0xf]
  %v42 = vunpack.c.l.bf16 %v41
  %v43 = vld [vmem:[%s1] sm:$0xff]
  %v44 = vld [vmem:[%s1 + $0x8] sm:$0xff]
  %v45 = vld [vmem:[%s1 + $0x10] sm:$0xff]
  %v46 = vld [vmem:[%s1 + $0x18] sm:$0xff]
  %v47 = vld [vmem:[%s1 + $0x20] sm:$0xff]
  %v48 = vld [vmem:[%s1 + $0x28] sm:$0xff]
  %v49 = vld [vmem:[%s1 + $0x30] sm:$0xff]
  %v50 = vld [vmem:[%s1 + $0x38] sm:$0xff]
  %v51 = vld [vmem:[%s1 + $0x40] sm:$0xff]
  %v52 = vld [vmem:[%s1 + $0x48] sm:$0xff]
  %v53 = vld [vmem:[%s1 + $0x50] sm:$0xff]
  %v54 = vld [vmem:[%s1 + $0x58] sm:$0xff]
  %v55 = vld [vmem:[%s1 + $0x60] sm:$0xff]
  %v56 = vld [vmem:[%s1 + $0x68] sm:$0xff]
  %v57 = vld [vmem:[%s1 + $0x70] sm:$0xff]
  %v58 = vld [vmem:[%s1 + $0x78] sm:$0xff]
  %v59 = vld [vmem:[%s2] sm:$0x1]
  %v61 = vlaneseq
  %v62 = vshrl.u32 %v61, 7
  %v63 = vsub.s32 0, %v62
  %v64 = vrot.slane %v59, %v63
  %66 = vmatprep.subr.mxu0 0.0
  %67 = vmatpush1.msra.mxu0 %v58
  %68 = vmatprep.subr.mxu0 0.0
  %69 = vmatpush1.msra.mxu0 %v57
  %70 = vmatprep.subr.mxu0 0.0
  %71 = vmatpush1.msra.mxu0 %v56
  %72 = vmatprep.subr.mxu0 0.0
  %73 = vmatpush1.msra.mxu0 %v55
  %74 = vmatprep.subr.mxu0 0.0
  %75 = vmatpush1.msra.mxu0 %v54
  %76 = vmatprep.subr.mxu0 0.0
  %77 = vmatpush1.msra.mxu0 %v53
  %78 = vmatprep.subr.mxu0 0.0
  %79 = vmatpush1.msra.mxu0 %v52
  %80 = vmatprep.subr.mxu0 0.0
  %81 = vmatpush1.msra.mxu0 %v51
  %82 = vmatprep.subr.mxu0 0.0
  %83 = vmatpush1.msra.mxu0 %v50
  %84 = vmatprep.subr.mxu0 0.0
  %85 = vmatpush1.msra.mxu0 %v49
  %86 = vmatprep.subr.mxu0 0.0
  %87 = vmatpush1.msra.mxu0 %v48
  %88 = vmatprep.subr.mxu0 0.0
  %89 = vmatpush1.msra.mxu0 %v47
  %90 = vmatprep.subr.mxu0 0.0
  %91 = vmatpush1.msra.mxu0 %v46
  %92 = vmatprep.subr.mxu0 0.0
  %93 = vmatpush1.msra.mxu0 %v45
  %94 = vmatprep.subr.mxu0 0.0
  %95 = vmatpush1.msra.mxu0 %v44
  %96 = vmatprep.subr.mxu0 0.0
  %97 = vmatpush1.msra.mxu0 %v43
  %98 = vmatprep.subr.mxu0 0.0
  %99 = vmatpush2.msra.mxu0 0.0
  %100 = vmatprep.subr.mxu0 0.0
  %101 = vmatpush2.msra.mxu0 0.0
  %102 = vmatprep.subr.mxu0 0.0
  %103 = vmatpush2.msra.mxu0 0.0
  %104 = vmatprep.subr.mxu0 0.0
  %105 = vmatpush2.msra.mxu0 0.0
  %106 = vmatprep.subr.mxu0 0.0
  %107 = vmatpush2.msra.mxu0 0.0
  %108 = vmatprep.subr.mxu0 0.0
  %109 = vmatpush2.msra.mxu0 0.0
  %110 = vmatprep.subr.mxu0 0.0
  %111 = vmatpush2.msra.mxu0 0.0
  %112 = vmatprep.subr.mxu0 0.0
  %113 = vmatpush2.msra.mxu0 0.0
  %114 = vmatprep.subr.mxu0 0.0
  %115 = vmatpush2.msra.mxu0 0.0
  %116 = vmatprep.subr.mxu0 0.0
  %117 = vmatpush2.msra.mxu0 0.0
  %118 = vmatprep.subr.mxu0 0.0
  %119 = vmatpush2.msra.mxu0 0.0
  %120 = vmatprep.subr.mxu0 0.0
  %121 = vmatpush2.msra.mxu0 0.0
  %122 = vmatprep.subr.mxu0 0.0
  %123 = vmatpush2.msra.mxu0 0.0
  %124 = vmatprep.subr.mxu0 0.0
  %125 = vmatpush2.msra.mxu0 0.0
  %126 = vmatprep.subr.mxu0 0.0
  %127 = vmatpush2.msra.mxu0 0.0
  %128 = vmatprep.subr.mxu0 0.0
  %129 = vmatpush2.msra.mxu0 0.0
  %130 = vmatprep.mubr.f32.mxu0 0.0
  %131 = vmatmul.mubr.f32.gmra.mxu0 %v42
  %v132 = vpop.f32.mrf.mxu0
  %v133 = vadd.f32 %v64, %v132
  %v134 = vpop.f32.mrf.mxu0
  %135 = vdwg.mxu0
  %v136 = vmul.f32 %v133, %v133
  %vm137 = vcmask 130048
  %v138 = vsel %vm137, %v136, 0.0
  %139 = vadd.xlane.f32.xlu0 %v138
  %v140 = vpop.xlane.xlu0 %139
  %v141 = vmax.f32 %v140, 1e-24
  %v142 = vrsqrt.pop %v141
  %v143 = vmul.f32 %v133, %v142
  %144 = vst.msk [vmem:[%s11] sm:$0xff] %vm137, %v143
  %v145 = vld [vmem:[%s3] sm:$0xff]
  %v146 = vld [vmem:[%s3 + $0x8] sm:$0xff]
  %v147 = vld [vmem:[%s4] sm:$0x1]
  %v149 = vlaneseq
  %v150 = vshrl.u32 %v149, 7
  %v151 = vsub.s32 0, %v150
  %v152 = vrot.slane %v147, %v151
  %v155 = vsel %vm137, %v143, 0
  %157 = vmatprep.subr.mxu0 0.0
  %158 = vmatpush1.msra.mxu0 0.0
  %159 = vmatprep.subr.mxu0 0.0
  %160 = vmatpush1.msra.mxu0 0.0
  %161 = vmatprep.subr.mxu0 0.0
  %162 = vmatpush1.msra.mxu0 0.0
  %163 = vmatprep.subr.mxu0 0.0
  %164 = vmatpush1.msra.mxu0 0.0
  %165 = vmatprep.subr.mxu0 0.0
  %166 = vmatpush1.msra.mxu0 0.0
  %167 = vmatprep.subr.mxu0 0.0
  %168 = vmatpush1.msra.mxu0 0.0
  %169 = vmatprep.subr.mxu0 0.0
  %170 = vmatpush1.msra.mxu0 0.0
  %171 = vmatprep.subr.mxu0 0.0
  %172 = vmatpush1.msra.mxu0 0.0
  %173 = vmatprep.subr.mxu0 0.0
  %174 = vmatpush1.msra.mxu0 0.0
  %175 = vmatprep.subr.mxu0 0.0
  %176 = vmatpush1.msra.mxu0 0.0
  %177 = vmatprep.subr.mxu0 0.0
  %178 = vmatpush1.msra.mxu0 0.0
  %179 = vmatprep.subr.mxu0 0.0
  %180 = vmatpush1.msra.mxu0 0.0
  %181 = vmatprep.subr.mxu0 0.0
  %182 = vmatpush1.msra.mxu0 0.0
  %183 = vmatprep.subr.mxu0 0.0
  %184 = vmatpush1.msra.mxu0 0.0
  %185 = vmatprep.subr.mxu0 0.0
  %186 = vmatpush1.msra.mxu0 %v146
  %187 = vmatprep.subr.mxu0 0.0
  %188 = vmatpush1.msra.mxu0 %v145
  %189 = vmatprep.subr.mxu0 0.0
  %190 = vmatpush2.msra.mxu0 0.0
  %191 = vmatprep.subr.mxu0 0.0
  %192 = vmatpush2.msra.mxu0 0.0
  %193 = vmatprep.subr.mxu0 0.0
  %194 = vmatpush2.msra.mxu0 0.0
  %195 = vmatprep.subr.mxu0 0.0
  %196 = vmatpush2.msra.mxu0 0.0
  %197 = vmatprep.subr.mxu0 0.0
  %198 = vmatpush2.msra.mxu0 0.0
  %199 = vmatprep.subr.mxu0 0.0
  %200 = vmatpush2.msra.mxu0 0.0
  %201 = vmatprep.subr.mxu0 0.0
  %202 = vmatpush2.msra.mxu0 0.0
  %203 = vmatprep.subr.mxu0 0.0
  %204 = vmatpush2.msra.mxu0 0.0
  %205 = vmatprep.subr.mxu0 0.0
  %206 = vmatpush2.msra.mxu0 0.0
  %207 = vmatprep.subr.mxu0 0.0
  %208 = vmatpush2.msra.mxu0 0.0
  %209 = vmatprep.subr.mxu0 0.0
  %210 = vmatpush2.msra.mxu0 0.0
  %211 = vmatprep.subr.mxu0 0.0
  %212 = vmatpush2.msra.mxu0 0.0
  %213 = vmatprep.subr.mxu0 0.0
  %214 = vmatpush2.msra.mxu0 0.0
  %215 = vmatprep.subr.mxu0 0.0
  %216 = vmatpush2.msra.mxu0 0.0
  %217 = vmatprep.subr.mxu0 0.0
  %218 = vmatpush2.msra.mxu0 0.0
  %219 = vmatprep.subr.mxu0 0.0
  %220 = vmatpush2.msra.mxu0 0.0
  %221 = vmatprep.mubr.f32.mxu0 0.0
  %222 = vmatmul.mubr.f32.gmra.mxu0 %v155
  %v223 = vpop.f32.mrf.mxu0
  %v224 = vadd.f32 %v152, %v223
  %v225 = vpop.f32.mrf.mxu0
  %226 = vdwg.mxu0
  %vm227 = vcmask 123904
  %v228 = vsel %vm227, %v224, 0.0
  %v229 = vrot.slane %v228, 4
  %v230 = vadd.f32 %v228, %v229
  %v231 = vrot.slane %v230, 2
  %v232 = vadd.f32 %v230, %v231
  %v233 = vrot.slane %v232, 1
  %v234 = vadd.f32 %v232, %v233
  %v235 = vrcp.pop 2.0
  %v236 = vmul.f32 %v234, %v235
  %v237 = vsub.f32 %v224, %v236
  %v238 = vmul.f32 %v237, %v237
  %v239 = vsel %vm227, %v238, 0.0
  %v240 = vrot.slane %v239, 4
  %v241 = vadd.f32 %v239, %v240
  %v242 = vrot.slane %v241, 2
  %v243 = vadd.f32 %v241, %v242
  %v244 = vrot.slane %v243, 1
  %v245 = vadd.f32 %v243, %v244
  %v246 = vmul.f32 %v245, %v235
  %v248 = vrot.slane %v224, 2
  %v250 = vsel %vm227, %v248, 0.0
  %v251 = vrot.slane %v250, 4
  %v252 = vadd.f32 %v250, %v251
  %v253 = vrot.slane %v252, 2
  %v254 = vadd.f32 %v252, %v253
  %v255 = vrot.slane %v254, 1
  %v256 = vadd.f32 %v254, %v255
  %v257 = vmul.f32 %v256, %v235
  %v258 = vsub.f32 %v224, %v257
  %v259 = vmul.f32 %v258, %v258
  %v261 = vrot.slane %v259, 2
  %v263 = vsel %vm227, %v261, 0.0
  %v264 = vrot.slane %v263, 4
  %v265 = vadd.f32 %v263, %v264
  %v266 = vrot.slane %v265, 2
  %v267 = vadd.f32 %v265, %v266
  %v268 = vrot.slane %v267, 1
  %v269 = vadd.f32 %v267, %v268
  %v270 = vmul.f32 %v269, %v235
  %v271 = vlaneseq
  %v272 = vshrl.u32 %v271, 7
  %vm273 = vcmp.lt.s32.totalorder %v272, 2
  %v274 = vsel %vm273, %v236, %v257
  %v275 = vsel %vm273, %v246, %v270
  %v276 = vsub.f32 %v224, %v274
  %v277 = vadd.f32 %v275, 1e-05
  %v278 = vrsqrt.pop %v277
  %v279 = vmul.f32 %v276, %v278
  %v280 = vld [vmem:[%s5] sm:$0x1]
  %v282 = vlaneseq
  %v283 = vshrl.u32 %v282, 7
  %v284 = vsub.s32 0, %v283
  %v285 = vrot.slane %v280, %v284
  %v287 = vmul.f32 %v279, %v285
  %v288 = vld [vmem:[%s6] sm:$0x1]
  %v290 = vlaneseq
  %v291 = vshrl.u32 %v290, 7
  %v292 = vsub.s32 0, %v291
  %v293 = vrot.slane %v288, %v292
  %v295 = vadd.f32 %v287, %v293
  %vm296 = vcmp.ge.f32.partialorder %v295, 0.0
  %v297 = vmul.f32 %v295, 0.01
  %v298 = vsel %vm296, %v295, %v297
  %v299 = vld [vmem:[%s7] sm:$0xff]
  %v300 = vld [vmem:[%s7 + $0x8] sm:$0xff]
  %v301 = vld [vmem:[%s8] sm:$0x1]
  %v303 = vlaneseq
  %v304 = vshrl.u32 %v303, 7
  %v305 = vsub.s32 0, %v304
  %v306 = vrot.slane %v301, %v305
  %v309 = vsel %vm137, %v298, 0
  %311 = vmatprep.subr.mxu0 0.0
  %312 = vmatpush1.msra.mxu0 0.0
  %313 = vmatprep.subr.mxu0 0.0
  %314 = vmatpush1.msra.mxu0 0.0
  %315 = vmatprep.subr.mxu0 0.0
  %316 = vmatpush1.msra.mxu0 0.0
  %317 = vmatprep.subr.mxu0 0.0
  %318 = vmatpush1.msra.mxu0 0.0
  %319 = vmatprep.subr.mxu0 0.0
  %320 = vmatpush1.msra.mxu0 0.0
  %321 = vmatprep.subr.mxu0 0.0
  %322 = vmatpush1.msra.mxu0 0.0
  %323 = vmatprep.subr.mxu0 0.0
  %324 = vmatpush1.msra.mxu0 0.0
  %325 = vmatprep.subr.mxu0 0.0
  %326 = vmatpush1.msra.mxu0 0.0
  %327 = vmatprep.subr.mxu0 0.0
  %328 = vmatpush1.msra.mxu0 0.0
  %329 = vmatprep.subr.mxu0 0.0
  %330 = vmatpush1.msra.mxu0 0.0
  %331 = vmatprep.subr.mxu0 0.0
  %332 = vmatpush1.msra.mxu0 0.0
  %333 = vmatprep.subr.mxu0 0.0
  %334 = vmatpush1.msra.mxu0 0.0
  %335 = vmatprep.subr.mxu0 0.0
  %336 = vmatpush1.msra.mxu0 0.0
  %337 = vmatprep.subr.mxu0 0.0
  %338 = vmatpush1.msra.mxu0 0.0
  %339 = vmatprep.subr.mxu0 0.0
  %340 = vmatpush1.msra.mxu0 %v300
  %341 = vmatprep.subr.mxu0 0.0
  %342 = vmatpush1.msra.mxu0 %v299
  %343 = vmatprep.subr.mxu0 0.0
  %344 = vmatpush2.msra.mxu0 0.0
  %345 = vmatprep.subr.mxu0 0.0
  %346 = vmatpush2.msra.mxu0 0.0
  %347 = vmatprep.subr.mxu0 0.0
  %348 = vmatpush2.msra.mxu0 0.0
  %349 = vmatprep.subr.mxu0 0.0
  %350 = vmatpush2.msra.mxu0 0.0
  %351 = vmatprep.subr.mxu0 0.0
  %352 = vmatpush2.msra.mxu0 0.0
  %353 = vmatprep.subr.mxu0 0.0
  %354 = vmatpush2.msra.mxu0 0.0
  %355 = vmatprep.subr.mxu0 0.0
  %356 = vmatpush2.msra.mxu0 0.0
  %357 = vmatprep.subr.mxu0 0.0
  %358 = vmatpush2.msra.mxu0 0.0
  %359 = vmatprep.subr.mxu0 0.0
  %360 = vmatpush2.msra.mxu0 0.0
  %361 = vmatprep.subr.mxu0 0.0
  %362 = vmatpush2.msra.mxu0 0.0
  %363 = vmatprep.subr.mxu0 0.0
  %364 = vmatpush2.msra.mxu0 0.0
  %365 = vmatprep.subr.mxu0 0.0
  %366 = vmatpush2.msra.mxu0 0.0
  %367 = vmatprep.subr.mxu0 0.0
  %368 = vmatpush2.msra.mxu0 0.0
  %369 = vmatprep.subr.mxu0 0.0
  %370 = vmatpush2.msra.mxu0 0.0
  %371 = vmatprep.subr.mxu0 0.0
  %372 = vmatpush2.msra.mxu0 0.0
  %373 = vmatprep.subr.mxu0 0.0
  %374 = vmatpush2.msra.mxu0 0.0
  %375 = vmatprep.mubr.f32.mxu0 0.0
  %376 = vmatmul.mubr.f32.gmra.mxu0 %v309
  %v377 = vpop.f32.mrf.mxu0
  %v378 = vadd.f32 %v306, %v377
  %v379 = vpop.f32.mrf.mxu0
  %380 = vdwg.mxu0
  %vm381 = vcmask 125952
  %382 = vst.msk [vmem:[%s12] sm:$0xf] %vm381, %v378
  %v383 = vld [vmem:[%s9] sm:$0xff]
  %v384 = vld [vmem:[%s9 + $0x8] sm:$0xff]
  %v385 = vld [vmem:[%s10] sm:$0x1]
  %v387 = vlaneseq
  %v388 = vshrl.u32 %v387, 7
  %v389 = vsub.s32 0, %v388
  %v390 = vrot.slane %v385, %v389
  %392 = vmatprep.subr.mxu0 0.0
  %393 = vmatpush1.msra.mxu0 0.0
  %394 = vmatprep.subr.mxu0 0.0
  %395 = vmatpush1.msra.mxu0 0.0
  %396 = vmatprep.subr.mxu0 0.0
  %397 = vmatpush1.msra.mxu0 0.0
  %398 = vmatprep.subr.mxu0 0.0
  %399 = vmatpush1.msra.mxu0 0.0
  %400 = vmatprep.subr.mxu0 0.0
  %401 = vmatpush1.msra.mxu0 0.0
  %402 = vmatprep.subr.mxu0 0.0
  %403 = vmatpush1.msra.mxu0 0.0
  %404 = vmatprep.subr.mxu0 0.0
  %405 = vmatpush1.msra.mxu0 0.0
  %406 = vmatprep.subr.mxu0 0.0
  %407 = vmatpush1.msra.mxu0 0.0
  %408 = vmatprep.subr.mxu0 0.0
  %409 = vmatpush1.msra.mxu0 0.0
  %410 = vmatprep.subr.mxu0 0.0
  %411 = vmatpush1.msra.mxu0 0.0
  %412 = vmatprep.subr.mxu0 0.0
  %413 = vmatpush1.msra.mxu0 0.0
  %414 = vmatprep.subr.mxu0 0.0
  %415 = vmatpush1.msra.mxu0 0.0
  %416 = vmatprep.subr.mxu0 0.0
  %417 = vmatpush1.msra.mxu0 0.0
  %418 = vmatprep.subr.mxu0 0.0
  %419 = vmatpush1.msra.mxu0 0.0
  %420 = vmatprep.subr.mxu0 0.0
  %421 = vmatpush1.msra.mxu0 %v384
  %422 = vmatprep.subr.mxu0 0.0
  %423 = vmatpush1.msra.mxu0 %v383
  %424 = vmatprep.subr.mxu0 0.0
  %425 = vmatpush2.msra.mxu0 0.0
  %426 = vmatprep.subr.mxu0 0.0
  %427 = vmatpush2.msra.mxu0 0.0
  %428 = vmatprep.subr.mxu0 0.0
  %429 = vmatpush2.msra.mxu0 0.0
  %430 = vmatprep.subr.mxu0 0.0
  %431 = vmatpush2.msra.mxu0 0.0
  %432 = vmatprep.subr.mxu0 0.0
  %433 = vmatpush2.msra.mxu0 0.0
  %434 = vmatprep.subr.mxu0 0.0
  %435 = vmatpush2.msra.mxu0 0.0
  %436 = vmatprep.subr.mxu0 0.0
  %437 = vmatpush2.msra.mxu0 0.0
  %438 = vmatprep.subr.mxu0 0.0
  %439 = vmatpush2.msra.mxu0 0.0
  %440 = vmatprep.subr.mxu0 0.0
  %441 = vmatpush2.msra.mxu0 0.0
  %442 = vmatprep.subr.mxu0 0.0
  %443 = vmatpush2.msra.mxu0 0.0
  %444 = vmatprep.subr.mxu0 0.0
  %445 = vmatpush2.msra.mxu0 0.0
  %446 = vmatprep.subr.mxu0 0.0
  %447 = vmatpush2.msra.mxu0 0.0
  %448 = vmatprep.subr.mxu0 0.0
  %449 = vmatpush2.msra.mxu0 0.0
  %450 = vmatprep.subr.mxu0 0.0
  %451 = vmatpush2.msra.mxu0 0.0
  %452 = vmatprep.subr.mxu0 0.0
  %453 = vmatpush2.msra.mxu0 0.0
  %454 = vmatprep.subr.mxu0 0.0
  %455 = vmatpush2.msra.mxu0 0.0
  %456 = vmatprep.mubr.f32.mxu0 0.0
  %457 = vmatmul.mubr.f32.gmra.mxu0 %v155
  %v458 = vpop.f32.mrf.mxu0
  %v459 = vadd.f32 %v390, %v458
  %v460 = vpop.f32.mrf.mxu0
  %461 = vdwg.mxu0
  %462 = vst [vmem:[%s13] sm:$0x3] %v459
  // Predicated region
  $region46: #{simsiam_forward.14} parent=0 // pred_check
    _
  $region47: #{simsiam_forward.14} parent=0 // pred_check_branch
    %464 = sbr.rel (0) target = $region49
  $region48: #{simsiam_forward.14} parent=0 // pred_region
    _
  $region49: #{simsiam_forward.14} parent=0 // pred_fallthru
    _
  // Predicated region
  $region50: #{simsiam_forward.14} parent=0 // pred_check
    _
  $region51: #{simsiam_forward.14} parent=0 // pred_check_branch
    %466 = sbr.rel (0) target = $region53
  $region52: #{simsiam_forward.14} parent=0 // pred_region
    _
  $region53: #{simsiam_forward.14} parent=0 // pred_fallthru
    _
  // Predicated region
  $region54: #{simsiam_forward.14} parent=0 // pred_check
    _
  $region55: #{simsiam_forward.14} parent=0 // pred_check_branch
    %468 = sbr.rel (0) target = $region57
  $region56: #{simsiam_forward.14} parent=0 // pred_region
    _
  $region57: #{simsiam_forward.14} parent=0 // pred_fallthru
    _
  // Predicated region
  $region58: #{simsiam_forward.14} parent=0 // pred_check
    _
  $region59: #{simsiam_forward.14} parent=0 // pred_check_branch
    %470 = sbr.rel (0) target = $region61
  $region60: #{simsiam_forward.14} parent=0 // pred_region
    _
  $region61: #{simsiam_forward.14} parent=0 // pred_fallthru
    _
  // Predicated region
  $region62: #{simsiam_forward.14} parent=0 // pred_check
    _
  $region63: #{simsiam_forward.14} parent=0 // pred_check_branch
    %472 = sbr.rel (0) target = $region65
  $region64: #{simsiam_forward.14} parent=0 // pred_region
    _
  $region65: #{simsiam_forward.14} parent=0 // pred_fallthru
    _
  // Predicated region
  $region66: #{simsiam_forward.14} parent=0 // pred_check
    _
  $region67: #{simsiam_forward.14} parent=0 // pred_check_branch
    %474 = sbr.rel (0) target = $region69
  $region68: #{simsiam_forward.14} parent=0 // pred_region
    _
  $region69: #{simsiam_forward.14} parent=0 // pred_fallthru
    _

// kernel: simsiam_forward.15
$region0: #{simsiam_forward.15}
  #allocation0 [shape = 'u32[]', space=smem, size = 0x4, offset = 0x4, fixed_abs, tag = 'smem constant byte address 0x4 - core index']
  #allocation1 [shape = 'u32[144,128]{1,0:T(1,128)}', space=vmem, size = 0x12000, scoped, tag = 'internal scratch']
  %s0 = inlined_call_operand.vmem [shape: bf16[8,8,128], index: 0, kind: input, shape index: {}]
  %s1 = inlined_call_operand.vmem [shape: bf16[8,128,128], index: 1, kind: input, shape index: {}]
  %s2 = inlined_call_operand.vmem [shape: f32[8,1], index: 2, kind: input, shape index: {}]
  %s3 = inlined_call_operand.vmem [shape: bf16[8,8,128], index: 3, kind: output, shape index: {}]
  %s4 = sld [smem:[#allocation0]]
  $region45: #{simsiam_forward.15} parent=0
    _
  %s6 = ssub.s32 1, %s4
  %s7 = scalar_select 0, %s6, %s4
  loop: start=0, step=1, limit=10
  $region2: #{simsiam_forward.15} parent=0 // loop_pre_header
    _
  $region3: #{simsiam_forward.15} parent=0 // loop_header
    %s9 = sphi 0, %s13
    %p10 = scmp.ge.s32.totalorder %s9, 10
    %s16 = sphi 0, %s28
    %s17 = sphi 0, %s24
    %s18 = sphi 0, %s16
    %s19 = sphi 0, %s17
    %s20 = sphi 0, %s18
    %s21 = sphi 0, %s19
    %s31 = sphi 0, %s33
    %s34 = sphi 0, %s31
    %s35 = sphi 0, %s34
    %s51 = sphi 0, %s35
    %s59 = sphi 0, %s61
    %s62 = sphi 0, %s59
    %s63 = sphi 0, %s62
    %s79 = sphi 0, %s63
    %s83 = sphi 0, %s83
    %s85 = sphi 0, %s83
    %s86 = sphi 0, %s85
    %s100 = sphi 0, %s86
    %s108 = sphi 0, %s110
    %s111 = sphi 0, %s108
    %s112 = sphi 0, %s111
    %s128 = sphi 0, %s112
  $region4: #{simsiam_forward.15} parent=0 // loop_header_branch
    %12 = sbr.rel (%p10) target = $region8
  $region5: #{simsiam_forward.15} parent=0 // loop_body
    %s14 = ssub.s32 %s9, 1
    %s15 = ssub.s32 %s9, 2
    %s22 = sadd.s32 1, %s17
    %p23 = scmp.ge.s32.totalorder %s22, 1
    %s24 = scalar_select %p23, 0, %s22
    %s25 = sadd.s32 1, %s16
    %s26 = scalar_select %p23, %s25, %s16
    %p27 = scmp.ge.s32.totalorder %s26, 8
    %s28 = scalar_select %p27, 0, %s26
    %s29 = ssub.s32 %s16, %s28
    %p30 = scmp.eq.s32.totalorder %s29, 0
    %s32 = sadd.s32 %s31, 1
    %s33 = scalar_select %p30, %s31, %s32
    %p36 = pneg %p30
    %p37 = scmp.eq.s32.totalorder %s9, 7
    %p38 = por %p36, %p37
    %p39 = scmp.ne.s32.totalorder %s31, %s34
    %p40 = scmp.eq.s32.totalorder %s9, 0
    %p41 = por %p39, %p40
    %p42 = scmp.ne.s32.totalorder %s31, %s34
    %p43 = scmp.eq.s32.totalorder %s14, 7
    %p44 = por %p42, %p43
    %p45 = scmp.ne.s32.totalorder %s34, %s35
    %p46 = scmp.eq.s32.totalorder %s14, 0
    %p47 = por %p45, %p46
    %p48 = scmp.ne.s32.totalorder %s34, %s35
    %p49 = scmp.eq.s32.totalorder %s15, 7
    %p50 = por %p48, %p49
    %p52 = scmp.ne.s32.totalorder %s35, %s51
    %p53 = scmp.eq.s32.totalorder %s15, 0
    %p54 = por %p52, %p53
    %s55 = ssub.s32 %s16, %s28
    %s56 = ssub.s32 %s17, %s24
    %s57 = sor.u32 %s55, %s56
    %p58 = scmp.eq.s32.totalorder %s57, 0
    %s60 = sadd.s32 %s59, 1
    %s61 = scalar_select %p58, %s59, %s60
    %p64 = pneg %p58
    %p65 = scmp.eq.s32.totalorder %s9, 7
    %p66 = por %p64, %p65
    %p67 = scmp.ne.s32.totalorder %s59, %s62
    %p68 = scmp.eq.s32.totalorder %s9, 0
    %p69 = por %p67, %p68
    %p70 = scmp.ne.s32.totalorder %s59, %s62
    %p71 = scmp.eq.s32.totalorder %s14, 7
    %p72 = por %p70, %p71
    %p73 = scmp.ne.s32.totalorder %s62, %s63
    %p74 = scmp.eq.s32.totalorder %s14, 0
    %p75 = por %p73, %p74
    %p76 = scmp.ne.s32.totalorder %s62, %s63
    %p77 = scmp.eq.s32.totalorder %s15, 7
    %p78 = por %p76, %p77
    %p80 = scmp.ne.s32.totalorder %s63, %s79
    %p81 = scmp.eq.s32.totalorder %s15, 0
    %p82 = por %p80, %p81
    %s84 = sadd.s32 %s83, 1
    %p87 = scmp.eq.s32.totalorder %s9, 7
    %p88 = scmp.ne.s32.totalorder %s83, %s85
    %p89 = scmp.eq.s32.totalorder %s9, 0
    %p90 = por %p88, %p89
    %p91 = scmp.ne.s32.totalorder %s83, %s85
    %p92 = scmp.eq.s32.totalorder %s14, 7
    %p93 = por %p91, %p92
    %p94 = scmp.ne.s32.totalorder %s85, %s86
    %p95 = scmp.eq.s32.totalorder %s14, 0
    %p96 = por %p94, %p95
    %p97 = scmp.ne.s32.totalorder %s85, %s86
    %p98 = scmp.eq.s32.totalorder %s15, 7
    %p99 = por %p97, %p98
    %p101 = scmp.ne.s32.totalorder %s86, %s100
    %p102 = scmp.eq.s32.totalorder %s15, 0
    %p103 = por %p101, %p102
    %s104 = ssub.s32 %s16, %s28
    %s105 = ssub.s32 %s17, %s24
    %s106 = sor.u32 %s104, %s105
    %p107 = scmp.eq.s32.totalorder %s106, 0
    %s109 = sadd.s32 %s108, 1
    %s110 = scalar_select %p107, %s108, %s109
    %p113 = pneg %p107
    %p114 = scmp.eq.s32.totalorder %s9, 7
    %p115 = por %p113, %p114
    %p116 = scmp.ne.s32.totalorder %s108, %s111
    %p117 = scmp.eq.s32.totalorder %s9, 0
    %p118 = por %p116, %p117
    %p119 = scmp.ne.s32.totalorder %s108, %s111
    %p120 = scmp.eq.s32.totalorder %s14, 7
    %p121 = por %p119, %p120
    %p122 = scmp.ne.s32.totalorder %s111, %s112
    %p123 = scmp.eq.s32.totalorder %s14, 0
    %p124 = por %p122, %p123
    %p125 = scmp.ne.s32.totalorder %s111, %s112
    %p126 = scmp.eq.s32.totalorder %s15, 7
    %p127 = por %p125, %p126
    %p129 = scmp.ne.s32.totalorder %s112, %s128
    %p130 = scmp.eq.s32.totalorder %s15, 0
    %p131 = por %p129, %p130
    %p132 = scmp.le.s32.totalorder 1, %s9
    %p133 = scmp.lt.s32.totalorder %s9, 9
    %p134 = pnand %p132, %p133
    %p135 = pneg %p134
    // Predicated region
    $region9: #{simsiam_forward.15} parent=5 // pred_check
      _
    $region10: #{simsiam_forward.15} parent=5 // pred_check_branch
      %137 = sbr.rel (%p134) target = $region12
    $region11: #{simsiam_forward.15} parent=5 // pred_region
      %s138 = ssub.s32 %s9, 1
      // Predicated region
      $region13: #{simsiam_forward.15} parent=11 // pred_check
        %p139 = pneg %p96
      $region14: #{simsiam_forward.15} parent=11 // pred_check_branch
        %141 = sbr.rel (%p139) target = $region16
      $region15: #{simsiam_forward.15} parent=11 // pred_region
        _
      $region16: #{simsiam_forward.15} parent=11 // pred_fallthru
        _
    $region12: #{simsiam_forward.15} parent=5 // pred_fallthru
      _
    %p142 = scmp.lt.s32.totalorder %s9, 8
    // Predicated region
    $region17: #{simsiam_forward.15} parent=5 // pred_check
      %p143 = pneg %p142
    $region18: #{simsiam_forward.15} parent=5 // pred_check_branch
      %145 = sbr.rel (%p143) target = $region20
    $region19: #{simsiam_forward.15} parent=5 // pred_region
      // Predicated region
      $region21: #{simsiam_forward.15} parent=19 // pred_check
        %p146 = pneg %p41
      $region22: #{simsiam_forward.15} parent=19 // pred_check_branch
        %148 = sbr.rel (%p146) target = $region24
      $region23: #{simsiam_forward.15} parent=19 // pred_region
        %p149 = scmp.lt.s32.totalorder %s16, 7
        %s150 = scalar_select %p149, %s16, 7
        %s151 = smul.addr %s150, 4
        %s152 = scalar_lea.vmem %s0, %s151
      $region24: #{simsiam_forward.15} parent=19 // pred_fallthru
        _
      // Predicated region
      $region25: #{simsiam_forward.15} parent=19 // pred_check
        %p153 = pneg %p69
      $region26: #{simsiam_forward.15} parent=19 // pred_check_branch
        %155 = sbr.rel (%p153) target = $region28
      $region27: #{simsiam_forward.15} parent=19 // pred_region
        %p156 = scmp.lt.s32.totalorder %s16, 7
        %s157 = scalar_select %p156, %s16, 7
        %p158 = scmp.lt.s32.totalorder %s17, 0
        %s159 = scalar_select %p158, %s17, 0
        %s160 = smul.addr %s157, 16
        %s161 = sadd.s32 %s159, %s160
        %s162 = smul.addr %s161, 4
        %s163 = scalar_lea.vmem %s1, %s162
      $region28: #{simsiam_forward.15} parent=19 // pred_fallthru
        _
    $region20: #{simsiam_forward.15} parent=5 // pred_fallthru
      _
    %p164 = scmp.le.s32.totalorder 1, %s9
    %p165 = scmp.lt.s32.totalorder %s9, 9
    %p166 = pnand %p164, %p165
    %p167 = pneg %p166
    // Predicated region
    $region29: #{simsiam_forward.15} parent=5 // pred_check
      _
    $region30: #{simsiam_forward.15} parent=5 // pred_check_branch
      %169 = sbr.rel (%p166) target = $region32
    $region31: #{simsiam_forward.15} parent=5 // pred_region
      %s170 = ssub.s32 %s9, 1
      %p171 = scmp.lt.s32.totalorder %s18, 7
      %s172 = scalar_select %p171, %s18, 7
      %s173 = smul.addr %s172, 4
      %s174 = scalar_lea.vmem %s0, %s173
      %p175 = pneg %p47
      %p176 = pneg %p44
      %p177 = scmp.lt.s32.totalorder %s18, 7
      %s178 = scalar_select %p177, %s18, 7
      %p179 = scmp.lt.s32.totalorder %s19, 0
      %s180 = scalar_select %p179, %s19, 0
      %s181 = smul.addr %s178, 16
      %s182 = sadd.s32 %s180, %s181
      %s183 = smul.addr %s182, 4
      %s184 = scalar_lea.vmem %s1, %s183
      %p185 = pneg %p75
      %p186 = pneg %p72
      %p187 = pneg %p96
      %p188 = pneg %p93
      %p189 = pneg %p124
      %p190 = pneg %p121
      %p191 = scmp.lt.s32.totalorder %s18, 7
      %s192 = scalar_select %p191, %s18, 7
      %p193 = scmp.lt.s32.totalorder %s19, 0
      %s194 = scalar_select %p193, %s19, 0
      %s195 = sadd.s32 %s194, %s192
      %s196 = smul.addr %s195, 4
      %s197 = scalar_lea.vmem %s3, %s196
      %p198 = scmp.lt.s32.totalorder %s18, 7
      %s199 = scalar_select %p198, %s18, 7
      %s200 = smul.addr %s199, 4
      %s201 = scalar_lea.vmem %s0, %s200
      %p202 = scmp.lt.s32.totalorder %s18, 7
      %s203 = scalar_select %p202, %s18, 7
      %p204 = scmp.lt.s32.totalorder %s19, 0
      %s205 = scalar_select %p204, %s19, 0
      %s206 = smul.addr %s203, 16
      %s207 = sadd.s32 %s205, %s206
      %s208 = smul.addr %s207, 4
      %s209 = scalar_lea.vmem %s1, %s208
      %p210 = scmp.lt.s32.totalorder %s18, 7
      %s211 = scalar_select %p210, %s18, 7
      %p212 = scmp.lt.s32.totalorder %s19, 0
      %s213 = scalar_select %p212, %s19, 0
      %s214 = sadd.s32 %s213, %s211
      %s215 = smul.addr %s214, 4
      %s216 = scalar_lea.vmem %s3, %s215
      %v218 = vld [vmem:[%s201] sm:$0xf]
      %v219 = vld [vmem:[%s209] sm:$0xf]
      %v220 = vld [vmem:[%s209 + $0x4] sm:$0xf]
      %v221 = vld [vmem:[%s209 + $0x8] sm:$0xf]
      %v222 = vld [vmem:[%s209 + $0xc] sm:$0xf]
      %v223 = vld [vmem:[%s209 + $0x10] sm:$0xf]
      %v224 = vld [vmem:[%s209 + $0x14] sm:$0xf]
      %v225 = vld [vmem:[%s209 + $0x18] sm:$0xf]
      %v226 = vld [vmem:[%s209 + $0x1c] sm:$0xf]
      %v227 = vld [vmem:[%s209 + $0x20] sm:$0xf]
      %v228 = vld [vmem:[%s209 + $0x24] sm:$0xf]
      %v229 = vld [vmem:[%s209 + $0x28] sm:$0xf]
      %v230 = vld [vmem:[%s209 + $0x2c] sm:$0xf]
      %v231 = vld [vmem:[%s209 + $0x30] sm:$0xf]
      %v232 = vld [vmem:[%s209 + $0x34] sm:$0xf]
      %v233 = vld [vmem:[%s209 + $0x38] sm:$0xf]
      %v234 = vld [vmem:[%s209 + $0x3c] sm:$0xf]
      %v235 = vld [vmem:[%s2] sm:$0xff]
      %237 = vset.pattern.permute.xlu0 0
      %238 = vperm.xlu0 %237, %v235
      %v239 = vpop.permute.xlu0 %238
      %v257 = vunpack.c.l.b16 %v219
      %v258 = vunpack.c.l.b16 %v220
      %v259 = vunpack.c.l.b16 %v221
      %v260 = vunpack.c.l.b16 %v222
      %v261 = vunpack.c.l.b16 %v223
      %v262 = vunpack.c.l.b16 %v224
      %v263 = vunpack.c.l.b16 %v225
      %v264 = vunpack.c.l.b16 %v226
      %v265 = vunpack.c.l.b16 %v227
      %v266 = vunpack.c.l.b16 %v228
      %v267 = vunpack.c.l.b16 %v229
      %v268 = vunpack.c.l.b16 %v230
      %v269 = vunpack.c.l.b16 %v231
      %v270 = vunpack.c.l.b16 %v232
      %v271 = vunpack.c.l.b16 %v233
      %v272 = vunpack.c.l.b16 %v234
      %v273 = vpack.c.b16 %v258, %v257
      %v274 = vpack.c.b16 %v260, %v259
      %v275 = vpack.c.b16 %v262, %v261
      %v276 = vpack.c.b16 %v264, %v263
      %v277 = vpack.c.b16 %v266, %v265
      %v278 = vpack.c.b16 %v268, %v267
      %v279 = vpack.c.b16 %v270, %v269
      %v280 = vpack.c.b16 %v272, %v271
      %289 = vmatprep.subr.bf16.mxu0 0
      %290 = vmatpush1.bf16.msra.mxu0 %v280
      %291 = vmatprep.subr.bf16.mxu0 0
      %292 = vmatpush1.bf16.msra.mxu0 %v279
      %293 = vmatprep.subr.bf16.mxu0 0
      %294 = vmatpush1.bf16.msra.mxu0 %v278
      %295 = vmatprep.subr.bf16.mxu0 0
      %296 = vmatpush1.bf16.msra.mxu0 %v277
      %297 = vmatprep.subr.bf16.mxu0 0
      %298 = vmatpush1.bf16.msra.mxu0 %v276
      %299 = vmatprep.subr.bf16.mxu0 0
      %300 = vmatpush1.bf16.msra.mxu0 %v275
      %301 = vmatprep.subr.bf16.mxu0 0
      %302 = vmatpush1.bf16.msra.mxu0 %v274
      %303 = vmatprep.subr.bf16.mxu0 0
      %304 = vmatpush1.bf16.msra.mxu0 %v273
      %305 = vmatprep.subr.bf16.mxu0 0
      %306 = vmatpush2.bf16.msra.mxu0 0
      %307 = vmatprep.subr.bf16.mxu0 0
      %308 = vmatpush2.bf16.msra.mxu0 0
      %309 = vmatprep.subr.bf16.mxu0 0
      %310 = vmatpush2.bf16.msra.mxu0 0
      %311 = vmatprep.subr.bf16.mxu0 0
      %312 = vmatpush2.bf16.msra.mxu0 0
      %313 = vmatprep.subr.bf16.mxu0 0
      %314 = vmatpush2.bf16.msra.mxu0 0
      %315 = vmatprep.subr.bf16.mxu0 0
      %316 = vmatpush2.bf16.msra.mxu0 0
      %317 = vmatprep.subr.bf16.mxu0 0
      %318 = vmatpush2.bf16.msra.mxu0 0
      %319 = vmatprep.subr.bf16.mxu0 0
      %320 = vmatpush2.bf16.msra.mxu0 0
      %321 = vmatprep.mubr.bf16.mxu0 0
      %322 = vmatmul.mubr.bf16.gmra.mxu0 %v218
      %v323 = vpop.f32.mrf.mxu0
      %v324 = vadd.f32 %v239, %v323
      %v325 = vpop.f32.mrf.mxu0
      %v326 = vpop.f32.mrf.mxu0
      %v327 = vpop.f32.mrf.mxu0
      %328 = vdwg.mxu0
      %v329 = vpack.c.bf16 %v324, %v324
      %330 = vst [vmem:[%s216] sm:$0xf] %v329
      %p331 = scmp.lt.s32.totalorder %s18, 7
      %s332 = scalar_select %p331, %s18, 7
      %p333 = scmp.lt.s32.totalorder %s19, 0
      %s334 = scalar_select %p333, %s19, 0
      %s335 = sadd.s32 %s334, %s332
      %s336 = smul.addr %s335, 4
      %s337 = scalar_lea.vmem %s3, %s336
      // Predicated region
      $region33: #{simsiam_forward.15} parent=31 // pred_check
        %p338 = pneg %p121
      $region34: #{simsiam_forward.15} parent=31 // pred_check_branch
        %340 = sbr.rel (%p338) target = $region36
      $region35: #{simsiam_forward.15} parent=31 // pred_region
        _
      $region36: #{simsiam_forward.15} parent=31 // pred_fallthru
        _
    $region32: #{simsiam_forward.15} parent=5 // pred_fallthru
      _
    %p341 = scmp.le.s32.totalorder 2, %s9
    // Predicated region
    $region37: #{simsiam_forward.15} parent=5 // pred_check
      %p342 = pneg %p341
    $region38: #{simsiam_forward.15} parent=5 // pred_check_branch
      %344 = sbr.rel (%p342) target = $region40
    $region39: #{simsiam_forward.15} parent=5 // pred_region
      %s345 = ssub.s32 %s9, 2
      // Predicated region
      $region41: #{simsiam_forward.15} parent=39 // pred_check
        %p346 = pneg %p127
      $region42: #{simsiam_forward.15} parent=39 // pred_check_branch
        %348 = sbr.rel (%p346) target = $region44
      $region43: #{simsiam_forward.15} parent=39 // pred_region
        %p349 = scmp.lt.s32.totalorder %s20, 7
        %s350 = scalar_select %p349, %s20, 7
        %p351 = scmp.lt.s32.totalorder %s21, 0
        %s352 = scalar_select %p351, %s21, 0
        %s353 = sadd.s32 %s352, %s350
        %s354 = smul.addr %s353, 4
        %s355 = scalar_lea.vmem %s3, %s354
      $region44: #{simsiam_forward.15} parent=39 // pred_fallthru
        _
    $region40: #{simsiam_forward.15} parent=5 // pred_fallthru
      _
  $region6: #{simsiam_forward.15} parent=0 // loop_footer
    %s13 = sadd.s32 1, %s9
  $region7: #{simsiam_forward.15} parent=0 // loop_footer_branch
    %8 = sbr.rel target = $region3
  $region8: #{simsiam_forward.15} parent=0 // loop_exit
    _

// kernel: simsiam_forward.16
$region0: #{simsiam_forward.16}
  #allocation0 [shape = 'u32[]', space=smem, size = 0x4, offset = 0x4, fixed_abs, tag = 'smem constant byte address 0x4 - core index']
  #allocation1 [shape = 'u32[144,128]{1,0:T(1,128)}', space=vmem, size = 0x12000, scoped, tag = 'internal scratch']
  %s0 = inlined_call_operand.vmem [shape: bf16[8,128], index: 0, kind: input, shape index: {}]
  %s1 = inlined_call_operand.vmem [shape: f32[8,128], index: 1, kind: input, shape index: {}]
  %s2 = inlined_call_operand.vmem [shape: f32[8,128], index: 2, kind: input, shape index: {}]
  %s3 = inlined_call_operand.vmem [shape: bf16[8,128], index: 3, kind: output, shape index: {}]
  %s4 = sld [smem:[#allocation0]]
  $region22: #{simsiam_forward.16} parent=0
    _
  %s6 = ssub.s32 1, %s4
  %s7 = scalar_select 0, %s6, %s4
  // Predicated region
  $region2: #{simsiam_forward.16} parent=0 // pred_check
    _
  $region3: #{simsiam_forward.16} parent=0 // pred_check_branch
    %9 = sbr.rel (0) target = $region5
  $region4: #{simsiam_forward.16} parent=0 // pred_region
    _
  $region5: #{simsiam_forward.16} parent=0 // pred_fallthru
    _
  // Predicated region
  $region6: #{simsiam_forward.16} parent=0 // pred_check
    _
  $region7: #{simsiam_forward.16} parent=0 // pred_check_branch
    %11 = sbr.rel (0) target = $region9
  $region8: #{simsiam_forward.16} parent=0 // pred_region
    _
  $region9: #{simsiam_forward.16} parent=0 // pred_fallthru
    _
  // Predicated region
  $region10: #{simsiam_forward.16} parent=0 // pred_check
    _
  $region11: #{simsiam_forward.16} parent=0 // pred_check_branch
    %13 = sbr.rel (0) target = $region13
  $region12: #{simsiam_forward.16} parent=0 // pred_region
    _
  $region13: #{simsiam_forward.16} parent=0 // pred_fallthru
    _
  %v14 = vld [vmem:[%s0] sm:$0xf]
  %v15 = vunpack.c.l.bf16 %v14
  %16 = vadd.xlane.f32.xlu0 %v15
  %v17 = vpop.xlane.xlu0 %16
  %v18 = vrcp.pop 128.0
  %v19 = vmul.f32 %v17, %v18
  %v20 = vmul.f32 %v15, %v15
  %21 = vadd.xlane.f32.xlu0 %v20
  %v22 = vpop.xlane.xlu0 %21
  %v23 = vmul.f32 %v22, %v18
  %v24 = vmul.f32 %v19, %v19
  %v25 = vsub.f32 %v23, %v24
  %v26 = vmax.f32 %v25, 0.0
  %v27 = vsub.f32 %v15, %v19
  %v28 = vadd.f32 %v26, 1e-05
  %v29 = vrsqrt.pop %v28
  %v30 = vmul.f32 %v27, %v29
  %v31 = vld [vmem:[%s1] sm:$0xff]
  %v32 = vmul.f32 %v30, %v31
  %v33 = vld [vmem:[%s2] sm:$0xff]
  %v34 = vadd.f32 %v32, %v33
  %vm35 = vcmp.ge.f32.partialorder %v34, 0.0
  %v36 = vmul.f32 %v34, 0.01
  %v37 = vsel %vm35, %v34, %v36
  %v38 = vpack.c.bf16 %v37, %v37
  %39 = vst [vmem:[%s3] sm:$0xf] %v38
  // Predicated region
  $region14: #{simsiam_forward.16} parent=0 // pred_check
    _
  $region15: #{simsiam_forward.16} parent=0 // pred_check_branch
    %41 = sbr.rel (0) target = $region17
  $region16: #{simsiam_forward.16} parent=0 // pred_region
    _
  $region17: #{simsiam_forward.16} parent=0 // pred_fallthru
    _
  // Predicated region
  $region18: #{simsiam_forward.16} parent=0 // pred_check
    _
  $region19: #{simsiam_forward.16} parent=0 // pred_check_branch
    %43 = sbr.rel (0) target = $region21
  $region20: #{simsiam_forward.16} parent=0 // pred_region
    _
  $region21: #{simsiam_forward.16} parent=0 // pred_fallthru
    _

// kernel: simsiam_forward.17
$region0: #{simsiam_forward.17}
  #allocation0 [shape = 'u32[]', space=smem, size = 0x4, offset = 0x4, fixed_abs, tag = 'smem constant byte address 0x4 - core index']
  #allocation1 [shape = 'u32[144,128]{1,0:T(1,128)}', space=vmem, size = 0x12000, scoped, tag = 'internal scratch']
  %s0 = inlined_call_operand.vmem [shape: bf16[8,8,64], index: 0, kind: input, shape index: {}]
  %s1 = inlined_call_operand.vmem [shape: bf16[8,64,128], index: 1, kind: input, shape index: {}]
  %s2 = inlined_call_operand.vmem [shape: f32[8,1], index: 2, kind: input, shape index: {}]
  %s3 = inlined_call_operand.vmem [shape: bf16[8,8,128], index: 3, kind: output, shape index: {}]
  %s4 = sld [smem:[#allocation0]]
  $region45: #{simsiam_forward.17} parent=0
    _
  %s6 = ssub.s32 1, %s4
  %s7 = scalar_select 0, %s6, %s4
  loop: start=0, step=1, limit=10
  $region2: #{simsiam_forward.17} parent=0 // loop_pre_header
    _
  $region3: #{simsiam_forward.17} parent=0 // loop_header
    %s9 = sphi 0, %s13
    %p10 = scmp.ge.s32.totalorder %s9, 10
    %s16 = sphi 0, %s28
    %s17 = sphi 0, %s24
    %s18 = sphi 0, %s16
    %s19 = sphi 0, %s17
    %s20 = sphi 0, %s18
    %s21 = sphi 0, %s19
    %s31 = sphi 0, %s33
    %s34 = sphi 0, %s31
    %s35 = sphi 0, %s34
    %s51 = sphi 0, %s35
    %s59 = sphi 0, %s61
    %s62 = sphi 0, %s59
    %s63 = sphi 0, %s62
    %s79 = sphi 0, %s63
    %s83 = sphi 0, %s83
    %s85 = sphi 0, %s83
    %s86 = sphi 0, %s85
    %s100 = sphi 0, %s86
    %s108 = sphi 0, %s110
    %s111 = sphi 0, %s108
    %s112 = sphi 0, %s111
    %s128 = sphi 0, %s112
  $region4: #{simsiam_forward.17} parent=0 // loop_header_branch
    %12 = sbr.rel (%p10) target = $region8
  $region5: #{simsiam_forward.17} parent=0 // loop_body
    %s14 = ssub.s32 %s9, 1
    %s15 = ssub.s32 %s9, 2
    %s22 = sadd.s32 1, %s17
    %p23 = scmp.ge.s32.totalorder %s22, 1
    %s24 = scalar_select %p23, 0, %s22
    %s25 = sadd.s32 1, %s16
    %s26 = scalar_select %p23, %s25, %s16
    %p27 = scmp.ge.s32.totalorder %s26, 8
    %s28 = scalar_select %p27, 0, %s26
    %s29 = ssub.s32 %s16, %s28
    %p30 = scmp.eq.s32.totalorder %s29, 0
    %s32 = sadd.s32 %s31, 1
    %s33 = scalar_select %p30, %s31, %s32
    %p36 = pneg %p30
    %p37 = scmp.eq.s32.totalorder %s9, 7
    %p38 = por %p36, %p37
    %p39 = scmp.ne.s32.totalorder %s31, %s34
    %p40 = scmp.eq.s32.totalorder %s9, 0
    %p41 = por %p39, %p40
    %p42 = scmp.ne.s32.totalorder %s31, %s34
    %p43 = scmp.eq.s32.totalorder %s14, 7
    %p44 = por %p42, %p43
    %p45 = scmp.ne.s32.totalorder %s34, %s35
    %p46 = scmp.eq.s32.totalorder %s14, 0
    %p47 = por %p45, %p46
    %p48 = scmp.ne.s32.totalorder %s34, %s35
    %p49 = scmp.eq.s32.totalorder %s15, 7
    %p50 = por %p48, %p49
    %p52 = scmp.ne.s32.totalorder %s35, %s51
    %p53 = scmp.eq.s32.totalorder %s15, 0
    %p54 = por %p52, %p53
    %s55 = ssub.s32 %s16, %s28
    %s56 = ssub.s32 %s17, %s24
    %s57 = sor.u32 %s55, %s56
    %p58 = scmp.eq.s32.totalorder %s57, 0
    %s60 = sadd.s32 %s59, 1
    %s61 = scalar_select %p58, %s59, %s60
    %p64 = pneg %p58
    %p65 = scmp.eq.s32.totalorder %s9, 7
    %p66 = por %p64, %p65
    %p67 = scmp.ne.s32.totalorder %s59, %s62
    %p68 = scmp.eq.s32.totalorder %s9, 0
    %p69 = por %p67, %p68
    %p70 = scmp.ne.s32.totalorder %s59, %s62
    %p71 = scmp.eq.s32.totalorder %s14, 7
    %p72 = por %p70, %p71
    %p73 = scmp.ne.s32.totalorder %s62, %s63
    %p74 = scmp.eq.s32.totalorder %s14, 0
    %p75 = por %p73, %p74
    %p76 = scmp.ne.s32.totalorder %s62, %s63
    %p77 = scmp.eq.s32.totalorder %s15, 7
    %p78 = por %p76, %p77
    %p80 = scmp.ne.s32.totalorder %s63, %s79
    %p81 = scmp.eq.s32.totalorder %s15, 0
    %p82 = por %p80, %p81
    %s84 = sadd.s32 %s83, 1
    %p87 = scmp.eq.s32.totalorder %s9, 7
    %p88 = scmp.ne.s32.totalorder %s83, %s85
    %p89 = scmp.eq.s32.totalorder %s9, 0
    %p90 = por %p88, %p89
    %p91 = scmp.ne.s32.totalorder %s83, %s85
    %p92 = scmp.eq.s32.totalorder %s14, 7
    %p93 = por %p91, %p92
    %p94 = scmp.ne.s32.totalorder %s85, %s86
    %p95 = scmp.eq.s32.totalorder %s14, 0
    %p96 = por %p94, %p95
    %p97 = scmp.ne.s32.totalorder %s85, %s86
    %p98 = scmp.eq.s32.totalorder %s15, 7
    %p99 = por %p97, %p98
    %p101 = scmp.ne.s32.totalorder %s86, %s100
    %p102 = scmp.eq.s32.totalorder %s15, 0
    %p103 = por %p101, %p102
    %s104 = ssub.s32 %s16, %s28
    %s105 = ssub.s32 %s17, %s24
    %s106 = sor.u32 %s104, %s105
    %p107 = scmp.eq.s32.totalorder %s106, 0
    %s109 = sadd.s32 %s108, 1
    %s110 = scalar_select %p107, %s108, %s109
    %p113 = pneg %p107
    %p114 = scmp.eq.s32.totalorder %s9, 7
    %p115 = por %p113, %p114
    %p116 = scmp.ne.s32.totalorder %s108, %s111
    %p117 = scmp.eq.s32.totalorder %s9, 0
    %p118 = por %p116, %p117
    %p119 = scmp.ne.s32.totalorder %s108, %s111
    %p120 = scmp.eq.s32.totalorder %s14, 7
    %p121 = por %p119, %p120
    %p122 = scmp.ne.s32.totalorder %s111, %s112
    %p123 = scmp.eq.s32.totalorder %s14, 0
    %p124 = por %p122, %p123
    %p125 = scmp.ne.s32.totalorder %s111, %s112
    %p126 = scmp.eq.s32.totalorder %s15, 7
    %p127 = por %p125, %p126
    %p129 = scmp.ne.s32.totalorder %s112, %s128
    %p130 = scmp.eq.s32.totalorder %s15, 0
    %p131 = por %p129, %p130
    %p132 = scmp.le.s32.totalorder 1, %s9
    %p133 = scmp.lt.s32.totalorder %s9, 9
    %p134 = pnand %p132, %p133
    %p135 = pneg %p134
    // Predicated region
    $region9: #{simsiam_forward.17} parent=5 // pred_check
      _
    $region10: #{simsiam_forward.17} parent=5 // pred_check_branch
      %137 = sbr.rel (%p134) target = $region12
    $region11: #{simsiam_forward.17} parent=5 // pred_region
      %s138 = ssub.s32 %s9, 1
      // Predicated region
      $region13: #{simsiam_forward.17} parent=11 // pred_check
        %p139 = pneg %p96
      $region14: #{simsiam_forward.17} parent=11 // pred_check_branch
        %141 = sbr.rel (%p139) target = $region16
      $region15: #{simsiam_forward.17} parent=11 // pred_region
        _
      $region16: #{simsiam_forward.17} parent=11 // pred_fallthru
        _
    $region12: #{simsiam_forward.17} parent=5 // pred_fallthru
      _
    %p142 = scmp.lt.s32.totalorder %s9, 8
    // Predicated region
    $region17: #{simsiam_forward.17} parent=5 // pred_check
      %p143 = pneg %p142
    $region18: #{simsiam_forward.17} parent=5 // pred_check_branch
      %145 = sbr.rel (%p143) target = $region20
    $region19: #{simsiam_forward.17} parent=5 // pred_region
      // Predicated region
      $region21: #{simsiam_forward.17} parent=19 // pred_check
        %p146 = pneg %p41
      $region22: #{simsiam_forward.17} parent=19 // pred_check_branch
        %148 = sbr.rel (%p146) target = $region24
      $region23: #{simsiam_forward.17} parent=19 // pred_region
        %p149 = scmp.lt.s32.totalorder %s16, 7
        %s150 = scalar_select %p149, %s16, 7
        %s151 = smul.addr %s150, 4
        %s152 = scalar_lea.vmem %s0, %s151
      $region24: #{simsiam_forward.17} parent=19 // pred_fallthru
        _
      // Predicated region
      $region25: #{simsiam_forward.17} parent=19 // pred_check
        %p153 = pneg %p69
      $region26: #{simsiam_forward.17} parent=19 // pred_check_branch
        %155 = sbr.rel (%p153) target = $region28
      $region27: #{simsiam_forward.17} parent=19 // pred_region
        %p156 = scmp.lt.s32.totalorder %s16, 7
        %s157 = scalar_select %p156, %s16, 7
        %p158 = scmp.lt.s32.totalorder %s17, 0
        %s159 = scalar_select %p158, %s17, 0
        %s160 = smul.addr %s157, 8
        %s161 = sadd.s32 %s159, %s160
        %s162 = smul.addr %s161, 4
        %s163 = scalar_lea.vmem %s1, %s162
      $region28: #{simsiam_forward.17} parent=19 // pred_fallthru
        _
    $region20: #{simsiam_forward.17} parent=5 // pred_fallthru
      _
    %p164 = scmp.le.s32.totalorder 1, %s9
    %p165 = scmp.lt.s32.totalorder %s9, 9
    %p166 = pnand %p164, %p165
    %p167 = pneg %p166
    // Predicated region
    $region29: #{simsiam_forward.17} parent=5 // pred_check
      _
    $region30: #{simsiam_forward.17} parent=5 // pred_check_branch
      %169 = sbr.rel (%p166) target = $region32
    $region31: #{simsiam_forward.17} parent=5 // pred_region
      %s170 = ssub.s32 %s9, 1
      %p171 = scmp.lt.s32.totalorder %s18, 7
      %s172 = scalar_select %p171, %s18, 7
      %s173 = smul.addr %s172, 4
      %s174 = scalar_lea.vmem %s0, %s173
      %p175 = pneg %p47
      %p176 = pneg %p44
      %p177 = scmp.lt.s32.totalorder %s18, 7
      %s178 = scalar_select %p177, %s18, 7
      %p179 = scmp.lt.s32.totalorder %s19, 0
      %s180 = scalar_select %p179, %s19, 0
      %s181 = smul.addr %s178, 8
      %s182 = sadd.s32 %s180, %s181
      %s183 = smul.addr %s182, 4
      %s184 = scalar_lea.vmem %s1, %s183
      %p185 = pneg %p75
      %p186 = pneg %p72
      %p187 = pneg %p96
      %p188 = pneg %p93
      %p189 = pneg %p124
      %p190 = pneg %p121
      %p191 = scmp.lt.s32.totalorder %s18, 7
      %s192 = scalar_select %p191, %s18, 7
      %p193 = scmp.lt.s32.totalorder %s19, 0
      %s194 = scalar_select %p193, %s19, 0
      %s195 = sadd.s32 %s194, %s192
      %s196 = smul.addr %s195, 4
      %s197 = scalar_lea.vmem %s3, %s196
      %p198 = scmp.lt.s32.totalorder %s18, 7
      %s199 = scalar_select %p198, %s18, 7
      %s200 = smul.addr %s199, 4
      %s201 = scalar_lea.vmem %s0, %s200
      %p202 = scmp.lt.s32.totalorder %s18, 7
      %s203 = scalar_select %p202, %s18, 7
      %p204 = scmp.lt.s32.totalorder %s19, 0
      %s205 = scalar_select %p204, %s19, 0
      %s206 = smul.addr %s203, 8
      %s207 = sadd.s32 %s205, %s206
      %s208 = smul.addr %s207, 4
      %s209 = scalar_lea.vmem %s1, %s208
      %p210 = scmp.lt.s32.totalorder %s18, 7
      %s211 = scalar_select %p210, %s18, 7
      %p212 = scmp.lt.s32.totalorder %s19, 0
      %s213 = scalar_select %p212, %s19, 0
      %s214 = sadd.s32 %s213, %s211
      %s215 = smul.addr %s214, 4
      %s216 = scalar_lea.vmem %s3, %s215
      %v218 = vld [vmem:[%s201] sm:$0xf]
      %v219 = vld [vmem:[%s209] sm:$0xf]
      %v220 = vld [vmem:[%s209 + $0x4] sm:$0xf]
      %v221 = vld [vmem:[%s209 + $0x8] sm:$0xf]
      %v222 = vld [vmem:[%s209 + $0xc] sm:$0xf]
      %v223 = vld [vmem:[%s209 + $0x10] sm:$0xf]
      %v224 = vld [vmem:[%s209 + $0x14] sm:$0xf]
      %v225 = vld [vmem:[%s209 + $0x18] sm:$0xf]
      %v226 = vld [vmem:[%s209 + $0x1c] sm:$0xf]
      %v227 = vld [vmem:[%s2] sm:$0xff]
      %229 = vset.pattern.permute.xlu0 0
      %230 = vperm.xlu0 %229, %v227
      %v231 = vpop.permute.xlu0 %230
      %v241 = vunpack.c.l.b16 %v219
      %v242 = vunpack.c.l.b16 %v220
      %v243 = vunpack.c.l.b16 %v221
      %v244 = vunpack.c.l.b16 %v222
      %v245 = vunpack.c.l.b16 %v223
      %v246 = vunpack.c.l.b16 %v224
      %v247 = vunpack.c.l.b16 %v225
      %v248 = vunpack.c.l.b16 %v226
      %v249 = vpack.c.b16 %v242, %v241
      %v250 = vpack.c.b16 %v244, %v243
      %v251 = vpack.c.b16 %v246, %v245
      %v252 = vpack.c.b16 %v248, %v247
      %vm257 = vcmask 523264
      %v259 = vsel %vm257, %v218, 0
      %261 = vmatprep.subr.bf16.mxu0 0
      %262 = vmatpush1.bf16.msra.mxu0 0
      %263 = vmatprep.subr.bf16.mxu0 0
      %264 = vmatpush1.bf16.msra.mxu0 0
      %265 = vmatprep.subr.bf16.mxu0 0
      %266 = vmatpush1.bf16.msra.mxu0 0
      %267 = vmatprep.subr.bf16.mxu0 0
      %268 = vmatpush1.bf16.msra.mxu0 0
      %269 = vmatprep.subr.bf16.mxu0 0
      %270 = vmatpush1.bf16.msra.mxu0 %v252
      %271 = vmatprep.subr.bf16.mxu0 0
      %272 = vmatpush1.bf16.msra.mxu0 %v251
      %273 = vmatprep.subr.bf16.mxu0 0
      %274 = vmatpush1.bf16.msra.mxu0 %v250
      %275 = vmatprep.subr.bf16.mxu0 0
      %276 = vmatpush1.bf16.msra.mxu0 %v249
      %277 = vmatprep.subr.bf16.mxu0 0
      %278 = vmatpush2.bf16.msra.mxu0 0
      %279 = vmatprep.subr.bf16.mxu0 0
      %280 = vmatpush2.bf16.msra.mxu0 0
      %281 = vmatprep.subr.bf16.mxu0 0
      %282 = vmatpush2.bf16.msra.mxu0 0
      %283 = vmatprep.subr.bf16.mxu0 0
      %284 = vmatpush2.bf16.msra.mxu0 0
      %285 = vmatprep.subr.bf16.mxu0 0
      %286 = vmatpush2.bf16.msra.mxu0 0
      %287 = vmatprep.subr.bf16.mxu0 0
      %288 = vmatpush2.bf16.msra.mxu0 0
      %289 = vmatprep.subr.bf16.mxu0 0
      %290 = vmatpush2.bf16.msra.mxu0 0
      %291 = vmatprep.subr.bf16.mxu0 0
      %292 = vmatpush2.bf16.msra.mxu0 0
      %293 = vmatprep.mubr.bf16.mxu0 0
      %294 = vmatmul.mubr.bf16.gmra.mxu0 %v259
      %v295 = vpop.f32.mrf.mxu0
      %v296 = vadd.f32 %v231, %v295
      %v297 = vpop.f32.mrf.mxu0
      %v298 = vpop.f32.mrf.mxu0
      %v299 = vpop.f32.mrf.mxu0
      %300 = vdwg.mxu0
      %v301 = vpack.c.bf16 %v296, %v296
      %302 = vst [vmem:[%s216] sm:$0xf] %v301
      %p303 = scmp.lt.s32.totalorder %s18, 7
      %s304 = scalar_select %p303, %s18, 7
      %p305 = scmp.lt.s32.totalorder %s19, 0
      %s306 = scalar_select %p305, %s19, 0
      %s307 = sadd.s32 %s306, %s304
      %s308 = smul.addr %s307, 4
      %s309 = scalar_lea.vmem %s3, %s308
      // Predicated region
      $region33: #{simsiam_forward.17} parent=31 // pred_check
        %p310 = pneg %p121
      $region34: #{simsiam_forward.17} parent=31 // pred_check_branch
        %312 = sbr.rel (%p310) target = $region36
      $region35: #{simsiam_forward.17} parent=31 // pred_region
        _
      $region36: #{simsiam_forward.17} parent=31 // pred_fallthru
        _
    $region32: #{simsiam_forward.17} parent=5 // pred_fallthru
      _
    %p313 = scmp.le.s32.totalorder 2, %s9
    // Predicated region
    $region37: #{simsiam_forward.17} parent=5 // pred_check
      %p314 = pneg %p313
    $region38: #{simsiam_forward.17} parent=5 // pred_check_branch
      %316 = sbr.rel (%p314) target = $region40
    $region39: #{simsiam_forward.17} parent=5 // pred_region
      %s317 = ssub.s32 %s9, 2
      // Predicated region
      $region41: #{simsiam_forward.17} parent=39 // pred_check
        %p318 = pneg %p127
      $region42: #{simsiam_forward.17} parent=39 // pred_check_branch
        %320 = sbr.rel (%p318) target = $region44
      $region43: #{simsiam_forward.17} parent=39 // pred_region
        %p321 = scmp.lt.s32.totalorder %s20, 7
        %s322 = scalar_select %p321, %s20, 7
        %p323 = scmp.lt.s32.totalorder %s21, 0
        %s324 = scalar_select %p323, %s21, 0
        %s325 = sadd.s32 %s324, %s322
        %s326 = smul.addr %s325, 4
        %s327 = scalar_lea.vmem %s3, %s326
      $region44: #{simsiam_forward.17} parent=39 // pred_fallthru
        _
    $region40: #{simsiam_forward.17} parent=5 // pred_fallthru
      _
  $region6: #{simsiam_forward.17} parent=0 // loop_footer
    %s13 = sadd.s32 1, %s9
  $region7: #{simsiam_forward.17} parent=0 // loop_footer_branch
    %8 = sbr.rel target = $region3
  $region8: #{simsiam_forward.17} parent=0 // loop_exit
    _

// kernel: simsiam_forward.18
$region0: #{simsiam_forward.18}
  #allocation0 [shape = 'u32[]', space=smem, size = 0x4, offset = 0x4, fixed_abs, tag = 'smem constant byte address 0x4 - core index']
  #allocation1 [shape = 'u32[144,128]{1,0:T(1,128)}', space=vmem, size = 0x12000, scoped, tag = 'internal scratch']
  %s0 = inlined_call_operand.vmem [shape: bf16[8,1024], index: 0, kind: input, shape index: {}]
  %s1 = inlined_call_operand.vmem [shape: f32[8,1024], index: 1, kind: input, shape index: {}]
  %s2 = inlined_call_operand.vmem [shape: f32[8,1024], index: 2, kind: input, shape index: {}]
  %s3 = inlined_call_operand.vmem [shape: bf16[8,1024], index: 3, kind: output, shape index: {}]
  %s4 = sld [smem:[#allocation0]]
  $region22: #{simsiam_forward.18} parent=0
    _
  %s6 = ssub.s32 1, %s4
  %s7 = scalar_select 0, %s6, %s4
  // Predicated region
  $region2: #{simsiam_forward.18} parent=0 // pred_check
    _
  $region3: #{simsiam_forward.18} parent=0 // pred_check_branch
    %9 = sbr.rel (0) target = $region5
  $region4: #{simsiam_forward.18} parent=0 // pred_region
    _
  $region5: #{simsiam_forward.18} parent=0 // pred_fallthru
    _
  // Predicated region
  $region6: #{simsiam_forward.18} parent=0 // pred_check
    _
  $region7: #{simsiam_forward.18} parent=0 // pred_check_branch
    %11 = sbr.rel (0) target = $region9
  $region8: #{simsiam_forward.18} parent=0 // pred_region
    _
  $region9: #{simsiam_forward.18} parent=0 // pred_fallthru
    _
  // Predicated region
  $region10: #{simsiam_forward.18} parent=0 // pred_check
    _
  $region11: #{simsiam_forward.18} parent=0 // pred_check_branch
    %13 = sbr.rel (0) target = $region13
  $region12: #{simsiam_forward.18} parent=0 // pred_region
    _
  $region13: #{simsiam_forward.18} parent=0 // pred_fallthru
    _
  %v14 = vld [vmem:[%s0] sm:$0xff]
  %v15 = vld [vmem:[%s0 + $0x8] sm:$0xff]
  %v16 = vld [vmem:[%s0 + $0x10] sm:$0xff]
  %v17 = vld [vmem:[%s0 + $0x18] sm:$0xff]
  %v18 = vunpack.c.l.bf16 %v14
  %v19 = vunpack.c.h.bf16 %v14
  %v20 = vunpack.c.l.bf16 %v15
  %v21 = vunpack.c.h.bf16 %v15
  %v22 = vunpack.c.l.bf16 %v16
  %v23 = vunpack.c.h.bf16 %v16
  %v24 = vunpack.c.l.bf16 %v17
  %v25 = vunpack.c.h.bf16 %v17
  %v26 = vadd.f32 %v18, %v19
  %v27 = vadd.f32 %v26, %v20
  %v28 = vadd.f32 %v27, %v21
  %v29 = vadd.f32 %v28, %v22
  %v30 = vadd.f32 %v29, %v23
  %v31 = vadd.f32 %v30, %v24
  %v32 = vadd.f32 %v31, %v25
  %33 = vadd.xlane.f32.xlu0 %v32
  %v34 = vpop.xlane.xlu0 %33
  %v35 = vrcp.pop 1024.0
  %v36 = vmul.f32 %v34, %v35
  %v37 = vmul.f32 %v18, %v18
  %v38 = vmul.f32 %v19, %v19
  %v39 = vmul.f32 %v20, %v20
  %v40 = vmul.f32 %v21, %v21
  %v41 = vmul.f32 %v22, %v22
  %v42 = vmul.f32 %v23, %v23
  %v43 = vmul.f32 %v24, %v24
  %v44 = vmul.f32 %v25, %v25
  %v45 = vadd.f32 %v37, %v38
  %v46 = vadd.f32 %v45, %v39
  %v47 = vadd.f32 %v46, %v40
  %v48 = vadd.f32 %v47, %v41
  %v49 = vadd.f32 %v48, %v42
  %v50 = vadd.f32 %v49, %v43
  %v51 = vadd.f32 %v50, %v44
  %52 = vadd.xlane.f32.xlu0 %v51
  %v53 = vpop.xlane.xlu0 %52
  %v54 = vmul.f32 %v53, %v35
  %v55 = vmul.f32 %v36, %v36
  %v56 = vsub.f32 %v54, %v55
  %v57 = vmax.f32 %v56, 0.0
  %v58 = vsub.f32 %v18, %v36
  %v59 = vsub.f32 %v19, %v36
  %v60 = vsub.f32 %v20, %v36
  %v61 = vsub.f32 %v21, %v36
  %v62 = vsub.f32 %v22, %v36
  %v63 = vsub.f32 %v23, %v36
  %v64 = vsub.f32 %v24, %v36
  %v65 = vsub.f32 %v25, %v36
  %v66 = vadd.f32 %v57, 1e-05
  %v67 = vrsqrt.pop %v66
  %v68 = vmul.f32 %v58, %v67
  %v69 = vmul.f32 %v59, %v67
  %v70 = vmul.f32 %v60, %v67
  %v71 = vmul.f32 %v61, %v67
  %v72 = vmul.f32 %v62, %v67
  %v73 = vmul.f32 %v63, %v67
  %v74 = vmul.f32 %v64, %v67
  %v75 = vmul.f32 %v65, %v67
  %v76 = vld [vmem:[%s1] sm:$0xff]
  %v77 = vld [vmem:[%s1 + $0x8] sm:$0xff]
  %v78 = vld [vmem:[%s1 + $0x10] sm:$0xff]
  %v79 = vld [vmem:[%s1 + $0x18] sm:$0xff]
  %v80 = vld [vmem:[%s1 + $0x20] sm:$0xff]
  %v81 = vld [vmem:[%s1 + $0x28] sm:$0xff]
  %v82 = vld [vmem:[%s1 + $0x30] sm:$0xff]
  %v83 = vld [vmem:[%s1 + $0x38] sm:$0xff]
  %v84 = vmul.f32 %v68, %v76
  %v85 = vmul.f32 %v69, %v77
  %v86 = vmul.f32 %v70, %v78
  %v87 = vmul.f32 %v71, %v79
  %v88 = vmul.f32 %v72, %v80
  %v89 = vmul.f32 %v73, %v81
  %v90 = vmul.f32 %v74, %v82
  %v91 = vmul.f32 %v75, %v83
  %v92 = vld [vmem:[%s2] sm:$0xff]
  %v93 = vld [vmem:[%s2 + $0x8] sm:$0xff]
  %v94 = vld [vmem:[%s2 + $0x10] sm:$0xff]
  %v95 = vld [vmem:[%s2 + $0x18] sm:$0xff]
  %v96 = vld [vmem:[%s2 + $0x20] sm:$0xff]
  %v97 = vld [vmem:[%s2 + $0x28] sm:$0xff]
  %v98 = vld [vmem:[%s2 + $0x30] sm:$0xff]
  %v99 = vld [vmem:[%s2 + $0x38] sm:$0xff]
  %v100 = vadd.f32 %v84, %v92
  %v101 = vadd.f32 %v85, %v93
  %v102 = vadd.f32 %v86, %v94
  %v103 = vadd.f32 %v87, %v95
  %v104 = vadd.f32 %v88, %v96
  %v105 = vadd.f32 %v89, %v97
  %v106 = vadd.f32 %v90, %v98
  %v107 = vadd.f32 %v91, %v99
  %vm108 = vcmp.ge.f32.partialorder %v100, 0.0
  %vm109 = vcmp.ge.f32.partialorder %v101, 0.0
  %vm110 = vcmp.ge.f32.partialorder %v102, 0.0
  %vm111 = vcmp.ge.f32.partialorder %v103, 0.0
  %vm112 = vcmp.ge.f32.partialorder %v104, 0.0
  %vm113 = vcmp.ge.f32.partialorder %v105, 0.0
  %vm114 = vcmp.ge.f32.partialorder %v106, 0.0
  %vm115 = vcmp.ge.f32.partialorder %v107, 0.0
  %v116 = vmul.f32 %v100, 0.01
  %v117 = vmul.f32 %v101, 0.01
  %v118 = vmul.f32 %v102, 0.01
  %v119 = vmul.f32 %v103, 0.01
  %v120 = vmul.f32 %v104, 0.01
  %v121 = vmul.f32 %v105, 0.01
  %v122 = vmul.f32 %v106, 0.01
  %v123 = vmul.f32 %v107, 0.01
  %v124 = vsel %vm108, %v100, %v116
  %v125 = vsel %vm109, %v101, %v117
  %v126 = vsel %vm110, %v102, %v118
  %v127 = vsel %vm111, %v103, %v119
  %v128 = vsel %vm112, %v104, %v120
  %v129 = vsel %vm113, %v105, %v121
  %v130 = vsel %vm114, %v106, %v122
  %v131 = vsel %vm115, %v107, %v123
  %v132 = vpack.c.bf16 %v124, %v124
  %v133 = vpack.c.bf16 %v125, %v125
  %v134 = vpack.c.bf16 %v126, %v126
  %v135 = vpack.c.bf16 %v127, %v127
  %v136 = vpack.c.bf16 %v128, %v128
  %v137 = vpack.c.bf16 %v129, %v129
  %v138 = vpack.c.bf16 %v130, %v130
  %v139 = vpack.c.bf16 %v131, %v131
  %v148 = vunpack.c.l.b16 %v132
  %v149 = vunpack.c.l.b16 %v133
  %v150 = vunpack.c.l.b16 %v134
  %v151 = vunpack.c.l.b16 %v135
  %v152 = vunpack.c.l.b16 %v136
  %v153 = vunpack.c.l.b16 %v137
  %v154 = vunpack.c.l.b16 %v138
  %v155 = vunpack.c.l.b16 %v139
  %v156 = vpack.c.b16 %v149, %v148
  %v157 = vpack.c.b16 %v151, %v150
  %v158 = vpack.c.b16 %v153, %v152
  %v159 = vpack.c.b16 %v155, %v154
  %164 = vst [vmem:[%s3] sm:$0xff] %v156
  %165 = vst [vmem:[%s3 + $0x8] sm:$0xff] %v157
  %166 = vst [vmem:[%s3 + $0x10] sm:$0xff] %v158
  %167 = vst [vmem:[%s3 + $0x18] sm:$0xff] %v159
  // Predicated region
  $region14: #{simsiam_forward.18} parent=0 // pred_check
    _
  $region15: #{simsiam_forward.18} parent=0 // pred_check_branch
    %169 = sbr.rel (0) target = $region17
  $region16: #{simsiam_forward.18} parent=0 // pred_region
    _
  $region17: #{simsiam_forward.18} parent=0 // pred_fallthru
    _
  // Predicated region
  $region18: #{simsiam_forward.18} parent=0 // pred_check
    _
  $region19: #{simsiam_forward.18} parent=0 // pred_check_branch
    %171 = sbr.rel (0) target = $region21
  $region20: #{simsiam_forward.18} parent=0 // pred_region
    _
  $region21: #{simsiam_forward.18} parent=0 // pred_fallthru
    _

// kernel: squeeze.5
$region0: #{squeeze.5}
  %s0 = inlined_call_operand.vmem [shape: f32[1,2,1024], index: 0, kind: input, shape index: {}]
  %s1 = inlined_call_operand.vmem [shape: f32[2,2,512], index: 1, kind: output, shape index: {}]
  $region1: #{squeeze.5} parent=0
    #allocation0 [shape = 'u8[32768]{0}', space=vmem, size = 0x8000, scoped, tag = 'scoped mem for output reshape']
    #allocation1 [shape = 'u8[32768]{0}', space=vmem, size = 0x8000, scoped, tag = 'scoped mem for input reshape']
    %s3 = sshll.u32 1, 2
    %s4 = ssub.s32 %s3, 1
    %s5 = smul.addr 2, 7
    %s6 = scalar_lea.vmem %s0, %s5
    %v7 = vld [vmem:[%s6] sm:%s4]
    %s8 = scalar_lea.vmem [#allocation1], 56
    %9 = vst [vmem:[%s8] sm:%s4] %v7
    %s10 = smul.addr 2, 6
    %s11 = scalar_lea.vmem %s0, %s10
    %v12 = vld [vmem:[%s11] sm:%s4]
    %s13 = scalar_lea.vmem [#allocation1], 48
    %14 = vst [vmem:[%s13] sm:%s4] %v12
    %s15 = smul.addr 2, 5
    %s16 = scalar_lea.vmem %s0, %s15
    %v17 = vld [vmem:[%s16] sm:%s4]
    %s18 = scalar_lea.vmem [#allocation1], 40
    %19 = vst [vmem:[%s18] sm:%s4] %v17
    %s20 = smul.addr 2, 4
    %s21 = scalar_lea.vmem %s0, %s20
    %v22 = vld [vmem:[%s21] sm:%s4]
    %s23 = scalar_lea.vmem [#allocation1], 32
    %24 = vst [vmem:[%s23] sm:%s4] %v22
    %s25 = smul.addr 2, 3
    %s26 = scalar_lea.vmem %s0, %s25
    %v27 = vld [vmem:[%s26] sm:%s4]
    %s28 = scalar_lea.vmem [#allocation1], 24
    %29 = vst [vmem:[%s28] sm:%s4] %v27
    %s30 = smul.addr 2, 2
    %s31 = scalar_lea.vmem %s0, %s30
    %v32 = vld [vmem:[%s31] sm:%s4]
    %s33 = scalar_lea.vmem [#allocation1], 16
    %34 = vst [vmem:[%s33] sm:%s4] %v32
    %s35 = scalar_lea.vmem %s0, 2
    %v36 = vld [vmem:[%s35] sm:%s4]
    %s37 = scalar_lea.vmem [#allocation1], 8
    %38 = vst [vmem:[%s37] sm:%s4] %v36
    %v39 = vld [vmem:[%s0] sm:%s4]
    %40 = vst [vmem:[#allocation1] sm:%s4] %v39
    %v41 = vld [vmem:[#allocation1] sm:$0x3]
    %42 = vst [vmem:[#allocation0] sm:$0x1] %v41
    %s43 = scalar_lea.vmem [#allocation0], 31
    %44 = vst [vmem:[%s43] sm:$0x2] %v41
    %s45 = scalar_lea.vmem [#allocation1], 8
    %v46 = vld [vmem:[%s45] sm:$0x3]
    %s47 = scalar_lea.vmem [#allocation0], 8
    %48 = vst [vmem:[%s47] sm:$0x1] %v46
    %s49 = scalar_lea.vmem [#allocation0], 39
    %50 = vst [vmem:[%s49] sm:$0x2] %v46
    %s51 = scalar_lea.vmem [#allocation1], 16
    %v52 = vld [vmem:[%s51] sm:$0x3]
    %s53 = scalar_lea.vmem [#allocation0], 16
    %54 = vst [vmem:[%s53] sm:$0x1] %v52
    %s55 = scalar_lea.vmem [#allocation0], 47
    %56 = vst [vmem:[%s55] sm:$0x2] %v52
    %s57 = scalar_lea.vmem [#allocation1], 24
    %v58 = vld [vmem:[%s57] sm:$0x3]
    %s59 = scalar_lea.vmem [#allocation0], 24
    %60 = vst [vmem:[%s59] sm:$0x1] %v58
    %s61 = scalar_lea.vmem [#allocation0], 55
    %62 = vst [vmem:[%s61] sm:$0x2] %v58
    %s63 = scalar_lea.vmem [#allocation1], 32
    %v64 = vld [vmem:[%s63] sm:$0x3]
    %s65 = scalar_lea.vmem [#allocation0], 1
    %66 = vst [vmem:[%s65] sm:$0x1] %v64
    %s67 = scalar_lea.vmem [#allocation0], 32
    %68 = vst [vmem:[%s67] sm:$0x2] %v64
    %s69 = scalar_lea.vmem [#allocation1], 40
    %v70 = vld [vmem:[%s69] sm:$0x3]
    %s71 = scalar_lea.vmem [#allocation0], 9
    %72 = vst [vmem:[%s71] sm:$0x1] %v70
    %s73 = scalar_lea.vmem [#allocation0], 40
    %74 = vst [vmem:[%s73] sm:$0x2] %v70
    %s75 = scalar_lea.vmem [#allocation1], 48
    %v76 = vld [vmem:[%s75] sm:$0x3]
    %s77 = scalar_lea.vmem [#allocation0], 17
    %78 = vst [vmem:[%s77] sm:$0x1] %v76
    %s79 = scalar_lea.vmem [#allocation0], 48
    %80 = vst [vmem:[%s79] sm:$0x2] %v76
    %s81 = scalar_lea.vmem [#allocation1], 56
    %v82 = vld [vmem:[%s81] sm:$0x3]
    %s83 = scalar_lea.vmem [#allocation0], 25
    %84 = vst [vmem:[%s83] sm:$0x1] %v82
    %s85 = scalar_lea.vmem [#allocation0], 56
    %86 = vst [vmem:[%s85] sm:$0x2] %v82
    %s88 = sshll.u32 1, 2
    %s89 = ssub.s32 %s88, 1
    %v91 = vld [vmem:[#allocation0] sm:%s89]
    %s92 = sshll.u32 1, 2
    %s93 = ssub.s32 %s92, 1
    %94 = vst [vmem:[%s1] sm:%s93] %v91
    %s95 = scalar_lea.vmem [#allocation0], 8
    %v96 = vld [vmem:[%s95] sm:%s89]
    %s97 = sshll.u32 1, 2
    %s98 = ssub.s32 %s97, 1
    %s99 = scalar_lea.vmem %s1, 2
    %100 = vst [vmem:[%s99] sm:%s98] %v96
    %s101 = scalar_lea.vmem [#allocation0], 16
    %v102 = vld [vmem:[%s101] sm:%s89]
    %s103 = sshll.u32 1, 2
    %s104 = ssub.s32 %s103, 1
    %s105 = smul.addr 2, 2
    %s106 = scalar_lea.vmem %s1, %s105
    %107 = vst [vmem:[%s106] sm:%s104] %v102
    %s108 = scalar_lea.vmem [#allocation0], 24
    %v109 = vld [vmem:[%s108] sm:%s89]
    %s110 = sshll.u32 1, 2
    %s111 = ssub.s32 %s110, 1
    %s112 = smul.addr 2, 3
    %s113 = scalar_lea.vmem %s1, %s112
    %114 = vst [vmem:[%s113] sm:%s111] %v109
    %s115 = scalar_lea.vmem [#allocation0], 32
    %v116 = vld [vmem:[%s115] sm:%s89]
    %s117 = sshll.u32 1, 2
    %s118 = ssub.s32 %s117, 1
    %s119 = smul.addr 2, 4
    %s120 = scalar_lea.vmem %s1, %s119
    %121 = vst [vmem:[%s120] sm:%s118] %v116
    %s122 = scalar_lea.vmem [#allocation0], 40
    %v123 = vld [vmem:[%s122] sm:%s89]
    %s124 = sshll.u32 1, 2
    %s125 = ssub.s32 %s124, 1
    %s126 = smul.addr 2, 5
    %s127 = scalar_lea.vmem %s1, %s126
    %128 = vst [vmem:[%s127] sm:%s125] %v123
    %s129 = scalar_lea.vmem [#allocation0], 48
    %v130 = vld [vmem:[%s129] sm:%s89]
    %s131 = sshll.u32 1, 2
    %s132 = ssub.s32 %s131, 1
    %s133 = smul.addr 2, 6
    %s134 = scalar_lea.vmem %s1, %s133
    %135 = vst [vmem:[%s134] sm:%s132] %v130
    %s136 = scalar_lea.vmem [#allocation0], 56
    %v137 = vld [vmem:[%s136] sm:%s89]
    %s138 = sshll.u32 1, 2
    %s139 = ssub.s32 %s138, 1
    %s140 = smul.addr 2, 7
    %s141 = scalar_lea.vmem %s1, %s140
    %142 = vst [vmem:[%s141] sm:%s139] %v137

// kernel: simsiam_forward.19
$region0: #{simsiam_forward.19}
  #allocation0 [shape = 'u32[]', space=smem, size = 0x4, offset = 0x4, fixed_abs, tag = 'smem constant byte address 0x4 - core index']
  #allocation1 [shape = 'u32[144,128]{1,0:T(1,128)}', space=vmem, size = 0x12000, scoped, tag = 'internal scratch']
  %s0 = inlined_call_operand.vmem [shape: bf16[1,2,224], index: 0, kind: input, shape index: {}]
  %s1 = inlined_call_operand.vmem [shape: bf16[1,224,1024], index: 1, kind: input, shape index: {}]
  %s2 = inlined_call_operand.vmem [shape: f32[2,1], index: 2, kind: input, shape index: {}]
  %s3 = inlined_call_operand.vmem [shape: f32[1,2,1024], index: 3, kind: output, shape index: {}]
  %s4 = sld [smem:[#allocation0]]
  $region68: #{simsiam_forward.19} parent=0
    _
  %s6 = ssub.s32 1, %s4
  %s7 = scalar_select 0, %s6, %s4
  $region1: #{simsiam_forward.19} parent=0
    #allocation2 [shape = 'u8[458752]{0}', space=vmem, size = 0x70000, scoped, tag = 'input window, operand 1']
    loop: start=0, step=1, limit=4
    $region2: #{simsiam_forward.19} parent=1 // loop_pre_header
      _
    $region3: #{simsiam_forward.19} parent=1 // loop_header
      %s9 = sphi 0, %s13
      %p10 = scmp.ge.s32.totalorder %s9, 4
      %s16 = sphi 0, %s28
      %s17 = sphi 0, %s24
      %s18 = sphi 0, %s16
      %s19 = sphi 0, %s17
      %s20 = sphi 0, %s18
      %s21 = sphi 0, %s19
      %s31 = sphi 0, %s33
      %s34 = sphi 0, %s31
      %s35 = sphi 0, %s34
      %s51 = sphi 0, %s35
      %s59 = sphi 0, %s61
      %s62 = sphi 0, %s59
      %s63 = sphi 0, %s62
      %s79 = sphi 0, %s63
      %s83 = sphi 0, %s83
      %s85 = sphi 0, %s83
      %s86 = sphi 0, %s85
      %s100 = sphi 0, %s86
      %s108 = sphi 0, %s110
      %s111 = sphi 0, %s108
      %s112 = sphi 0, %s111
      %s128 = sphi 0, %s112
    $region4: #{simsiam_forward.19} parent=1 // loop_header_branch
      %12 = sbr.rel (%p10) target = $region8
    $region5: #{simsiam_forward.19} parent=1 // loop_body
      %s14 = ssub.s32 %s9, 1
      %s15 = ssub.s32 %s9, 2
      %s22 = sadd.s32 1, %s17
      %p23 = scmp.ge.s32.totalorder %s22, 2
      %s24 = scalar_select %p23, 0, %s22
      %s25 = sadd.s32 1, %s16
      %s26 = scalar_select %p23, %s25, %s16
      %p27 = scmp.ge.s32.totalorder %s26, 1
      %s28 = scalar_select %p27, 0, %s26
      %s29 = ssub.s32 %s16, %s28
      %p30 = scmp.eq.s32.totalorder %s29, 0
      %s32 = sadd.s32 %s31, 1
      %s33 = scalar_select %p30, %s31, %s32
      %p36 = pneg %p30
      %p37 = scmp.eq.s32.totalorder %s9, 1
      %p38 = por %p36, %p37
      %p39 = scmp.ne.s32.totalorder %s31, %s34
      %p40 = scmp.eq.s32.totalorder %s9, 0
      %p41 = por %p39, %p40
      %p42 = scmp.ne.s32.totalorder %s31, %s34
      %p43 = scmp.eq.s32.totalorder %s14, 1
      %p44 = por %p42, %p43
      %p45 = scmp.ne.s32.totalorder %s34, %s35
      %p46 = scmp.eq.s32.totalorder %s14, 0
      %p47 = por %p45, %p46
      %p48 = scmp.ne.s32.totalorder %s34, %s35
      %p49 = scmp.eq.s32.totalorder %s15, 1
      %p50 = por %p48, %p49
      %p52 = scmp.ne.s32.totalorder %s35, %s51
      %p53 = scmp.eq.s32.totalorder %s15, 0
      %p54 = por %p52, %p53
      %s55 = ssub.s32 %s16, %s28
      %s56 = ssub.s32 %s17, %s24
      %s57 = sor.u32 %s55, %s56
      %p58 = scmp.eq.s32.totalorder %s57, 0
      %s60 = sadd.s32 %s59, 1
      %s61 = scalar_select %p58, %s59, %s60
      %p64 = pneg %p58
      %p65 = scmp.eq.s32.totalorder %s9, 1
      %p66 = por %p64, %p65
      %p67 = scmp.ne.s32.totalorder %s59, %s62
      %p68 = scmp.eq.s32.totalorder %s9, 0
      %p69 = por %p67, %p68
      %p70 = scmp.ne.s32.totalorder %s59, %s62
      %p71 = scmp.eq.s32.totalorder %s14, 1
      %p72 = por %p70, %p71
      %p73 = scmp.ne.s32.totalorder %s62, %s63
      %p74 = scmp.eq.s32.totalorder %s14, 0
      %p75 = por %p73, %p74
      %p76 = scmp.ne.s32.totalorder %s62, %s63
      %p77 = scmp.eq.s32.totalorder %s15, 1
      %p78 = por %p76, %p77
      %p80 = scmp.ne.s32.totalorder %s63, %s79
      %p81 = scmp.eq.s32.totalorder %s15, 0
      %p82 = por %p80, %p81
      %s84 = sadd.s32 %s83, 1
      %p87 = scmp.eq.s32.totalorder %s9, 1
      %p88 = scmp.ne.s32.totalorder %s83, %s85
      %p89 = scmp.eq.s32.totalorder %s9, 0
      %p90 = por %p88, %p89
      %p91 = scmp.ne.s32.totalorder %s83, %s85
      %p92 = scmp.eq.s32.totalorder %s14, 1
      %p93 = por %p91, %p92
      %p94 = scmp.ne.s32.totalorder %s85, %s86
      %p95 = scmp.eq.s32.totalorder %s14, 0
      %p96 = por %p94, %p95
      %p97 = scmp.ne.s32.totalorder %s85, %s86
      %p98 = scmp.eq.s32.totalorder %s15, 1
      %p99 = por %p97, %p98
      %p101 = scmp.ne.s32.totalorder %s86, %s100
      %p102 = scmp.eq.s32.totalorder %s15, 0
      %p103 = por %p101, %p102
      %s104 = ssub.s32 %s16, %s28
      %s105 = ssub.s32 %s17, %s24
      %s106 = sor.u32 %s104, %s105
      %p107 = scmp.eq.s32.totalorder %s106, 0
      %s109 = sadd.s32 %s108, 1
      %s110 = scalar_select %p107, %s108, %s109
      %p113 = pneg %p107
      %p114 = scmp.eq.s32.totalorder %s9, 1
      %p115 = por %p113, %p114
      %p116 = scmp.ne.s32.totalorder %s108, %s111
      %p117 = scmp.eq.s32.totalorder %s9, 0
      %p118 = por %p116, %p117
      %p119 = scmp.ne.s32.totalorder %s108, %s111
      %p120 = scmp.eq.s32.totalorder %s14, 1
      %p121 = por %p119, %p120
      %p122 = scmp.ne.s32.totalorder %s111, %s112
      %p123 = scmp.eq.s32.totalorder %s14, 0
      %p124 = por %p122, %p123
      %p125 = scmp.ne.s32.totalorder %s111, %s112
      %p126 = scmp.eq.s32.totalorder %s15, 1
      %p127 = por %p125, %p126
      %p129 = scmp.ne.s32.totalorder %s112, %s128
      %p130 = scmp.eq.s32.totalorder %s15, 0
      %p131 = por %p129, %p130
      %p132 = scmp.le.s32.totalorder 1, %s9
      %p133 = scmp.lt.s32.totalorder %s9, 3
      %p134 = pnand %p132, %p133
      %p135 = pneg %p134
      // Predicated region
      $region9: #{simsiam_forward.19} parent=5 // pred_check
        _
      $region10: #{simsiam_forward.19} parent=5 // pred_check_branch
        %137 = sbr.rel (%p134) target = $region12
      $region11: #{simsiam_forward.19} parent=5 // pred_region
        %s138 = ssub.s32 %s9, 1
        // Predicated region
        $region13: #{simsiam_forward.19} parent=11 // pred_check
          %p139 = pneg %p47
        $region14: #{simsiam_forward.19} parent=11 // pred_check_branch
          %141 = sbr.rel (%p139) target = $region16
        $region15: #{simsiam_forward.19} parent=11 // pred_region
          %p142 = scmp.lt.s32.totalorder %s18, 0
          %s143 = scalar_select %p142, %s18, 0
          %s144 = smul.addr %s143, 2
          %s145 = scalar_lea.vmem %s0, %s144
        $region16: #{simsiam_forward.19} parent=11 // pred_fallthru
          _
        // Predicated region
        $region17: #{simsiam_forward.19} parent=11 // pred_check
          %p146 = pneg %p96
        $region18: #{simsiam_forward.19} parent=11 // pred_check_branch
          %148 = sbr.rel (%p146) target = $region20
        $region19: #{simsiam_forward.19} parent=11 // pred_region
          _
        $region20: #{simsiam_forward.19} parent=11 // pred_fallthru
          _
      $region12: #{simsiam_forward.19} parent=5 // pred_fallthru
        _
      %p149 = scmp.lt.s32.totalorder %s9, 2
      // Predicated region
      $region21: #{simsiam_forward.19} parent=5 // pred_check
        %p150 = pneg %p149
      $region22: #{simsiam_forward.19} parent=5 // pred_check_branch
        %152 = sbr.rel (%p150) target = $region24
      $region23: #{simsiam_forward.19} parent=5 // pred_region
        // Predicated region
        $region25: #{simsiam_forward.19} parent=23 // pred_check
          %p153 = pneg %p69
        $region26: #{simsiam_forward.19} parent=23 // pred_check_branch
          %155 = sbr.rel (%p153) target = $region28
        $region27: #{simsiam_forward.19} parent=23 // pred_region
          %s156 = sand.u32 %s59, 1
          %s157 = sand.u32 %s59, 1
          %s158 = smul.addr %s157, 448
          %s159 = scalar_lea.vmem [#allocation2], %s158
          %s160 = smul.u32 4, %s17
          %s161 = smul.addr %s16, 224
          %s162 = sadd.s32 %s160, %s161
          %s163 = smul.addr %s162, 4
          %s164 = scalar_lea.vmem %s1, %s163
          // Predicated region
          $region29: #{simsiam_forward.19} parent=27 // pred_check
            _
          $region30: #{simsiam_forward.19} parent=27 // pred_check_branch
            %166 = sbr.rel (0) target = $region32
          $region31: #{simsiam_forward.19} parent=27 // pred_region
            // Predicated region
            $region33: #{simsiam_forward.19} parent=31 // pred_check
              _
            $region34: #{simsiam_forward.19} parent=31 // pred_check_branch
              %168 = sbr.rel (0) target = $region36
            $region35: #{simsiam_forward.19} parent=31 // pred_region
              loop: start=0, step=1, limit=1
              $region37: #{simsiam_forward.19} parent=35 // loop_pre_header
                _
              $region38: #{simsiam_forward.19} parent=35 // loop_header
                %s170 = sphi 0, %s174
                %p171 = scmp.ge.s32.totalorder %s170, 1
                %s175 = sphi %s164, %s164
                %s176 = sphi %s159, %s159
              $region39: #{simsiam_forward.19} parent=35 // loop_header_branch
                %173 = sbr.rel (%p171) target = $region43
              $region40: #{simsiam_forward.19} parent=35 // loop_body
                %v177 = vld [vmem:[%s175] sm:$0xff]
                %178 = vst [vmem:[%s176] sm:$0xff] %v177
                %v179 = vld [vmem:[%s175 + $0x8] sm:$0xff]
                %180 = vst [vmem:[%s176 + $0x8] sm:$0xff] %v179
                %v181 = vld [vmem:[%s175 + $0x20] sm:$0xff]
                %182 = vst [vmem:[%s176 + $0x10] sm:$0xff] %v181
                %v183 = vld [vmem:[%s175 + $0x28] sm:$0xff]
                %184 = vst [vmem:[%s176 + $0x18] sm:$0xff] %v183
                %v185 = vld [vmem:[%s175 + $0x40] sm:$0xff]
                %186 = vst [vmem:[%s176 + $0x20] sm:$0xff] %v185
                %v187 = vld [vmem:[%s175 + $0x48] sm:$0xff]
                %188 = vst [vmem:[%s176 + $0x28] sm:$0xff] %v187
                %v189 = vld [vmem:[%s175 + $0x60] sm:$0xff]
                %190 = vst [vmem:[%s176 + $0x30] sm:$0xff] %v189
                %v191 = vld [vmem:[%s175 + $0x68] sm:$0xff]
                %192 = vst [vmem:[%s176 + $0x38] sm:$0xff] %v191
                %v193 = vld [vmem:[%s175 + $0x80] sm:$0xff]
                %194 = vst [vmem:[%s176 + $0x40] sm:$0xff] %v193
                %v195 = vld [vmem:[%s175 + $0x88] sm:$0xff]
                %196 = vst [vmem:[%s176 + $0x48] sm:$0xff] %v195
                %v197 = vld [vmem:[%s175 + $0xa0] sm:$0xff]
                %198 = vst [vmem:[%s176 + $0x50] sm:$0xff] %v197
                %v199 = vld [vmem:[%s175 + $0xa8] sm:$0xff]
                %200 = vst [vmem:[%s176 + $0x58] sm:$0xff] %v199
                %v201 = vld [vmem:[%s175 + $0xc0] sm:$0xff]
                %202 = vst [vmem:[%s176 + $0x60] sm:$0xff] %v201
                %v203 = vld [vmem:[%s175 + $0xc8] sm:$0xff]
                %204 = vst [vmem:[%s176 + $0x68] sm:$0xff] %v203
                %v205 = vld [vmem:[%s175 + $0xe0] sm:$0xff]
                %206 = vst [vmem:[%s176 + $0x70] sm:$0xff] %v205
                %v207 = vld [vmem:[%s175 + $0xe8] sm:$0xff]
                %208 = vst [vmem:[%s176 + $0x78] sm:$0xff] %v207
                %v209 = vld [vmem:[%s175 + $0x100] sm:$0xff]
                %210 = vst [vmem:[%s176 + $0x80] sm:$0xff] %v209
                %v211 = vld [vmem:[%s175 + $0x108] sm:$0xff]
                %212 = vst [vmem:[%s176 + $0x88] sm:$0xff] %v211
                %v213 = vld [vmem:[%s175 + $0x120] sm:$0xff]
                %214 = vst [vmem:[%s176 + $0x90] sm:$0xff] %v213
                %v215 = vld [vmem:[%s175 + $0x128] sm:$0xff]
                %216 = vst [vmem:[%s176 + $0x98] sm:$0xff] %v215
                %v217 = vld [vmem:[%s175 + $0x140] sm:$0xff]
                %218 = vst [vmem:[%s176 + $0xa0] sm:$0xff] %v217
                %v219 = vld [vmem:[%s175 + $0x148] sm:$0xff]
                %220 = vst [vmem:[%s176 + $0xa8] sm:$0xff] %v219
                %v221 = vld [vmem:[%s175 + $0x160] sm:$0xff]
                %222 = vst [vmem:[%s176 + $0xb0] sm:$0xff] %v221
                %v223 = vld [vmem:[%s175 + $0x168] sm:$0xff]
                %224 = vst [vmem:[%s176 + $0xb8] sm:$0xff] %v223
                %v225 = vld [vmem:[%s175 + $0x180] sm:$0xff]
                %226 = vst [vmem:[%s176 + $0xc0] sm:$0xff] %v225
                %v227 = vld [vmem:[%s175 + $0x188] sm:$0xff]
                %228 = vst [vmem:[%s176 + $0xc8] sm:$0xff] %v227
                %v229 = vld [vmem:[%s175 + $0x1a0] sm:$0xff]
                %230 = vst [vmem:[%s176 + $0xd0] sm:$0xff] %v229
                %v231 = vld [vmem:[%s175 + $0x1a8] sm:$0xff]
                %232 = vst [vmem:[%s176 + $0xd8] sm:$0xff] %v231
                %v233 = vld [vmem:[%s175 + $0x1c0] sm:$0xff]
                %234 = vst [vmem:[%s176 + $0xe0] sm:$0xff] %v233
                %v235 = vld [vmem:[%s175 + $0x1c8] sm:$0xff]
                %236 = vst [vmem:[%s176 + $0xe8] sm:$0xff] %v235
                %v237 = vld [vmem:[%s175 + $0x1e0] sm:$0xff]
                %238 = vst [vmem:[%s176 + $0xf0] sm:$0xff] %v237
                %v239 = vld [vmem:[%s175 + $0x1e8] sm:$0xff]
                %240 = vst [vmem:[%s176 + $0xf8] sm:$0xff] %v239
                %v241 = vld [vmem:[%s175 + $0x200] sm:$0xff]
                %242 = vst [vmem:[%s176 + $0x100] sm:$0xff] %v241
                %v243 = vld [vmem:[%s175 + $0x208] sm:$0xff]
                %244 = vst [vmem:[%s176 + $0x108] sm:$0xff] %v243
                %v245 = vld [vmem:[%s175 + $0x220] sm:$0xff]
                %246 = vst [vmem:[%s176 + $0x110] sm:$0xff] %v245
                %v247 = vld [vmem:[%s175 + $0x228] sm:$0xff]
                %248 = vst [vmem:[%s176 + $0x118] sm:$0xff] %v247
                %v249 = vld [vmem:[%s175 + $0x240] sm:$0xff]
                %250 = vst [vmem:[%s176 + $0x120] sm:$0xff] %v249
                %v251 = vld [vmem:[%s175 + $0x248] sm:$0xff]
                %252 = vst [vmem:[%s176 + $0x128] sm:$0xff] %v251
                %v253 = vld [vmem:[%s175 + $0x260] sm:$0xff]
                %254 = vst [vmem:[%s176 + $0x130] sm:$0xff] %v253
                %v255 = vld [vmem:[%s175 + $0x268] sm:$0xff]
                %256 = vst [vmem:[%s176 + $0x138] sm:$0xff] %v255
                %v257 = vld [vmem:[%s175 + $0x280] sm:$0xff]
                %258 = vst [vmem:[%s176 + $0x140] sm:$0xff] %v257
                %v259 = vld [vmem:[%s175 + $0x288] sm:$0xff]
                %260 = vst [vmem:[%s176 + $0x148] sm:$0xff] %v259
                %v261 = vld [vmem:[%s175 + $0x2a0] sm:$0xff]
                %262 = vst [vmem:[%s176 + $0x150] sm:$0xff] %v261
                %v263 = vld [vmem:[%s175 + $0x2a8] sm:$0xff]
                %264 = vst [vmem:[%s176 + $0x158] sm:$0xff] %v263
                %v265 = vld [vmem:[%s175 + $0x2c0] sm:$0xff]
                %266 = vst [vmem:[%s176 + $0x160] sm:$0xff] %v265
                %v267 = vld [vmem:[%s175 + $0x2c8] sm:$0xff]
                %268 = vst [vmem:[%s176 + $0x168] sm:$0xff] %v267
                %v269 = vld [vmem:[%s175 + $0x2e0] sm:$0xff]
                %270 = vst [vmem:[%s176 + $0x170] sm:$0xff] %v269
                %v271 = vld [vmem:[%s175 + $0x2e8] sm:$0xff]
                %272 = vst [vmem:[%s176 + $0x178] sm:$0xff] %v271
                %v273 = vld [vmem:[%s175 + $0x300] sm:$0xff]
                %274 = vst [vmem:[%s176 + $0x180] sm:$0xff] %v273
                %v275 = vld [vmem:[%s175 + $0x308] sm:$0xff]
                %276 = vst [vmem:[%s176 + $0x188] sm:$0xff] %v275
                %v277 = vld [vmem:[%s175 + $0x320] sm:$0xff]
                %278 = vst [vmem:[%s176 + $0x190] sm:$0xff] %v277
                %v279 = vld [vmem:[%s175 + $0x328] sm:$0xff]
                %280 = vst [vmem:[%s176 + $0x198] sm:$0xff] %v279
                %v281 = vld [vmem:[%s175 + $0x340] sm:$0xff]
                %282 = vst [vmem:[%s176 + $0x1a0] sm:$0xff] %v281
                %v283 = vld [vmem:[%s175 + $0x348] sm:$0xff]
                %284 = vst [vmem:[%s176 + $0x1a8] sm:$0xff] %v283
                %v285 = vld [vmem:[%s175 + $0x360] sm:$0xff]
                %286 = vst [vmem:[%s176 + $0x1b0] sm:$0xff] %v285
                %v287 = vld [vmem:[%s175 + $0x368] sm:$0xff]
                %288 = vst [vmem:[%s176 + $0x1b8] sm:$0xff] %v287
              $region41: #{simsiam_forward.19} parent=35 // loop_footer
                %s174 = sadd.s32 1, %s170
              $region42: #{simsiam_forward.19} parent=35 // loop_footer_branch
                %169 = sbr.rel target = $region38
              $region43: #{simsiam_forward.19} parent=35 // loop_exit
                _
            $region36: #{simsiam_forward.19} parent=31 // pred_fallthru
              _
            // Predicated region
            $region44: #{simsiam_forward.19} parent=31 // pred_check
              _
            $region45: #{simsiam_forward.19} parent=31 // pred_check_branch
              %290 = sbr.rel target = $region47
            $region46: #{simsiam_forward.19} parent=31 // pred_region
              _
            $region47: #{simsiam_forward.19} parent=31 // pred_fallthru
              _
          $region32: #{simsiam_forward.19} parent=27 // pred_fallthru
            _
          %291 = vnop
        $region28: #{simsiam_forward.19} parent=23 // pred_fallthru
          _
      $region24: #{simsiam_forward.19} parent=5 // pred_fallthru
        _
      %p292 = scmp.le.s32.totalorder 1, %s9
      %p293 = scmp.lt.s32.totalorder %s9, 3
      %p294 = pnand %p292, %p293
      %p295 = pneg %p294
      // Predicated region
      $region48: #{simsiam_forward.19} parent=5 // pred_check
        _
      $region49: #{simsiam_forward.19} parent=5 // pred_check_branch
        %297 = sbr.rel (%p294) target = $region51
      $region50: #{simsiam_forward.19} parent=5 // pred_region
        %s298 = ssub.s32 %s9, 1
        %s299 = sand.u32 %s62, 1
        %s300 = sand.u32 %s62, 1
        %s301 = smul.addr %s300, 448
        %s302 = scalar_lea.vmem [#allocation2], %s301
        // Predicated region
        $region52: #{simsiam_forward.19} parent=50 // pred_check
          %p303 = pneg %p75
        $region53: #{simsiam_forward.19} parent=50 // pred_check_branch
          %305 = sbr.rel (%p303) target = $region55
        $region54: #{simsiam_forward.19} parent=50 // pred_region
          _
        $region55: #{simsiam_forward.19} parent=50 // pred_fallthru
          _
        %p306 = scmp.lt.s32.totalorder %s18, 0
        %s307 = scalar_select %p306, %s18, 0
        %s308 = smul.addr %s307, 2
        %s309 = scalar_lea.vmem %s0, %s308
        %p310 = pneg %p47
        %p311 = pneg %p44
        %s312 = sand.u32 %s62, 1
        %s313 = sand.u32 %s62, 1
        %s314 = smul.addr %s313, 448
        %s315 = scalar_lea.vmem [#allocation2], %s314
        %p316 = pneg %p75
        %p317 = pneg %p72
        %p318 = pneg %p96
        %p319 = pneg %p93
        %p320 = pneg %p124
        %p321 = pneg %p121
        %s322 = smul.u32 4, %s19
        %p323 = scmp.lt.s32.totalorder %s18, 0
        %s324 = scalar_select %p323, %s18, 0
        %p325 = scmp.lt.s32.totalorder %s322, 7
        %s326 = scalar_select %p325, %s322, 7
        %s327 = smul.addr %s324, 8
        %s328 = sadd.s32 %s326, %s327
        %s329 = smul.addr %s328, 2
        %s330 = scalar_lea.vmem %s3, %s329
        %p331 = scmp.lt.s32.totalorder %s18, 0
        %s332 = scalar_select %p331, %s18, 0
        %s333 = smul.addr %s332, 2
        %s334 = scalar_lea.vmem %s0, %s333
        %s335 = smul.u32 4, %s19
        %s336 = smul.u32 4, %s19
        %p337 = scmp.lt.s32.totalorder %s18, 0
        %s338 = scalar_select %p337, %s18, 0
        %p339 = scmp.lt.s32.totalorder %s336, 7
        %s340 = scalar_select %p339, %s336, 7
        %s341 = smul.addr %s338, 8
        %s342 = sadd.s32 %s340, %s341
        %s343 = smul.addr %s342, 2
        %s344 = scalar_lea.vmem %s3, %s343
        %s345 = smul.u32 4, %s19
        %v347 = vld [vmem:[%s334] sm:$0x3]
        %v348 = vld [vmem:[%s302] sm:$0xff]
        %v349 = vld [vmem:[%s302 + $0x8] sm:$0xff]
        %v350 = vld [vmem:[%s302 + $0x10] sm:$0xff]
        %v351 = vld [vmem:[%s302 + $0x18] sm:$0xff]
        %v352 = vld [vmem:[%s302 + $0x20] sm:$0xff]
        %v353 = vld [vmem:[%s302 + $0x28] sm:$0xff]
        %v354 = vld [vmem:[%s302 + $0x30] sm:$0xff]
        %v355 = vld [vmem:[%s302 + $0x38] sm:$0xff]
        %v356 = vld [vmem:[%s302 + $0x40] sm:$0xff]
        %v357 = vld [vmem:[%s302 + $0x48] sm:$0xff]
        %v358 = vld [vmem:[%s302 + $0x50] sm:$0xff]
        %v359 = vld [vmem:[%s302 + $0x58] sm:$0xff]
        %v360 = vld [vmem:[%s302 + $0x60] sm:$0xff]
        %v361 = vld [vmem:[%s302 + $0x68] sm:$0xff]
        %v362 = vld [vmem:[%s302 + $0x70] sm:$0xff]
        %v363 = vld [vmem:[%s302 + $0x78] sm:$0xff]
        %v364 = vld [vmem:[%s302 + $0x80] sm:$0xff]
        %v365 = vld [vmem:[%s302 + $0x88] sm:$0xff]
        %v366 = vld [vmem:[%s302 + $0x90] sm:$0xff]
        %v367 = vld [vmem:[%s302 + $0x98] sm:$0xff]
        %v368 = vld [vmem:[%s302 + $0xa0] sm:$0xff]
        %v369 = vld [vmem:[%s302 + $0xa8] sm:$0xff]
        %v370 = vld [vmem:[%s302 + $0xb0] sm:$0xff]
        %v371 = vld [vmem:[%s302 + $0xb8] sm:$0xff]
        %v372 = vld [vmem:[%s302 + $0xc0] sm:$0xff]
        %v373 = vld [vmem:[%s302 + $0xc8] sm:$0xff]
        %v374 = vld [vmem:[%s302 + $0xd0] sm:$0xff]
        %v375 = vld [vmem:[%s302 + $0xd8] sm:$0xff]
        %v376 = vld [vmem:[%s302 + $0xe0] sm:$0xff]
        %v377 = vld [vmem:[%s302 + $0xe8] sm:$0xff]
        %v378 = vld [vmem:[%s302 + $0xf0] sm:$0xff]
        %v379 = vld [vmem:[%s302 + $0xf8] sm:$0xff]
        %v380 = vld [vmem:[%s302 + $0x100] sm:$0xff]
        %v381 = vld [vmem:[%s302 + $0x108] sm:$0xff]
        %v382 = vld [vmem:[%s302 + $0x110] sm:$0xff]
        %v383 = vld [vmem:[%s302 + $0x118] sm:$0xff]
        %v384 = vld [vmem:[%s302 + $0x120] sm:$0xff]
        %v385 = vld [vmem:[%s302 + $0x128] sm:$0xff]
        %v386 = vld [vmem:[%s302 + $0x130] sm:$0xff]
        %v387 = vld [vmem:[%s302 + $0x138] sm:$0xff]
        %v388 = vld [vmem:[%s302 + $0x140] sm:$0xff]
        %v389 = vld [vmem:[%s302 + $0x148] sm:$0xff]
        %v390 = vld [vmem:[%s302 + $0x150] sm:$0xff]
        %v391 = vld [vmem:[%s302 + $0x158] sm:$0xff]
        %v392 = vld [vmem:[%s302 + $0x160] sm:$0xff]
        %v393 = vld [vmem:[%s302 + $0x168] sm:$0xff]
        %v394 = vld [vmem:[%s302 + $0x170] sm:$0xff]
        %v395 = vld [vmem:[%s302 + $0x178] sm:$0xff]
        %v396 = vld [vmem:[%s302 + $0x180] sm:$0xff]
        %v397 = vld [vmem:[%s302 + $0x188] sm:$0xff]
        %v398 = vld [vmem:[%s302 + $0x190] sm:$0xff]
        %v399 = vld [vmem:[%s302 + $0x198] sm:$0xff]
        %v400 = vld [vmem:[%s302 + $0x1a0] sm:$0xff]
        %v401 = vld [vmem:[%s302 + $0x1a8] sm:$0xff]
        %v402 = vld [vmem:[%s302 + $0x1b0] sm:$0xff]
        %v403 = vld [vmem:[%s302 + $0x1b8] sm:$0xff]
        %v404 = vld [vmem:[%s2] sm:$0x3]
        %406 = vset.pattern.permute.xlu0 0
        %407 = vperm.xlu0 %406, %v404
        %v408 = vpop.permute.xlu0 %407
        %v412 = vunpack.c.l.s4 1966171168
        %v413 = vunpack.c.0.s8 %v412
        %v414 = vlaneseq
        %v415 = vshrl.u32 %v414, 7
        %v416 = vsub.s32 %v413, %v415
        %v417 = vrot.slane %v347, %v416
        %v418 = vcombine.high %v417, %v417
        %v420 = vunpack.c.l.s4 1966171168
        %v421 = vunpack.c.0.s8 %v420
        %v422 = vlaneseq
        %v423 = vshrl.u32 %v422, 7
        %v424 = vsub.s32 %v421, %v423
        %v425 = vrot.slane %v417, %v424
        %v427 = vunpack.c.l.s4 1966171168
        %v428 = vunpack.c.0.s8 %v427
        %v429 = vlaneseq
        %v430 = vshrl.u32 %v429, 7
        %v431 = vsub.s32 %v428, %v430
        %v432 = vrot.slane %v418, %v431
        %v490 = vunpack.c.l.b16 %v348
        %v491 = vunpack.c.h.b16 %v348
        %v492 = vunpack.c.l.b16 %v349
        %v493 = vunpack.c.h.b16 %v349
        %v494 = vunpack.c.l.b16 %v350
        %v495 = vunpack.c.h.b16 %v350
        %v496 = vunpack.c.l.b16 %v351
        %v497 = vunpack.c.h.b16 %v351
        %v498 = vunpack.c.l.b16 %v352
        %v499 = vunpack.c.h.b16 %v352
        %v500 = vunpack.c.l.b16 %v353
        %v501 = vunpack.c.h.b16 %v353
        %v502 = vunpack.c.l.b16 %v354
        %v503 = vunpack.c.h.b16 %v354
        %v504 = vunpack.c.l.b16 %v355
        %v505 = vunpack.c.h.b16 %v355
        %v506 = vunpack.c.l.b16 %v356
        %v507 = vunpack.c.h.b16 %v356
        %v508 = vunpack.c.l.b16 %v357
        %v509 = vunpack.c.h.b16 %v357
        %v510 = vunpack.c.l.b16 %v358
        %v511 = vunpack.c.h.b16 %v358
        %v512 = vunpack.c.l.b16 %v359
        %v513 = vunpack.c.h.b16 %v359
        %v514 = vunpack.c.l.b16 %v360
        %v515 = vunpack.c.h.b16 %v360
        %v516 = vunpack.c.l.b16 %v361
        %v517 = vunpack.c.h.b16 %v361
        %v518 = vunpack.c.l.b16 %v362
        %v519 = vunpack.c.h.b16 %v362
        %v520 = vunpack.c.l.b16 %v363
        %v521 = vunpack.c.h.b16 %v363
        %v522 = vunpack.c.l.b16 %v364
        %v523 = vunpack.c.h.b16 %v364
        %v524 = vunpack.c.l.b16 %v365
        %v525 = vunpack.c.h.b16 %v365
        %v526 = vunpack.c.l.b16 %v366
        %v527 = vunpack.c.h.b16 %v366
        %v528 = vunpack.c.l.b16 %v367
        %v529 = vunpack.c.h.b16 %v367
        %v530 = vunpack.c.l.b16 %v368
        %v531 = vunpack.c.h.b16 %v368
        %v532 = vunpack.c.l.b16 %v369
        %v533 = vunpack.c.h.b16 %v369
        %v534 = vunpack.c.l.b16 %v370
        %v535 = vunpack.c.h.b16 %v370
        %v536 = vunpack.c.l.b16 %v371
        %v537 = vunpack.c.h.b16 %v371
        %v538 = vunpack.c.l.b16 %v372
        %v539 = vunpack.c.h.b16 %v372
        %v540 = vunpack.c.l.b16 %v373
        %v541 = vunpack.c.h.b16 %v373
        %v542 = vunpack.c.l.b16 %v374
        %v543 = vunpack.c.h.b16 %v374
        %v544 = vunpack.c.l.b16 %v375
        %v545 = vunpack.c.h.b16 %v375
        %v546 = vunpack.c.l.b16 %v376
        %v547 = vunpack.c.h.b16 %v376
        %v548 = vunpack.c.l.b16 %v377
        %v549 = vunpack.c.h.b16 %v377
        %v550 = vunpack.c.l.b16 %v378
        %v551 = vunpack.c.h.b16 %v378
        %v552 = vunpack.c.l.b16 %v379
        %v553 = vunpack.c.h.b16 %v379
        %v554 = vunpack.c.l.b16 %v380
        %v555 = vunpack.c.h.b16 %v380
        %v556 = vunpack.c.l.b16 %v381
        %v557 = vunpack.c.h.b16 %v381
        %v558 = vunpack.c.l.b16 %v382
        %v559 = vunpack.c.h.b16 %v382
        %v560 = vunpack.c.l.b16 %v383
        %v561 = vunpack.c.h.b16 %v383
        %v562 = vunpack.c.l.b16 %v384
        %v563 = vunpack.c.h.b16 %v384
        %v564 = vunpack.c.l.b16 %v385
        %v565 = vunpack.c.h.b16 %v385
        %v566 = vunpack.c.l.b16 %v386
        %v567 = vunpack.c.h.b16 %v386
        %v568 = vunpack.c.l.b16 %v387
        %v569 = vunpack.c.h.b16 %v387
        %v570 = vunpack.c.l.b16 %v388
        %v571 = vunpack.c.h.b16 %v388
        %v572 = vunpack.c.l.b16 %v389
        %v573 = vunpack.c.h.b16 %v389
        %v574 = vunpack.c.l.b16 %v390
        %v575 = vunpack.c.h.b16 %v390
        %v576 = vunpack.c.l.b16 %v391
        %v577 = vunpack.c.h.b16 %v391
        %v578 = vunpack.c.l.b16 %v392
        %v579 = vunpack.c.h.b16 %v392
        %v580 = vunpack.c.l.b16 %v393
        %v581 = vunpack.c.h.b16 %v393
        %v582 = vunpack.c.l.b16 %v394
        %v583 = vunpack.c.h.b16 %v394
        %v584 = vunpack.c.l.b16 %v395
        %v585 = vunpack.c.h.b16 %v395
        %v586 = vunpack.c.l.b16 %v396
        %v587 = vunpack.c.h.b16 %v396
        %v588 = vunpack.c.l.b16 %v397
        %v589 = vunpack.c.h.b16 %v397
        %v590 = vunpack.c.l.b16 %v398
        %v591 = vunpack.c.h.b16 %v398
        %v592 = vunpack.c.l.b16 %v399
        %v593 = vunpack.c.h.b16 %v399
        %v594 = vunpack.c.l.b16 %v400
        %v595 = vunpack.c.h.b16 %v400
        %v596 = vunpack.c.l.b16 %v401
        %v597 = vunpack.c.h.b16 %v401
        %v598 = vunpack.c.l.b16 %v402
        %v599 = vunpack.c.h.b16 %v402
        %v600 = vunpack.c.l.b16 %v403
        %v601 = vunpack.c.h.b16 %v403
        %v602 = vpack.c.b16 %v494, %v490
        %v603 = vpack.c.b16 %v495, %v491
        %v604 = vpack.c.b16 %v496, %v492
        %v605 = vpack.c.b16 %v497, %v493
        %v606 = vpack.c.b16 %v502, %v498
        %v607 = vpack.c.b16 %v503, %v499
        %v608 = vpack.c.b16 %v504, %v500
        %v609 = vpack.c.b16 %v505, %v501
        %v610 = vpack.c.b16 %v510, %v506
        %v611 = vpack.c.b16 %v511, %v507
        %v612 = vpack.c.b16 %v512, %v508
        %v613 = vpack.c.b16 %v513, %v509
        %v614 = vpack.c.b16 %v518, %v514
        %v615 = vpack.c.b16 %v519, %v515
        %v616 = vpack.c.b16 %v520, %v516
        %v617 = vpack.c.b16 %v521, %v517
        %v618 = vpack.c.b16 %v526, %v522
        %v619 = vpack.c.b16 %v527, %v523
        %v620 = vpack.c.b16 %v528, %v524
        %v621 = vpack.c.b16 %v529, %v525
        %v622 = vpack.c.b16 %v534, %v530
        %v623 = vpack.c.b16 %v535, %v531
        %v624 = vpack.c.b16 %v536, %v532
        %v625 = vpack.c.b16 %v537, %v533
        %v626 = vpack.c.b16 %v542, %v538
        %v627 = vpack.c.b16 %v543, %v539
        %v628 = vpack.c.b16 %v544, %v540
        %v629 = vpack.c.b16 %v545, %v541
        %v630 = vpack.c.b16 %v550, %v546
        %v631 = vpack.c.b16 %v551, %v547
        %v632 = vpack.c.b16 %v552, %v548
        %v633 = vpack.c.b16 %v553, %v549
        %v634 = vpack.c.b16 %v558, %v554
        %v635 = vpack.c.b16 %v559, %v555
        %v636 = vpack.c.b16 %v560, %v556
        %v637 = vpack.c.b16 %v561, %v557
        %v638 = vpack.c.b16 %v566, %v562
        %v639 = vpack.c.b16 %v567, %v563
        %v640 = vpack.c.b16 %v568, %v564
        %v641 = vpack.c.b16 %v569, %v565
        %v642 = vpack.c.b16 %v574, %v570
        %v643 = vpack.c.b16 %v575, %v571
        %v644 = vpack.c.b16 %v576, %v572
        %v645 = vpack.c.b16 %v577, %v573
        %v646 = vpack.c.b16 %v582, %v578
        %v647 = vpack.c.b16 %v583, %v579
        %v648 = vpack.c.b16 %v584, %v580
        %v649 = vpack.c.b16 %v585, %v581
        %v650 = vpack.c.b16 %v590, %v586
        %v651 = vpack.c.b16 %v591, %v587
        %v652 = vpack.c.b16 %v592, %v588
        %v653 = vpack.c.b16 %v593, %v589
        %v654 = vpack.c.b16 %v598, %v594
        %v655 = vpack.c.b16 %v599, %v595
        %v656 = vpack.c.b16 %v600, %v596
        %v657 = vpack.c.b16 %v601, %v597
        %vm714 = vcmask 785408
        %v716 = vsel %vm714, %v432, 0
        %718 = vmatprep.subr.bf16.mxu0 %v631
        %719 = vmatpush1.bf16.msra.mxu0 %v630
        %720 = vmatprep.subr.bf16.mxu0 %v627
        %721 = vmatpush1.bf16.msra.mxu0 %v626
        %722 = vmatprep.subr.bf16.mxu0 %v623
        %723 = vmatpush1.bf16.msra.mxu0 %v622
        %724 = vmatprep.subr.bf16.mxu0 %v619
        %725 = vmatpush1.bf16.msra.mxu0 %v618
        %726 = vmatprep.subr.bf16.mxu0 %v615
        %727 = vmatpush1.bf16.msra.mxu0 %v614
        %728 = vmatprep.subr.bf16.mxu0 %v611
        %729 = vmatpush1.bf16.msra.mxu0 %v610
        %730 = vmatprep.subr.bf16.mxu0 %v607
        %731 = vmatpush1.bf16.msra.mxu0 %v606
        %732 = vmatprep.subr.bf16.mxu0 %v603
        %733 = vmatpush1.bf16.msra.mxu0 %v602
        %734 = vmatprep.subr.bf16.mxu0 0
        %735 = vmatpush2.bf16.msra.mxu0 0
        %736 = vmatprep.subr.bf16.mxu0 0
        %737 = vmatpush2.bf16.msra.mxu0 0
        %738 = vmatprep.subr.bf16.mxu0 %v655
        %739 = vmatpush2.bf16.msra.mxu0 %v654
        %740 = vmatprep.subr.bf16.mxu0 %v651
        %741 = vmatpush2.bf16.msra.mxu0 %v650
        %742 = vmatprep.subr.bf16.mxu0 %v647
        %743 = vmatpush2.bf16.msra.mxu0 %v646
        %744 = vmatprep.subr.bf16.mxu0 %v643
        %745 = vmatpush2.bf16.msra.mxu0 %v642
        %746 = vmatprep.subr.bf16.mxu0 %v639
        %747 = vmatpush2.bf16.msra.mxu0 %v638
        %748 = vmatprep.subr.bf16.mxu0 %v635
        %749 = vmatpush2.bf16.msra.mxu0 %v634
        %750 = vmatprep.mubr.bf16.mxu0 %v716
        %751 = vmatmul.mubr.bf16.gmra.mxu0 %v425
        %v752 = vpop.f32.mrf.mxu0
        %v753 = vadd.f32 %v408, %v752
        %v754 = vpop.f32.mrf.mxu0
        %v755 = vadd.f32 %v408, %v754
        %v756 = vpop.f32.mrf.mxu0
        %v757 = vpop.f32.mrf.mxu0
        %758 = vdwg.mxu0
        %759 = vmatprep.subr.bf16.mxu0 %v633
        %760 = vmatpush1.bf16.msra.mxu0 %v632
        %761 = vmatprep.subr.bf16.mxu0 %v629
        %762 = vmatpush1.bf16.msra.mxu0 %v628
        %763 = vmatprep.subr.bf16.mxu0 %v625
        %764 = vmatpush1.bf16.msra.mxu0 %v624
        %765 = vmatprep.subr.bf16.mxu0 %v621
        %766 = vmatpush1.bf16.msra.mxu0 %v620
        %767 = vmatprep.subr.bf16.mxu0 %v617
        %768 = vmatpush1.bf16.msra.mxu0 %v616
        %769 = vmatprep.subr.bf16.mxu0 %v613
        %770 = vmatpush1.bf16.msra.mxu0 %v612
        %771 = vmatprep.subr.bf16.mxu0 %v609
        %772 = vmatpush1.bf16.msra.mxu0 %v608
        %773 = vmatprep.subr.bf16.mxu0 %v605
        %774 = vmatpush1.bf16.msra.mxu0 %v604
        %775 = vmatprep.subr.bf16.mxu0 0
        %776 = vmatpush2.bf16.msra.mxu0 0
        %777 = vmatprep.subr.bf16.mxu0 0
        %778 = vmatpush2.bf16.msra.mxu0 0
        %779 = vmatprep.subr.bf16.mxu0 %v657
        %780 = vmatpush2.bf16.msra.mxu0 %v656
        %781 = vmatprep.subr.bf16.mxu0 %v653
        %782 = vmatpush2.bf16.msra.mxu0 %v652
        %783 = vmatprep.subr.bf16.mxu0 %v649
        %784 = vmatpush2.bf16.msra.mxu0 %v648
        %785 = vmatprep.subr.bf16.mxu0 %v645
        %786 = vmatpush2.bf16.msra.mxu0 %v644
        %787 = vmatprep.subr.bf16.mxu0 %v641
        %788 = vmatpush2.bf16.msra.mxu0 %v640
        %789 = vmatprep.subr.bf16.mxu0 %v637
        %790 = vmatpush2.bf16.msra.mxu0 %v636
        %791 = vmatprep.mubr.bf16.mxu0 %v716
        %792 = vmatmul.mubr.bf16.gmra.mxu0 %v425
        %v793 = vpop.f32.mrf.mxu0
        %v794 = vadd.f32 %v408, %v793
        %v795 = vpop.f32.mrf.mxu0
        %v796 = vadd.f32 %v408, %v795
        %v797 = vpop.f32.mrf.mxu0
        %v798 = vpop.f32.mrf.mxu0
        %799 = vdwg.mxu0
        %v804 = vcombine.low %v753, %v755
        %v805 = vcombine.low %v794, %v796
        %v807 = vunpack.c.l.s4 1983009808
        %v808 = vunpack.c.0.s8 %v807
        %v809 = vlaneseq
        %v810 = vshrl.u32 %v809, 7
        %v811 = vsub.s32 %v808, %v810
        %v812 = vrot.slane %v804, %v811
        %v814 = vunpack.c.l.s4 1983009808
        %v815 = vunpack.c.0.s8 %v814
        %v816 = vlaneseq
        %v817 = vshrl.u32 %v816, 7
        %v818 = vsub.s32 %v815, %v817
        %v819 = vrot.slane %v805, %v818
        %v820 = vcombine.low %v812, %v819
        %822 = vst [vmem:[%s344] sm:$0xff] %v820
        %s823 = smul.u32 4, %s19
        %p824 = scmp.lt.s32.totalorder %s18, 0
        %s825 = scalar_select %p824, %s18, 0
        %p826 = scmp.lt.s32.totalorder %s823, 7
        %s827 = scalar_select %p826, %s823, 7
        %s828 = smul.addr %s825, 8
        %s829 = sadd.s32 %s827, %s828
        %s830 = smul.addr %s829, 2
        %s831 = scalar_lea.vmem %s3, %s830
        // Predicated region
        $region56: #{simsiam_forward.19} parent=50 // pred_check
          %p832 = pneg %p121
        $region57: #{simsiam_forward.19} parent=50 // pred_check_branch
          %834 = sbr.rel (%p832) target = $region59
        $region58: #{simsiam_forward.19} parent=50 // pred_region
          %s835 = smul.u32 4, %s19
        $region59: #{simsiam_forward.19} parent=50 // pred_fallthru
          _
      $region51: #{simsiam_forward.19} parent=5 // pred_fallthru
        _
      %p836 = scmp.le.s32.totalorder 2, %s9
      // Predicated region
      $region60: #{simsiam_forward.19} parent=5 // pred_check
        %p837 = pneg %p836
      $region61: #{simsiam_forward.19} parent=5 // pred_check_branch
        %839 = sbr.rel (%p837) target = $region63
      $region62: #{simsiam_forward.19} parent=5 // pred_region
        %s840 = ssub.s32 %s9, 2
        // Predicated region
        $region64: #{simsiam_forward.19} parent=62 // pred_check
          %p841 = pneg %p127
        $region65: #{simsiam_forward.19} parent=62 // pred_check_branch
          %843 = sbr.rel (%p841) target = $region67
        $region66: #{simsiam_forward.19} parent=62 // pred_region
          %s844 = smul.u32 4, %s21
          %p845 = scmp.lt.s32.totalorder %s20, 0
          %s846 = scalar_select %p845, %s20, 0
          %p847 = scmp.lt.s32.totalorder %s844, 7
          %s848 = scalar_select %p847, %s844, 7
          %s849 = smul.addr %s846, 8
          %s850 = sadd.s32 %s848, %s849
          %s851 = smul.addr %s850, 2
          %s852 = scalar_lea.vmem %s3, %s851
        $region67: #{simsiam_forward.19} parent=62 // pred_fallthru
          _
      $region63: #{simsiam_forward.19} parent=5 // pred_fallthru
        _
    $region6: #{simsiam_forward.19} parent=1 // loop_footer
      %s13 = sadd.s32 1, %s9
    $region7: #{simsiam_forward.19} parent=1 // loop_footer_branch
      %8 = sbr.rel target = $region3
    $region8: #{simsiam_forward.19} parent=1 // loop_exit
      _

</llo_original>
